<compile_context>
chip_gen: v6e
topology: v6e:2x2x1
jax: 0.10.0
libtpu: 0.0.40
codegen_flags: <defaults>
</compile_context>

<pallas_src>
import jax
import jax.numpy as jnp
from jax import lax
from jax.experimental import pallas as pl
from jax.experimental.pallas import tpu as pltpu  # noqa: F401  (not needed for this grid-less kernel)

# ---------------- config ----------------
VOCAB = 100
HIDDEN = 32
N_HEADS = 4
HEAD_DIM = HIDDEN // N_HEADS
INTER = 64
N_LAYERS = 2
MAX_POS = 16
NUM_LABELS = 9
LN_EPS = 1e-12
SEQ = 8
BATCH = 2

QKV_PAD = 128       # fused Q|K|V projection width (3*HIDDEN = 96, zero-padded to 128 lanes)
LABELS_PAD = 128    # lane-dense classifier / logits width (9 padded to 128)
NEG_INF = -1e9


# ---------------- in-kernel helpers ----------------
def _layer_norm(x, gamma, beta):
    mean = jnp.mean(x, axis=-1, keepdims=True)
    var = jnp.mean((x - mean) ** 2, axis=-1, keepdims=True)
    return (x - mean) * lax.rsqrt(var + LN_EPS) * gamma + beta


def _gelu(x):
    # TODO(synk): BERT uses exact erf-GELU; tanh approximation kept for Mosaic-friendly lowering.
    c = 0.7978845608028654
    return 0.5 * x * (1.0 + jnp.tanh(c * (x + 0.044715 * x * x * x)))


# ---------------- fully fused forward kernel ----------------
def fused_ner_kernel(ids_ref, pos_type_ref, bias_ref, labels_ref, active_ref,
                     word_emb_ref, emb_g_ref, emb_b_ref,
                     wqkv_ref, bqkv_ref, wo_ref, bo_ref, ln1_g_ref, ln1_b_ref,
                     w1_ref, b1_ref, w2_ref, b2_ref, ln2_g_ref, ln2_b_ref,
                     cls_w_ref, cls_b_ref,
                     logits_ref, loss_ref):
    N = ids_ref.shape[0]                                       # B*S flattened tokens

    # ---- embeddings: word gather as a one-hot MXU matmul + embedding LayerNorm ----
    ids = ids_ref[...]                                          # [N, 1] int32
    vocab_col = lax.broadcasted_iota(jnp.int32, (N, VOCAB), 1)
    onehot_ids = (vocab_col == ids).astype(jnp.float32)         # [N, VOCAB]
    x = jnp.dot(onehot_ids, word_emb_ref[...], preferred_element_type=jnp.float32)
    x = x + pos_type_ref[...]                                   # position + token-type embeddings
    x = _layer_norm(x, emb_g_ref[...], emb_b_ref[...])          # [N, H]

    bias = bias_ref[...]                                        # [N, N] additive mask (0 / -1e9)
    scale = 1.0 / (HEAD_DIM ** 0.5)

    # ---- encoder layers: weights stacked on a leading layer axis, statically unrolled ----
    for l in range(N_LAYERS):
        # fused Q|K|V projection: one lane-dense [H, 128] MXU push
        qkv = jnp.dot(x, wqkv_ref[l], preferred_element_type=jnp.float32) + bqkv_ref[l]

        # head-major [n_heads, N, head_dim] via static lane slices stacked on a new leading axis
        qh = jnp.stack([qkv[:, h * HEAD_DIM:(h + 1) * HEAD_DIM]
                        for h in range(N_HEADS)], axis=0)
        kh = jnp.stack([qkv[:, HIDDEN + h * HEAD_DIM:HIDDEN + (h + 1) * HEAD_DIM]
                        for h in range(N_HEADS)], axis=0)
        vh = jnp.stack([qkv[:, 2 * HIDDEN + h * HEAD_DIM:2 * HIDDEN + (h + 1) * HEAD_DIM]
                        for h in range(N_HEADS)], axis=0)

        # batched (over heads) attention: one contraction per stage, one softmax
        scores = jnp.einsum('hqd,hkd->hqk', qh, kh,
                            preferred_element_type=jnp.float32) * scale
        scores = scores + bias                                   # broadcast over heads
        scores = scores - jnp.max(scores, axis=-1, keepdims=True)
        p = jnp.exp(scores)
        p = p * pl.reciprocal(jnp.sum(p, axis=-1, keepdims=True), approx=True)
        ctx = jnp.einsum('hqk,hkd->hqd', p, vh,
                         preferred_element_type=jnp.float32)     # [n_heads, N, head_dim]

        # output projection folded per head (no lane-axis concat), reduced over heads
        attn_h = jnp.einsum('hqd,hdo->hqo', ctx, wo_ref[l],
                            preferred_element_type=jnp.float32)  # [n_heads, N, H]
        attn = attn_h[0]
        for h in range(1, N_HEADS):
            attn = attn + attn_h[h]
        attn = attn + bo_ref[l]

        h1 = _layer_norm(x + attn, ln1_g_ref[l], ln1_b_ref[l])
        ff = _gelu(jnp.dot(h1, w1_ref[l], preferred_element_type=jnp.float32) + b1_ref[l])
        ff = jnp.dot(ff, w2_ref[l], preferred_element_type=jnp.float32) + b2_ref[l]
        x = _layer_norm(h1 + ff, ln2_g_ref[l], ln2_b_ref[l])

    # ---- token classifier (lane-dense: padded label columns have bias -1e9) ----
    logits = jnp.dot(x, cls_w_ref[...], preferred_element_type=jnp.float32) + cls_b_ref[...]
    logits_ref[...] = logits                                     # [N, 128] full-lane store

    # ---- masked token-mean cross-entropy ----
    m = jnp.max(logits, axis=-1, keepdims=True)
    z = logits - m
    lse = jnp.log(jnp.sum(jnp.exp(z), axis=-1, keepdims=True))
    logp = z - lse                                               # [N, 128]
    label_col = lax.broadcasted_iota(jnp.int32, logp.shape, 1)
    onehot = (label_col == labels_ref[...]).astype(jnp.float32)  # labels < 9 < 128
    nll = -jnp.sum(logp * onehot, axis=-1, keepdims=True)        # [N, 1]
    active = active_ref[...]                                     # [N, 1] (1.0 = active token)
    loss_sum = jnp.sum(nll * active, axis=0, keepdims=True)      # [1, 1]
    count = jnp.maximum(jnp.sum(active, axis=0, keepdims=True), 1.0)
    loss_ref[...] = loss_sum * pl.reciprocal(count, approx=True)


def fused_forward(params, ids_flat, pos_type, attn_bias, labels_flat, active_flat):
    N = ids_flat.shape[0]
    # Whole model + activations < 100 KiB -> trivially fits VMEM on v5e/v6e/v7x, so the
    # entire forward pass is a single grid-less invocation.  For larger batches on v7x,
    # add a leading "parallel" grid axis over batch/sequence blocks to use both TensorCores.
    return pl.pallas_call(
        fused_ner_kernel,
        out_shape=(jax.ShapeDtypeStruct((N, LABELS_PAD), jnp.float32),
                   jax.ShapeDtypeStruct((1, 1), jnp.float32)),
    )(ids_flat, pos_type, attn_bias, labels_flat, active_flat,
      params["word_emb"], params["emb_ln_g"], params["emb_ln_b"],
      params["wqkv"], params["bqkv"], params["wo"], params["bo"],
      params["ln1_g"], params["ln1_b"],
      params["w1"], params["b1"], params["w2"], params["b2"],
      params["ln2_g"], params["ln2_b"],
      params["cls_w"], params["cls_b"])


# ---------------- parameters (deterministic, synthetic; kernel-friendly stacked layout) ----------------
def init_params(key):
    keys = iter(jax.random.split(key, 32))

    def nrm(shape):
        return (0.02 * jax.random.normal(next(keys), shape)).astype(jnp.float32)

    wqkv_layers, wo_layers, w1_layers, w2_layers = [], [], [], []
    for _ in range(N_LAYERS):
        wq, wk, wv = nrm((HIDDEN, HIDDEN)), nrm((HIDDEN, HIDDEN)), nrm((HIDDEN, HIDDEN))
        qkv = jnp.concatenate([wq, wk, wv], axis=1)                     # [H, 96]
        qkv = jnp.pad(qkv, ((0, 0), (0, QKV_PAD - 3 * HIDDEN)))         # [H, 128]
        wqkv_layers.append(qkv)
        wo_layers.append(nrm((HIDDEN, HIDDEN)).reshape(N_HEADS, HEAD_DIM, HIDDEN))
        w1_layers.append(nrm((HIDDEN, INTER)))
        w2_layers.append(nrm((INTER, HIDDEN)))

    cls_w = jnp.pad(nrm((HIDDEN, NUM_LABELS)),
                    ((0, 0), (0, LABELS_PAD - NUM_LABELS)))             # [H, 128], pad cols = 0
    cls_b = jnp.concatenate(
        [jnp.zeros((1, NUM_LABELS), jnp.float32),
         jnp.full((1, LABELS_PAD - NUM_LABELS), NEG_INF, jnp.float32)], axis=1)

    return {
        "word_emb": nrm((VOCAB, HIDDEN)),
        "pos_emb": nrm((MAX_POS, HIDDEN)),
        "type_emb": nrm((2, HIDDEN)),
        "emb_ln_g": jnp.ones((1, HIDDEN), jnp.float32),
        "emb_ln_b": jnp.zeros((1, HIDDEN), jnp.float32),
        "wqkv": jnp.stack(wqkv_layers),                                 # [L, H, 128]
        "bqkv": jnp.zeros((N_LAYERS, 1, QKV_PAD), jnp.float32),
        "wo": jnp.stack(wo_layers),                                     # [L, heads, head_dim, H]
        "bo": jnp.zeros((N_LAYERS, 1, HIDDEN), jnp.float32),
        "ln1_g": jnp.ones((N_LAYERS, 1, HIDDEN), jnp.float32),
        "ln1_b": jnp.zeros((N_LAYERS, 1, HIDDEN), jnp.float32),
        "w1": jnp.stack(w1_layers),                                     # [L, H, INTER]
        "b1": jnp.zeros((N_LAYERS, 1, INTER), jnp.float32),
        "w2": jnp.stack(w2_layers),                                     # [L, INTER, H]
        "b2": jnp.zeros((N_LAYERS, 1, HIDDEN), jnp.float32),
        "ln2_g": jnp.ones((N_LAYERS, 1, HIDDEN), jnp.float32),
        "ln2_b": jnp.zeros((N_LAYERS, 1, HIDDEN), jnp.float32),
        "cls_w": cls_w,
        "cls_b": cls_b,
    }


# ---------------- glue ----------------
@jax.jit
def ner_forward(params, input_ids, attention_mask, labels):
    B, S = input_ids.shape
    N = B * S
    ids_flat = input_ids.reshape(N, 1).astype(jnp.int32)
    labels_flat = labels.reshape(N, 1).astype(jnp.int32)
    active_flat = attention_mask.reshape(N, 1).astype(jnp.float32)

    # position + token-type (= 0) embeddings for the flattened token axis (static, no gather)
    pos_type = jnp.tile(params["pos_emb"][:S] + params["type_emb"][0][None, :], (B, 1))  # [N, H]

    # block-diagonal additive attention bias over flattened tokens:
    # token i attends to token j iff same batch element AND attention_mask[j] == 1
    batch_ids = jnp.repeat(jnp.arange(B, dtype=jnp.int32), S)           # [N]
    key_ok = attention_mask.reshape(N) > 0
    valid = (batch_ids[:, None] == batch_ids[None, :]) & key_ok[None, :]
    attn_bias = jnp.where(valid, 0.0, NEG_INF).astype(jnp.float32)      # [N, N]

    logits_pad, loss = fused_forward(params, ids_flat, pos_type, attn_bias,
                                     labels_flat, active_flat)
    logits = logits_pad[:, :NUM_LABELS].reshape(B, S, NUM_LABELS)
    return {
        "loss": loss[0, 0],
        "logits": logits,
        "hidden_states": None,   # TODO(synk): per-layer hidden_states/attentions not returned
        "attentions": None,
    }


if __name__ == "__main__":
    key = jax.random.PRNGKey(0)
    pkey, ikey, lkey = jax.random.split(key, 3)

    params = init_params(pkey)
    input_ids = jax.random.randint(ikey, (BATCH, SEQ), 0, VOCAB, dtype=jnp.int32)
    attention_mask = jnp.array([[1] * SEQ, [1] * (SEQ - 2) + [0] * 2], dtype=jnp.int32)
    labels = jax.random.randint(lkey, (BATCH, SEQ), 0, NUM_LABELS, dtype=jnp.int32)

    out = ner_forward(params, input_ids, attention_mask, labels)
    jax.block_until_ready(out["loss"])
    jax.block_until_ready(out["logits"])

    assert out["logits"].shape == (BATCH, SEQ, NUM_LABELS)
    assert out["loss"].shape == ()
    assert bool(jnp.isfinite(out["loss"]))
    print("KERNEL_OK")
</pallas_src>

<mosaic_0001>
module attributes {stable_mosaic.version = 11 : i64} {
  func.func @fused_ner_kernel(%arg0: memref<16x1xi32, #tpu.memory_space<vmem>>, %arg1: memref<16x32xf32, #tpu.memory_space<vmem>>, %arg2: memref<16x16xf32, #tpu.memory_space<vmem>>, %arg3: memref<16x1xi32, #tpu.memory_space<vmem>>, %arg4: memref<16x1xf32, #tpu.memory_space<vmem>>, %arg5: memref<100x32xf32, #tpu.memory_space<vmem>>, %arg6: memref<1x32xf32, #tpu.memory_space<vmem>>, %arg7: memref<1x32xf32, #tpu.memory_space<vmem>>, %arg8: memref<2x32x128xf32, #tpu.memory_space<vmem>>, %arg9: memref<2x1x128xf32, #tpu.memory_space<vmem>>, %arg10: memref<2x4x8x32xf32, #tpu.memory_space<vmem>>, %arg11: memref<2x1x32xf32, #tpu.memory_space<vmem>>, %arg12: memref<2x1x32xf32, #tpu.memory_space<vmem>>, %arg13: memref<2x1x32xf32, #tpu.memory_space<vmem>>, %arg14: memref<2x32x64xf32, #tpu.memory_space<vmem>>, %arg15: memref<2x1x64xf32, #tpu.memory_space<vmem>>, %arg16: memref<2x64x32xf32, #tpu.memory_space<vmem>>, %arg17: memref<2x1x32xf32, #tpu.memory_space<vmem>>, %arg18: memref<2x1x32xf32, #tpu.memory_space<vmem>>, %arg19: memref<2x1x32xf32, #tpu.memory_space<vmem>>, %arg20: memref<32x128xf32, #tpu.memory_space<vmem>>, %arg21: memref<1x128xf32, #tpu.memory_space<vmem>>, %arg22: memref<16x128xf32, #tpu.memory_space<vmem>>, %arg23: memref<1x1xf32, #tpu.memory_space<vmem>>) attributes {dimension_semantics = [], scalar_prefetch = 0 : i64, scratch_operands = 0 : i64, tpu.core_type = #tpu.core_type<tc>} {
    %c0 = arith.constant 0 : index
    %c0_0 = arith.constant 0 : index
    %0 = vector.load %arg0[%c0, %c0_0] : memref<16x1xi32, #tpu.memory_space<vmem>>, vector<16x1xi32>
    %1 = tpu.iota {dimensions = array<i32: 1>} : vector<16x100xi32>
    %2 = vector.broadcast %0 : vector<16x1xi32> to vector<16x100xi32>
    %3 = arith.cmpi eq, %1, %2 : vector<16x100xi32>
    %4 = arith.extui %3 : vector<16x100xi1> to vector<16x100xi32>
    %5 = arith.sitofp %4 : vector<16x100xi32> to vector<16x100xf32>
    %c0_1 = arith.constant 0 : index
    %c0_2 = arith.constant 0 : index
    %6 = vector.load %arg5[%c0_1, %c0_2] : memref<100x32xf32, #tpu.memory_space<vmem>>, vector<100x32xf32>
    %cst = arith.constant dense<0.000000e+00> : vector<16x32xf32>
    %7 = tpu.matmul %5, %6, %cst {dimension_numbers = #tpu.dot_dimension_numbers<[1], [0], [0], [1], [0, 0, 1, 1], [], []>} : vector<16x100xf32>, vector<100x32xf32>, vector<16x32xf32> -> vector<16x32xf32>
    %c0_3 = arith.constant 0 : index
    %c0_4 = arith.constant 0 : index
    %8 = vector.load %arg1[%c0_3, %c0_4] : memref<16x32xf32, #tpu.memory_space<vmem>>, vector<16x32xf32>
    %9 = arith.addf %7, %8 : vector<16x32xf32>
    %c0_5 = arith.constant 0 : index
    %c0_6 = arith.constant 0 : index
    %10 = vector.load %arg6[%c0_5, %c0_6] : memref<1x32xf32, #tpu.memory_space<vmem>>, vector<1x32xf32>
    %c0_7 = arith.constant 0 : index
    %c0_8 = arith.constant 0 : index
    %11 = vector.load %arg7[%c0_7, %c0_8] : memref<1x32xf32, #tpu.memory_space<vmem>>, vector<1x32xf32>
    %cst_9 = arith.constant dense<0.000000e+00> : vector<16xf32>
    %12 = vector.multi_reduction <add>, %9, %cst_9 [1] : vector<16x32xf32> to vector<16xf32>
    %13 = vector.shape_cast %12 : vector<16xf32> to vector<16x1xf32>
    %cst_10 = arith.constant 3.200000e+01 : f32
    %14 = vector.broadcast %cst_10 : f32 to vector<16x1xf32>
    %15 = arith.divf %13, %14 : vector<16x1xf32>
    %16 = vector.broadcast %15 : vector<16x1xf32> to vector<16x32xf32>
    %17 = arith.subf %9, %16 : vector<16x32xf32>
    %18 = arith.mulf %17, %17 : vector<16x32xf32>
    %cst_11 = arith.constant dense<0.000000e+00> : vector<16xf32>
    %19 = vector.multi_reduction <add>, %18, %cst_11 [1] : vector<16x32xf32> to vector<16xf32>
    %20 = vector.shape_cast %19 : vector<16xf32> to vector<16x1xf32>
    %cst_12 = arith.constant 3.200000e+01 : f32
    %21 = vector.broadcast %cst_12 : f32 to vector<16x1xf32>
    %22 = arith.divf %20, %21 : vector<16x1xf32>
    %23 = vector.broadcast %15 : vector<16x1xf32> to vector<16x32xf32>
    %24 = arith.subf %9, %23 : vector<16x32xf32>
    %cst_13 = arith.constant 9.99999996E-13 : f32
    %25 = vector.broadcast %cst_13 : f32 to vector<16x1xf32>
    %26 = arith.addf %22, %25 : vector<16x1xf32>
    %27 = math.rsqrt %26 : vector<16x1xf32>
    %28 = vector.broadcast %27 : vector<16x1xf32> to vector<16x32xf32>
    %29 = arith.mulf %24, %28 : vector<16x32xf32>
    %30 = vector.broadcast %10 : vector<1x32xf32> to vector<16x32xf32>
    %31 = arith.mulf %29, %30 : vector<16x32xf32>
    %32 = vector.broadcast %11 : vector<1x32xf32> to vector<16x32xf32>
    %33 = arith.addf %31, %32 : vector<16x32xf32>
    %c0_14 = arith.constant 0 : index
    %c0_15 = arith.constant 0 : index
    %34 = vector.load %arg2[%c0_14, %c0_15] : memref<16x16xf32, #tpu.memory_space<vmem>>, vector<16x16xf32>
    %c0_16 = arith.constant 0 : index
    %c0_17 = arith.constant 0 : index
    %c0_18 = arith.constant 0 : index
    %35 = vector.load %arg8[%c0_16, %c0_17, %c0_18] : memref<2x32x128xf32, #tpu.memory_space<vmem>>, vector<1x32x128xf32>
    %36 = vector.shape_cast %35 : vector<1x32x128xf32> to vector<32x128xf32>
    %cst_19 = arith.constant dense<0.000000e+00> : vector<16x128xf32>
    %37 = tpu.matmul %33, %36, %cst_19 {dimension_numbers = #tpu.dot_dimension_numbers<[1], [0], [0], [1], [0, 0, 1, 1], [], []>} : vector<16x32xf32>, vector<32x128xf32>, vector<16x128xf32> -> vector<16x128xf32>
    %c0_20 = arith.constant 0 : index
    %c0_21 = arith.constant 0 : index
    %c0_22 = arith.constant 0 : index
    %38 = vector.load %arg9[%c0_20, %c0_21, %c0_22] : memref<2x1x128xf32, #tpu.memory_space<vmem>>, vector<1x1x128xf32>
    %39 = vector.shape_cast %38 : vector<1x1x128xf32> to vector<1x128xf32>
    %40 = vector.broadcast %39 : vector<1x128xf32> to vector<16x128xf32>
    %41 = arith.addf %37, %40 : vector<16x128xf32>
    %42 = vector.extract_strided_slice %41 {offsets = [0, 0], sizes = [16, 8], strides = [1, 1]} : vector<16x128xf32> to vector<16x8xf32>
    %43 = vector.extract_strided_slice %41 {offsets = [0, 8], sizes = [16, 8], strides = [1, 1]} : vector<16x128xf32> to vector<16x8xf32>
    %44 = vector.extract_strided_slice %41 {offsets = [0, 16], sizes = [16, 8], strides = [1, 1]} : vector<16x128xf32> to vector<16x8xf32>
    %45 = vector.extract_strided_slice %41 {offsets = [0, 24], sizes = [16, 8], strides = [1, 1]} : vector<16x128xf32> to vector<16x8xf32>
    %46 = vector.shape_cast %42 : vector<16x8xf32> to vector<1x16x8xf32>
    %47 = vector.shape_cast %43 : vector<16x8xf32> to vector<1x16x8xf32>
    %48 = vector.shape_cast %44 : vector<16x8xf32> to vector<1x16x8xf32>
    %49 = vector.shape_cast %45 : vector<16x8xf32> to vector<1x16x8xf32>
    %50 = tpu.concatenate %46, %47, %48, %49 in 0 : vector<1x16x8xf32>, vector<1x16x8xf32>, vector<1x16x8xf32>, vector<1x16x8xf32> -> vector<4x16x8xf32>
    %51 = vector.extract_strided_slice %41 {offsets = [0, 32], sizes = [16, 8], strides = [1, 1]} : vector<16x128xf32> to vector<16x8xf32>
    %52 = vector.extract_strided_slice %41 {offsets = [0, 40], sizes = [16, 8], strides = [1, 1]} : vector<16x128xf32> to vector<16x8xf32>
    %53 = vector.extract_strided_slice %41 {offsets = [0, 48], sizes = [16, 8], strides = [1, 1]} : vector<16x128xf32> to vector<16x8xf32>
    %54 = vector.extract_strided_slice %41 {offsets = [0, 56], sizes = [16, 8], strides = [1, 1]} : vector<16x128xf32> to vector<16x8xf32>
    %55 = vector.shape_cast %51 : vector<16x8xf32> to vector<1x16x8xf32>
    %56 = vector.shape_cast %52 : vector<16x8xf32> to vector<1x16x8xf32>
    %57 = vector.shape_cast %53 : vector<16x8xf32> to vector<1x16x8xf32>
    %58 = vector.shape_cast %54 : vector<16x8xf32> to vector<1x16x8xf32>
    %59 = tpu.concatenate %55, %56, %57, %58 in 0 : vector<1x16x8xf32>, vector<1x16x8xf32>, vector<1x16x8xf32>, vector<1x16x8xf32> -> vector<4x16x8xf32>
    %60 = vector.extract_strided_slice %41 {offsets = [0, 64], sizes = [16, 8], strides = [1, 1]} : vector<16x128xf32> to vector<16x8xf32>
    %61 = vector.extract_strided_slice %41 {offsets = [0, 72], sizes = [16, 8], strides = [1, 1]} : vector<16x128xf32> to vector<16x8xf32>
    %62 = vector.extract_strided_slice %41 {offsets = [0, 80], sizes = [16, 8], strides = [1, 1]} : vector<16x128xf32> to vector<16x8xf32>
    %63 = vector.extract_strided_slice %41 {offsets = [0, 88], sizes = [16, 8], strides = [1, 1]} : vector<16x128xf32> to vector<16x8xf32>
    %64 = vector.shape_cast %60 : vector<16x8xf32> to vector<1x16x8xf32>
    %65 = vector.shape_cast %61 : vector<16x8xf32> to vector<1x16x8xf32>
    %66 = vector.shape_cast %62 : vector<16x8xf32> to vector<1x16x8xf32>
    %67 = vector.shape_cast %63 : vector<16x8xf32> to vector<1x16x8xf32>
    %68 = tpu.concatenate %64, %65, %66, %67 in 0 : vector<1x16x8xf32>, vector<1x16x8xf32>, vector<1x16x8xf32>, vector<1x16x8xf32> -> vector<4x16x8xf32>
    "tpu.trace_start"() <{level = 10 : i32, message = "hqd,hkd->hqk"}> : () -> ()
    %cst_23 = arith.constant dense<0.000000e+00> : vector<4x16x16xf32>
    %69 = tpu.matmul %50, %59, %cst_23 {dimension_numbers = #tpu.dot_dimension_numbers<[2], [2], [1], [1], [0, 0, 0, 1, 1, 1], [0], [0]>} : vector<4x16x8xf32>, vector<4x16x8xf32>, vector<4x16x16xf32> -> vector<4x16x16xf32>
    "tpu.trace_stop"() : () -> ()
    %cst_24 = arith.constant 0.353553385 : f32
    %70 = vector.broadcast %cst_24 : f32 to vector<4x16x16xf32>
    %71 = arith.mulf %69, %70 : vector<4x16x16xf32>
    %72 = vector.shape_cast %34 : vector<16x16xf32> to vector<1x16x16xf32>
    %73 = vector.broadcast %72 : vector<1x16x16xf32> to vector<4x16x16xf32>
    %74 = arith.addf %71, %73 : vector<4x16x16xf32>
    %cst_25 = arith.constant dense<0xFF800000> : vector<4x16xf32>
    %75 = vector.multi_reduction <maximumf>, %74, %cst_25 [2] : vector<4x16x16xf32> to vector<4x16xf32>
    %76 = vector.shape_cast %75 : vector<4x16xf32> to vector<4x16x1xf32>
    %77 = vector.broadcast %76 : vector<4x16x1xf32> to vector<4x16x16xf32>
    %78 = arith.subf %74, %77 : vector<4x16x16xf32>
    %79 = math.exp %78 : vector<4x16x16xf32>
    %cst_26 = arith.constant dense<0.000000e+00> : vector<4x16xf32>
    %80 = vector.multi_reduction <add>, %79, %cst_26 [2] : vector<4x16x16xf32> to vector<4x16xf32>
    %81 = vector.shape_cast %80 : vector<4x16xf32> to vector<4x16x1xf32>
    %82 = tpu.reciprocal %81 {approx = true} : vector<4x16x1xf32> -> vector<4x16x1xf32>
    %83 = vector.broadcast %82 : vector<4x16x1xf32> to vector<4x16x16xf32>
    %84 = arith.mulf %79, %83 : vector<4x16x16xf32>
    "tpu.trace_start"() <{level = 10 : i32, message = "hqk,hkd->hqd"}> : () -> ()
    %cst_27 = arith.constant dense<0.000000e+00> : vector<4x16x8xf32>
    %85 = tpu.matmul %84, %68, %cst_27 {dimension_numbers = #tpu.dot_dimension_numbers<[2], [1], [1], [2], [0, 0, 0, 1, 1, 2], [0], [0]>} : vector<4x16x16xf32>, vector<4x16x8xf32>, vector<4x16x8xf32> -> vector<4x16x8xf32>
    "tpu.trace_stop"() : () -> ()
    %c0_28 = arith.constant 0 : index
    %c0_29 = arith.constant 0 : index
    %c0_30 = arith.constant 0 : index
    %c0_31 = arith.constant 0 : index
    %86 = vector.load %arg10[%c0_28, %c0_29, %c0_30, %c0_31] : memref<2x4x8x32xf32, #tpu.memory_space<vmem>>, vector<1x4x8x32xf32>
    %87 = vector.shape_cast %86 : vector<1x4x8x32xf32> to vector<4x8x32xf32>
    "tpu.trace_start"() <{level = 10 : i32, message = "hqd,hdo->hqo"}> : () -> ()
    %cst_32 = arith.constant dense<0.000000e+00> : vector<4x16x32xf32>
    %88 = tpu.matmul %85, %87, %cst_32 {dimension_numbers = #tpu.dot_dimension_numbers<[2], [1], [1], [2], [0, 0, 0, 1, 1, 2], [0], [0]>} : vector<4x16x8xf32>, vector<4x8x32xf32>, vector<4x16x32xf32> -> vector<4x16x32xf32>
    "tpu.trace_stop"() : () -> ()
    %89 = vector.extract_strided_slice %88 {offsets = [0, 0, 0], sizes = [1, 16, 32], strides = [1, 1, 1]} : vector<4x16x32xf32> to vector<1x16x32xf32>
    %90 = vector.shape_cast %89 : vector<1x16x32xf32> to vector<16x32xf32>
    %91 = vector.extract_strided_slice %88 {offsets = [1, 0, 0], sizes = [1, 16, 32], strides = [1, 1, 1]} : vector<4x16x32xf32> to vector<1x16x32xf32>
    %92 = vector.shape_cast %91 : vector<1x16x32xf32> to vector<16x32xf32>
    %93 = arith.addf %90, %92 : vector<16x32xf32>
    %94 = vector.extract_strided_slice %88 {offsets = [2, 0, 0], sizes = [1, 16, 32], strides = [1, 1, 1]} : vector<4x16x32xf32> to vector<1x16x32xf32>
    %95 = vector.shape_cast %94 : vector<1x16x32xf32> to vector<16x32xf32>
    %96 = arith.addf %93, %95 : vector<16x32xf32>
    %97 = vector.extract_strided_slice %88 {offsets = [3, 0, 0], sizes = [1, 16, 32], strides = [1, 1, 1]} : vector<4x16x32xf32> to vector<1x16x32xf32>
    %98 = vector.shape_cast %97 : vector<1x16x32xf32> to vector<16x32xf32>
    %99 = arith.addf %96, %98 : vector<16x32xf32>
    %c0_33 = arith.constant 0 : index
    %c0_34 = arith.constant 0 : index
    %c0_35 = arith.constant 0 : index
    %100 = vector.load %arg11[%c0_33, %c0_34, %c0_35] : memref<2x1x32xf32, #tpu.memory_space<vmem>>, vector<1x1x32xf32>
    %101 = vector.shape_cast %100 : vector<1x1x32xf32> to vector<1x32xf32>
    %102 = vector.broadcast %101 : vector<1x32xf32> to vector<16x32xf32>
    %103 = arith.addf %99, %102 : vector<16x32xf32>
    %104 = arith.addf %33, %103 : vector<16x32xf32>
    %c0_36 = arith.constant 0 : index
    %c0_37 = arith.constant 0 : index
    %c0_38 = arith.constant 0 : index
    %105 = vector.load %arg12[%c0_36, %c0_37, %c0_38] : memref<2x1x32xf32, #tpu.memory_space<vmem>>, vector<1x1x32xf32>
    %106 = vector.shape_cast %105 : vector<1x1x32xf32> to vector<1x32xf32>
    %c0_39 = arith.constant 0 : index
    %c0_40 = arith.constant 0 : index
    %c0_41 = arith.constant 0 : index
    %107 = vector.load %arg13[%c0_39, %c0_40, %c0_41] : memref<2x1x32xf32, #tpu.memory_space<vmem>>, vector<1x1x32xf32>
    %108 = vector.shape_cast %107 : vector<1x1x32xf32> to vector<1x32xf32>
    %cst_42 = arith.constant dense<0.000000e+00> : vector<16xf32>
    %109 = vector.multi_reduction <add>, %104, %cst_42 [1] : vector<16x32xf32> to vector<16xf32>
    %110 = vector.shape_cast %109 : vector<16xf32> to vector<16x1xf32>
    %cst_43 = arith.constant 3.200000e+01 : f32
    %111 = vector.broadcast %cst_43 : f32 to vector<16x1xf32>
    %112 = arith.divf %110, %111 : vector<16x1xf32>
    %113 = vector.broadcast %112 : vector<16x1xf32> to vector<16x32xf32>
    %114 = arith.subf %104, %113 : vector<16x32xf32>
    %115 = arith.mulf %114, %114 : vector<16x32xf32>
    %cst_44 = arith.constant dense<0.000000e+00> : vector<16xf32>
    %116 = vector.multi_reduction <add>, %115, %cst_44 [1] : vector<16x32xf32> to vector<16xf32>
    %117 = vector.shape_cast %116 : vector<16xf32> to vector<16x1xf32>
    %cst_45 = arith.constant 3.200000e+01 : f32
    %118 = vector.broadcast %cst_45 : f32 to vector<16x1xf32>
    %119 = arith.divf %117, %118 : vector<16x1xf32>
    %120 = vector.broadcast %112 : vector<16x1xf32> to vector<16x32xf32>
    %121 = arith.subf %104, %120 : vector<16x32xf32>
    %cst_46 = arith.constant 9.99999996E-13 : f32
    %122 = vector.broadcast %cst_46 : f32 to vector<16x1xf32>
    %123 = arith.addf %119, %122 : vector<16x1xf32>
    %124 = math.rsqrt %123 : vector<16x1xf32>
    %125 = vector.broadcast %124 : vector<16x1xf32> to vector<16x32xf32>
    %126 = arith.mulf %121, %125 : vector<16x32xf32>
    %127 = vector.broadcast %106 : vector<1x32xf32> to vector<16x32xf32>
    %128 = arith.mulf %126, %127 : vector<16x32xf32>
    %129 = vector.broadcast %108 : vector<1x32xf32> to vector<16x32xf32>
    %130 = arith.addf %128, %129 : vector<16x32xf32>
    %c0_47 = arith.constant 0 : index
    %c0_48 = arith.constant 0 : index
    %c0_49 = arith.constant 0 : index
    %131 = vector.load %arg14[%c0_47, %c0_48, %c0_49] : memref<2x32x64xf32, #tpu.memory_space<vmem>>, vector<1x32x64xf32>
    %132 = vector.shape_cast %131 : vector<1x32x64xf32> to vector<32x64xf32>
    %cst_50 = arith.constant dense<0.000000e+00> : vector<16x64xf32>
    %133 = tpu.matmul %130, %132, %cst_50 {dimension_numbers = #tpu.dot_dimension_numbers<[1], [0], [0], [1], [0, 0, 1, 1], [], []>} : vector<16x32xf32>, vector<32x64xf32>, vector<16x64xf32> -> vector<16x64xf32>
    %c0_51 = arith.constant 0 : index
    %c0_52 = arith.constant 0 : index
    %c0_53 = arith.constant 0 : index
    %134 = vector.load %arg15[%c0_51, %c0_52, %c0_53] : memref<2x1x64xf32, #tpu.memory_space<vmem>>, vector<1x1x64xf32>
    %135 = vector.shape_cast %134 : vector<1x1x64xf32> to vector<1x64xf32>
    %136 = vector.broadcast %135 : vector<1x64xf32> to vector<16x64xf32>
    %137 = arith.addf %133, %136 : vector<16x64xf32>
    %cst_54 = arith.constant 5.000000e-01 : f32
    %138 = vector.broadcast %cst_54 : f32 to vector<16x64xf32>
    %139 = arith.mulf %138, %137 : vector<16x64xf32>
    %cst_55 = arith.constant 4.471500e-02 : f32
    %140 = vector.broadcast %cst_55 : f32 to vector<16x64xf32>
    %141 = arith.mulf %140, %137 : vector<16x64xf32>
    %142 = arith.mulf %141, %137 : vector<16x64xf32>
    %143 = arith.mulf %142, %137 : vector<16x64xf32>
    %144 = arith.addf %137, %143 : vector<16x64xf32>
    %cst_56 = arith.constant 0.797884583 : f32
    %145 = vector.broadcast %cst_56 : f32 to vector<16x64xf32>
    %146 = arith.mulf %145, %144 : vector<16x64xf32>
    %147 = math.tanh %146 : vector<16x64xf32>
    %cst_57 = arith.constant 1.000000e+00 : f32
    %148 = vector.broadcast %cst_57 : f32 to vector<16x64xf32>
    %149 = arith.addf %148, %147 : vector<16x64xf32>
    %150 = arith.mulf %139, %149 : vector<16x64xf32>
    %c0_58 = arith.constant 0 : index
    %c0_59 = arith.constant 0 : index
    %c0_60 = arith.constant 0 : index
    %151 = vector.load %arg16[%c0_58, %c0_59, %c0_60] : memref<2x64x32xf32, #tpu.memory_space<vmem>>, vector<1x64x32xf32>
    %152 = vector.shape_cast %151 : vector<1x64x32xf32> to vector<64x32xf32>
    %cst_61 = arith.constant dense<0.000000e+00> : vector<16x32xf32>
    %153 = tpu.matmul %150, %152, %cst_61 {dimension_numbers = #tpu.dot_dimension_numbers<[1], [0], [0], [1], [0, 0, 1, 1], [], []>} : vector<16x64xf32>, vector<64x32xf32>, vector<16x32xf32> -> vector<16x32xf32>
    %c0_62 = arith.constant 0 : index
    %c0_63 = arith.constant 0 : index
    %c0_64 = arith.constant 0 : index
    %154 = vector.load %arg17[%c0_62, %c0_63, %c0_64] : memref<2x1x32xf32, #tpu.memory_space<vmem>>, vector<1x1x32xf32>
    %155 = vector.shape_cast %154 : vector<1x1x32xf32> to vector<1x32xf32>
    %156 = vector.broadcast %155 : vector<1x32xf32> to vector<16x32xf32>
    %157 = arith.addf %153, %156 : vector<16x32xf32>
    %158 = arith.addf %130, %157 : vector<16x32xf32>
    %c0_65 = arith.constant 0 : index
    %c0_66 = arith.constant 0 : index
    %c0_67 = arith.constant 0 : index
    %159 = vector.load %arg18[%c0_65, %c0_66, %c0_67] : memref<2x1x32xf32, #tpu.memory_space<vmem>>, vector<1x1x32xf32>
    %160 = vector.shape_cast %159 : vector<1x1x32xf32> to vector<1x32xf32>
    %c0_68 = arith.constant 0 : index
    %c0_69 = arith.constant 0 : index
    %c0_70 = arith.constant 0 : index
    %161 = vector.load %arg19[%c0_68, %c0_69, %c0_70] : memref<2x1x32xf32, #tpu.memory_space<vmem>>, vector<1x1x32xf32>
    %162 = vector.shape_cast %161 : vector<1x1x32xf32> to vector<1x32xf32>
    %cst_71 = arith.constant dense<0.000000e+00> : vector<16xf32>
    %163 = vector.multi_reduction <add>, %158, %cst_71 [1] : vector<16x32xf32> to vector<16xf32>
    %164 = vector.shape_cast %163 : vector<16xf32> to vector<16x1xf32>
    %cst_72 = arith.constant 3.200000e+01 : f32
    %165 = vector.broadcast %cst_72 : f32 to vector<16x1xf32>
    %166 = arith.divf %164, %165 : vector<16x1xf32>
    %167 = vector.broadcast %166 : vector<16x1xf32> to vector<16x32xf32>
    %168 = arith.subf %158, %167 : vector<16x32xf32>
    %169 = arith.mulf %168, %168 : vector<16x32xf32>
    %cst_73 = arith.constant dense<0.000000e+00> : vector<16xf32>
    %170 = vector.multi_reduction <add>, %169, %cst_73 [1] : vector<16x32xf32> to vector<16xf32>
    %171 = vector.shape_cast %170 : vector<16xf32> to vector<16x1xf32>
    %cst_74 = arith.constant 3.200000e+01 : f32
    %172 = vector.broadcast %cst_74 : f32 to vector<16x1xf32>
    %173 = arith.divf %171, %172 : vector<16x1xf32>
    %174 = vector.broadcast %166 : vector<16x1xf32> to vector<16x32xf32>
    %175 = arith.subf %158, %174 : vector<16x32xf32>
    %cst_75 = arith.constant 9.99999996E-13 : f32
    %176 = vector.broadcast %cst_75 : f32 to vector<16x1xf32>
    %177 = arith.addf %173, %176 : vector<16x1xf32>
    %178 = math.rsqrt %177 : vector<16x1xf32>
    %179 = vector.broadcast %178 : vector<16x1xf32> to vector<16x32xf32>
    %180 = arith.mulf %175, %179 : vector<16x32xf32>
    %181 = vector.broadcast %160 : vector<1x32xf32> to vector<16x32xf32>
    %182 = arith.mulf %180, %181 : vector<16x32xf32>
    %183 = vector.broadcast %162 : vector<1x32xf32> to vector<16x32xf32>
    %184 = arith.addf %182, %183 : vector<16x32xf32>
    %c1 = arith.constant 1 : index
    %c0_76 = arith.constant 0 : index
    %c0_77 = arith.constant 0 : index
    %185 = vector.load %arg8[%c1, %c0_76, %c0_77] : memref<2x32x128xf32, #tpu.memory_space<vmem>>, vector<1x32x128xf32>
    %186 = vector.shape_cast %185 : vector<1x32x128xf32> to vector<32x128xf32>
    %cst_78 = arith.constant dense<0.000000e+00> : vector<16x128xf32>
    %187 = tpu.matmul %184, %186, %cst_78 {dimension_numbers = #tpu.dot_dimension_numbers<[1], [0], [0], [1], [0, 0, 1, 1], [], []>} : vector<16x32xf32>, vector<32x128xf32>, vector<16x128xf32> -> vector<16x128xf32>
    %c1_79 = arith.constant 1 : index
    %c0_80 = arith.constant 0 : index
    %c0_81 = arith.constant 0 : index
    %188 = vector.load %arg9[%c1_79, %c0_80, %c0_81] : memref<2x1x128xf32, #tpu.memory_space<vmem>>, vector<1x1x128xf32>
    %189 = vector.shape_cast %188 : vector<1x1x128xf32> to vector<1x128xf32>
    %190 = vector.broadcast %189 : vector<1x128xf32> to vector<16x128xf32>
    %191 = arith.addf %187, %190 : vector<16x128xf32>
    %192 = vector.extract_strided_slice %191 {offsets = [0, 0], sizes = [16, 8], strides = [1, 1]} : vector<16x128xf32> to vector<16x8xf32>
    %193 = vector.extract_strided_slice %191 {offsets = [0, 8], sizes = [16, 8], strides = [1, 1]} : vector<16x128xf32> to vector<16x8xf32>
    %194 = vector.extract_strided_slice %191 {offsets = [0, 16], sizes = [16, 8], strides = [1, 1]} : vector<16x128xf32> to vector<16x8xf32>
    %195 = vector.extract_strided_slice %191 {offsets = [0, 24], sizes = [16, 8], strides = [1, 1]} : vector<16x128xf32> to vector<16x8xf32>
    %196 = vector.shape_cast %192 : vector<16x8xf32> to vector<1x16x8xf32>
    %197 = vector.shape_cast %193 : vector<16x8xf32> to vector<1x16x8xf32>
    %198 = vector.shape_cast %194 : vector<16x8xf32> to vector<1x16x8xf32>
    %199 = vector.shape_cast %195 : vector<16x8xf32> to vector<1x16x8xf32>
    %200 = tpu.concatenate %196, %197, %198, %199 in 0 : vector<1x16x8xf32>, vector<1x16x8xf32>, vector<1x16x8xf32>, vector<1x16x8xf32> -> vector<4x16x8xf32>
    %201 = vector.extract_strided_slice %191 {offsets = [0, 32], sizes = [16, 8], strides = [1, 1]} : vector<16x128xf32> to vector<16x8xf32>
    %202 = vector.extract_strided_slice %191 {offsets = [0, 40], sizes = [16, 8], strides = [1, 1]} : vector<16x128xf32> to vector<16x8xf32>
    %203 = vector.extract_strided_slice %191 {offsets = [0, 48], sizes = [16, 8], strides = [1, 1]} : vector<16x128xf32> to vector<16x8xf32>
    %204 = vector.extract_strided_slice %191 {offsets = [0, 56], sizes = [16, 8], strides = [1, 1]} : vector<16x128xf32> to vector<16x8xf32>
    %205 = vector.shape_cast %201 : vector<16x8xf32> to vector<1x16x8xf32>
    %206 = vector.shape_cast %202 : vector<16x8xf32> to vector<1x16x8xf32>
    %207 = vector.shape_cast %203 : vector<16x8xf32> to vector<1x16x8xf32>
    %208 = vector.shape_cast %204 : vector<16x8xf32> to vector<1x16x8xf32>
    %209 = tpu.concatenate %205, %206, %207, %208 in 0 : vector<1x16x8xf32>, vector<1x16x8xf32>, vector<1x16x8xf32>, vector<1x16x8xf32> -> vector<4x16x8xf32>
    %210 = vector.extract_strided_slice %191 {offsets = [0, 64], sizes = [16, 8], strides = [1, 1]} : vector<16x128xf32> to vector<16x8xf32>
    %211 = vector.extract_strided_slice %191 {offsets = [0, 72], sizes = [16, 8], strides = [1, 1]} : vector<16x128xf32> to vector<16x8xf32>
    %212 = vector.extract_strided_slice %191 {offsets = [0, 80], sizes = [16, 8], strides = [1, 1]} : vector<16x128xf32> to vector<16x8xf32>
    %213 = vector.extract_strided_slice %191 {offsets = [0, 88], sizes = [16, 8], strides = [1, 1]} : vector<16x128xf32> to vector<16x8xf32>
    %214 = vector.shape_cast %210 : vector<16x8xf32> to vector<1x16x8xf32>
    %215 = vector.shape_cast %211 : vector<16x8xf32> to vector<1x16x8xf32>
    %216 = vector.shape_cast %212 : vector<16x8xf32> to vector<1x16x8xf32>
    %217 = vector.shape_cast %213 : vector<16x8xf32> to vector<1x16x8xf32>
    %218 = tpu.concatenate %214, %215, %216, %217 in 0 : vector<1x16x8xf32>, vector<1x16x8xf32>, vector<1x16x8xf32>, vector<1x16x8xf32> -> vector<4x16x8xf32>
    "tpu.trace_start"() <{level = 10 : i32, message = "hqd,hkd->hqk"}> : () -> ()
    %cst_82 = arith.constant dense<0.000000e+00> : vector<4x16x16xf32>
    %219 = tpu.matmul %200, %209, %cst_82 {dimension_numbers = #tpu.dot_dimension_numbers<[2], [2], [1], [1], [0, 0, 0, 1, 1, 1], [0], [0]>} : vector<4x16x8xf32>, vector<4x16x8xf32>, vector<4x16x16xf32> -> vector<4x16x16xf32>
    "tpu.trace_stop"() : () -> ()
    %cst_83 = arith.constant 0.353553385 : f32
    %220 = vector.broadcast %cst_83 : f32 to vector<4x16x16xf32>
    %221 = arith.mulf %219, %220 : vector<4x16x16xf32>
    %222 = vector.shape_cast %34 : vector<16x16xf32> to vector<1x16x16xf32>
    %223 = vector.broadcast %222 : vector<1x16x16xf32> to vector<4x16x16xf32>
    %224 = arith.addf %221, %223 : vector<4x16x16xf32>
    %cst_84 = arith.constant dense<0xFF800000> : vector<4x16xf32>
    %225 = vector.multi_reduction <maximumf>, %224, %cst_84 [2] : vector<4x16x16xf32> to vector<4x16xf32>
    %226 = vector.shape_cast %225 : vector<4x16xf32> to vector<4x16x1xf32>
    %227 = vector.broadcast %226 : vector<4x16x1xf32> to vector<4x16x16xf32>
    %228 = arith.subf %224, %227 : vector<4x16x16xf32>
    %229 = math.exp %228 : vector<4x16x16xf32>
    %cst_85 = arith.constant dense<0.000000e+00> : vector<4x16xf32>
    %230 = vector.multi_reduction <add>, %229, %cst_85 [2] : vector<4x16x16xf32> to vector<4x16xf32>
    %231 = vector.shape_cast %230 : vector<4x16xf32> to vector<4x16x1xf32>
    %232 = tpu.reciprocal %231 {approx = true} : vector<4x16x1xf32> -> vector<4x16x1xf32>
    %233 = vector.broadcast %232 : vector<4x16x1xf32> to vector<4x16x16xf32>
    %234 = arith.mulf %229, %233 : vector<4x16x16xf32>
    "tpu.trace_start"() <{level = 10 : i32, message = "hqk,hkd->hqd"}> : () -> ()
    %cst_86 = arith.constant dense<0.000000e+00> : vector<4x16x8xf32>
    %235 = tpu.matmul %234, %218, %cst_86 {dimension_numbers = #tpu.dot_dimension_numbers<[2], [1], [1], [2], [0, 0, 0, 1, 1, 2], [0], [0]>} : vector<4x16x16xf32>, vector<4x16x8xf32>, vector<4x16x8xf32> -> vector<4x16x8xf32>
    "tpu.trace_stop"() : () -> ()
    %c1_87 = arith.constant 1 : index
    %c0_88 = arith.constant 0 : index
    %c0_89 = arith.constant 0 : index
    %c0_90 = arith.constant 0 : index
    %236 = vector.load %arg10[%c1_87, %c0_88, %c0_89, %c0_90] : memref<2x4x8x32xf32, #tpu.memory_space<vmem>>, vector<1x4x8x32xf32>
    %237 = vector.shape_cast %236 : vector<1x4x8x32xf32> to vector<4x8x32xf32>
    "tpu.trace_start"() <{level = 10 : i32, message = "hqd,hdo->hqo"}> : () -> ()
    %cst_91 = arith.constant dense<0.000000e+00> : vector<4x16x32xf32>
    %238 = tpu.matmul %235, %237, %cst_91 {dimension_numbers = #tpu.dot_dimension_numbers<[2], [1], [1], [2], [0, 0, 0, 1, 1, 2], [0], [0]>} : vector<4x16x8xf32>, vector<4x8x32xf32>, vector<4x16x32xf32> -> vector<4x16x32xf32>
    "tpu.trace_stop"() : () -> ()
    %239 = vector.extract_strided_slice %238 {offsets = [0, 0, 0], sizes = [1, 16, 32], strides = [1, 1, 1]} : vector<4x16x32xf32> to vector<1x16x32xf32>
    %240 = vector.shape_cast %239 : vector<1x16x32xf32> to vector<16x32xf32>
    %241 = vector.extract_strided_slice %238 {offsets = [1, 0, 0], sizes = [1, 16, 32], strides = [1, 1, 1]} : vector<4x16x32xf32> to vector<1x16x32xf32>
    %242 = vector.shape_cast %241 : vector<1x16x32xf32> to vector<16x32xf32>
    %243 = arith.addf %240, %242 : vector<16x32xf32>
    %244 = vector.extract_strided_slice %238 {offsets = [2, 0, 0], sizes = [1, 16, 32], strides = [1, 1, 1]} : vector<4x16x32xf32> to vector<1x16x32xf32>
    %245 = vector.shape_cast %244 : vector<1x16x32xf32> to vector<16x32xf32>
    %246 = arith.addf %243, %245 : vector<16x32xf32>
    %247 = vector.extract_strided_slice %238 {offsets = [3, 0, 0], sizes = [1, 16, 32], strides = [1, 1, 1]} : vector<4x16x32xf32> to vector<1x16x32xf32>
    %248 = vector.shape_cast %247 : vector<1x16x32xf32> to vector<16x32xf32>
    %249 = arith.addf %246, %248 : vector<16x32xf32>
    %c1_92 = arith.constant 1 : index
    %c0_93 = arith.constant 0 : index
    %c0_94 = arith.constant 0 : index
    %250 = vector.load %arg11[%c1_92, %c0_93, %c0_94] : memref<2x1x32xf32, #tpu.memory_space<vmem>>, vector<1x1x32xf32>
    %251 = vector.shape_cast %250 : vector<1x1x32xf32> to vector<1x32xf32>
    %252 = vector.broadcast %251 : vector<1x32xf32> to vector<16x32xf32>
    %253 = arith.addf %249, %252 : vector<16x32xf32>
    %254 = arith.addf %184, %253 : vector<16x32xf32>
    %c1_95 = arith.constant 1 : index
    %c0_96 = arith.constant 0 : index
    %c0_97 = arith.constant 0 : index
    %255 = vector.load %arg12[%c1_95, %c0_96, %c0_97] : memref<2x1x32xf32, #tpu.memory_space<vmem>>, vector<1x1x32xf32>
    %256 = vector.shape_cast %255 : vector<1x1x32xf32> to vector<1x32xf32>
    %c1_98 = arith.constant 1 : index
    %c0_99 = arith.constant 0 : index
    %c0_100 = arith.constant 0 : index
    %257 = vector.load %arg13[%c1_98, %c0_99, %c0_100] : memref<2x1x32xf32, #tpu.memory_space<vmem>>, vector<1x1x32xf32>
    %258 = vector.shape_cast %257 : vector<1x1x32xf32> to vector<1x32xf32>
    %cst_101 = arith.constant dense<0.000000e+00> : vector<16xf32>
    %259 = vector.multi_reduction <add>, %254, %cst_101 [1] : vector<16x32xf32> to vector<16xf32>
    %260 = vector.shape_cast %259 : vector<16xf32> to vector<16x1xf32>
    %cst_102 = arith.constant 3.200000e+01 : f32
    %261 = vector.broadcast %cst_102 : f32 to vector<16x1xf32>
    %262 = arith.divf %260, %261 : vector<16x1xf32>
    %263 = vector.broadcast %262 : vector<16x1xf32> to vector<16x32xf32>
    %264 = arith.subf %254, %263 : vector<16x32xf32>
    %265 = arith.mulf %264, %264 : vector<16x32xf32>
    %cst_103 = arith.constant dense<0.000000e+00> : vector<16xf32>
    %266 = vector.multi_reduction <add>, %265, %cst_103 [1] : vector<16x32xf32> to vector<16xf32>
    %267 = vector.shape_cast %266 : vector<16xf32> to vector<16x1xf32>
    %cst_104 = arith.constant 3.200000e+01 : f32
    %268 = vector.broadcast %cst_104 : f32 to vector<16x1xf32>
    %269 = arith.divf %267, %268 : vector<16x1xf32>
    %270 = vector.broadcast %262 : vector<16x1xf32> to vector<16x32xf32>
    %271 = arith.subf %254, %270 : vector<16x32xf32>
    %cst_105 = arith.constant 9.99999996E-13 : f32
    %272 = vector.broadcast %cst_105 : f32 to vector<16x1xf32>
    %273 = arith.addf %269, %272 : vector<16x1xf32>
    %274 = math.rsqrt %273 : vector<16x1xf32>
    %275 = vector.broadcast %274 : vector<16x1xf32> to vector<16x32xf32>
    %276 = arith.mulf %271, %275 : vector<16x32xf32>
    %277 = vector.broadcast %256 : vector<1x32xf32> to vector<16x32xf32>
    %278 = arith.mulf %276, %277 : vector<16x32xf32>
    %279 = vector.broadcast %258 : vector<1x32xf32> to vector<16x32xf32>
    %280 = arith.addf %278, %279 : vector<16x32xf32>
    %c1_106 = arith.constant 1 : index
    %c0_107 = arith.constant 0 : index
    %c0_108 = arith.constant 0 : index
    %281 = vector.load %arg14[%c1_106, %c0_107, %c0_108] : memref<2x32x64xf32, #tpu.memory_space<vmem>>, vector<1x32x64xf32>
    %282 = vector.shape_cast %281 : vector<1x32x64xf32> to vector<32x64xf32>
    %cst_109 = arith.constant dense<0.000000e+00> : vector<16x64xf32>
    %283 = tpu.matmul %280, %282, %cst_109 {dimension_numbers = #tpu.dot_dimension_numbers<[1], [0], [0], [1], [0, 0, 1, 1], [], []>} : vector<16x32xf32>, vector<32x64xf32>, vector<16x64xf32> -> vector<16x64xf32>
    %c1_110 = arith.constant 1 : index
    %c0_111 = arith.constant 0 : index
    %c0_112 = arith.constant 0 : index
    %284 = vector.load %arg15[%c1_110, %c0_111, %c0_112] : memref<2x1x64xf32, #tpu.memory_space<vmem>>, vector<1x1x64xf32>
    %285 = vector.shape_cast %284 : vector<1x1x64xf32> to vector<1x64xf32>
    %286 = vector.broadcast %285 : vector<1x64xf32> to vector<16x64xf32>
    %287 = arith.addf %283, %286 : vector<16x64xf32>
    %cst_113 = arith.constant 5.000000e-01 : f32
    %288 = vector.broadcast %cst_113 : f32 to vector<16x64xf32>
    %289 = arith.mulf %288, %287 : vector<16x64xf32>
    %cst_114 = arith.constant 4.471500e-02 : f32
    %290 = vector.broadcast %cst_114 : f32 to vector<16x64xf32>
    %291 = arith.mulf %290, %287 : vector<16x64xf32>
    %292 = arith.mulf %291, %287 : vector<16x64xf32>
    %293 = arith.mulf %292, %287 : vector<16x64xf32>
    %294 = arith.addf %287, %293 : vector<16x64xf32>
    %cst_115 = arith.constant 0.797884583 : f32
    %295 = vector.broadcast %cst_115 : f32 to vector<16x64xf32>
    %296 = arith.mulf %295, %294 : vector<16x64xf32>
    %297 = math.tanh %296 : vector<16x64xf32>
    %cst_116 = arith.constant 1.000000e+00 : f32
    %298 = vector.broadcast %cst_116 : f32 to vector<16x64xf32>
    %299 = arith.addf %298, %297 : vector<16x64xf32>
    %300 = arith.mulf %289, %299 : vector<16x64xf32>
    %c1_117 = arith.constant 1 : index
    %c0_118 = arith.constant 0 : index
    %c0_119 = arith.constant 0 : index
    %301 = vector.load %arg16[%c1_117, %c0_118, %c0_119] : memref<2x64x32xf32, #tpu.memory_space<vmem>>, vector<1x64x32xf32>
    %302 = vector.shape_cast %301 : vector<1x64x32xf32> to vector<64x32xf32>
    %cst_120 = arith.constant dense<0.000000e+00> : vector<16x32xf32>
    %303 = tpu.matmul %300, %302, %cst_120 {dimension_numbers = #tpu.dot_dimension_numbers<[1], [0], [0], [1], [0, 0, 1, 1], [], []>} : vector<16x64xf32>, vector<64x32xf32>, vector<16x32xf32> -> vector<16x32xf32>
    %c1_121 = arith.constant 1 : index
    %c0_122 = arith.constant 0 : index
    %c0_123 = arith.constant 0 : index
    %304 = vector.load %arg17[%c1_121, %c0_122, %c0_123] : memref<2x1x32xf32, #tpu.memory_space<vmem>>, vector<1x1x32xf32>
    %305 = vector.shape_cast %304 : vector<1x1x32xf32> to vector<1x32xf32>
    %306 = vector.broadcast %305 : vector<1x32xf32> to vector<16x32xf32>
    %307 = arith.addf %303, %306 : vector<16x32xf32>
    %308 = arith.addf %280, %307 : vector<16x32xf32>
    %c1_124 = arith.constant 1 : index
    %c0_125 = arith.constant 0 : index
    %c0_126 = arith.constant 0 : index
    %309 = vector.load %arg18[%c1_124, %c0_125, %c0_126] : memref<2x1x32xf32, #tpu.memory_space<vmem>>, vector<1x1x32xf32>
    %310 = vector.shape_cast %309 : vector<1x1x32xf32> to vector<1x32xf32>
    %c1_127 = arith.constant 1 : index
    %c0_128 = arith.constant 0 : index
    %c0_129 = arith.constant 0 : index
    %311 = vector.load %arg19[%c1_127, %c0_128, %c0_129] : memref<2x1x32xf32, #tpu.memory_space<vmem>>, vector<1x1x32xf32>
    %312 = vector.shape_cast %311 : vector<1x1x32xf32> to vector<1x32xf32>
    %cst_130 = arith.constant dense<0.000000e+00> : vector<16xf32>
    %313 = vector.multi_reduction <add>, %308, %cst_130 [1] : vector<16x32xf32> to vector<16xf32>
    %314 = vector.shape_cast %313 : vector<16xf32> to vector<16x1xf32>
    %cst_131 = arith.constant 3.200000e+01 : f32
    %315 = vector.broadcast %cst_131 : f32 to vector<16x1xf32>
    %316 = arith.divf %314, %315 : vector<16x1xf32>
    %317 = vector.broadcast %316 : vector<16x1xf32> to vector<16x32xf32>
    %318 = arith.subf %308, %317 : vector<16x32xf32>
    %319 = arith.mulf %318, %318 : vector<16x32xf32>
    %cst_132 = arith.constant dense<0.000000e+00> : vector<16xf32>
    %320 = vector.multi_reduction <add>, %319, %cst_132 [1] : vector<16x32xf32> to vector<16xf32>
    %321 = vector.shape_cast %320 : vector<16xf32> to vector<16x1xf32>
    %cst_133 = arith.constant 3.200000e+01 : f32
    %322 = vector.broadcast %cst_133 : f32 to vector<16x1xf32>
    %323 = arith.divf %321, %322 : vector<16x1xf32>
    %324 = vector.broadcast %316 : vector<16x1xf32> to vector<16x32xf32>
    %325 = arith.subf %308, %324 : vector<16x32xf32>
    %cst_134 = arith.constant 9.99999996E-13 : f32
    %326 = vector.broadcast %cst_134 : f32 to vector<16x1xf32>
    %327 = arith.addf %323, %326 : vector<16x1xf32>
    %328 = math.rsqrt %327 : vector<16x1xf32>
    %329 = vector.broadcast %328 : vector<16x1xf32> to vector<16x32xf32>
    %330 = arith.mulf %325, %329 : vector<16x32xf32>
    %331 = vector.broadcast %310 : vector<1x32xf32> to vector<16x32xf32>
    %332 = arith.mulf %330, %331 : vector<16x32xf32>
    %333 = vector.broadcast %312 : vector<1x32xf32> to vector<16x32xf32>
    %334 = arith.addf %332, %333 : vector<16x32xf32>
    %c0_135 = arith.constant 0 : index
    %c0_136 = arith.constant 0 : index
    %335 = vector.load %arg20[%c0_135, %c0_136] : memref<32x128xf32, #tpu.memory_space<vmem>>, vector<32x128xf32>
    %cst_137 = arith.constant dense<0.000000e+00> : vector<16x128xf32>
    %336 = tpu.matmul %334, %335, %cst_137 {dimension_numbers = #tpu.dot_dimension_numbers<[1], [0], [0], [1], [0, 0, 1, 1], [], []>} : vector<16x32xf32>, vector<32x128xf32>, vector<16x128xf32> -> vector<16x128xf32>
    %c0_138 = arith.constant 0 : index
    %c0_139 = arith.constant 0 : index
    %337 = vector.load %arg21[%c0_138, %c0_139] : memref<1x128xf32, #tpu.memory_space<vmem>>, vector<1x128xf32>
    %338 = vector.broadcast %337 : vector<1x128xf32> to vector<16x128xf32>
    %339 = arith.addf %336, %338 : vector<16x128xf32>
    %c0_140 = arith.constant 0 : index
    %c0_141 = arith.constant 0 : index
    %340 = vector.load %arg22[%c0_140, %c0_141] : memref<16x128xf32, #tpu.memory_space<vmem>>, vector<16x128xf32>
    tpu.vector_store %arg22[%c0_140, %c0_141], %339 {strides = array<i32>} : memref<16x128xf32, #tpu.memory_space<vmem>>, vector<16x128xf32>,
    %cst_142 = arith.constant dense<0xFF800000> : vector<16xf32>
    %341 = vector.multi_reduction <maximumf>, %339, %cst_142 [1] : vector<16x128xf32> to vector<16xf32>
    %342 = vector.shape_cast %341 : vector<16xf32> to vector<16x1xf32>
    %343 = vector.broadcast %342 : vector<16x1xf32> to vector<16x128xf32>
    %344 = arith.subf %339, %343 : vector<16x128xf32>
    %345 = math.exp %344 : vector<16x128xf32>
    %cst_143 = arith.constant dense<0.000000e+00> : vector<16xf32>
    %346 = vector.multi_reduction <add>, %345, %cst_143 [1] : vector<16x128xf32> to vector<16xf32>
    %347 = vector.shape_cast %346 : vector<16xf32> to vector<16x1xf32>
    %348 = math.log %347 : vector<16x1xf32>
    %349 = vector.broadcast %348 : vector<16x1xf32> to vector<16x128xf32>
    %350 = arith.subf %344, %349 : vector<16x128xf32>
    %351 = tpu.iota {dimensions = array<i32: 1>} : vector<16x128xi32>
    %c0_144 = arith.constant 0 : index
    %c0_145 = arith.constant 0 : index
    %352 = vector.load %arg3[%c0_144, %c0_145] : memref<16x1xi32, #tpu.memory_space<vmem>>, vector<16x1xi32>
    %353 = vector.broadcast %352 : vector<16x1xi32> to vector<16x128xi32>
    %354 = arith.cmpi eq, %351, %353 : vector<16x128xi32>
    %355 = arith.extui %354 : vector<16x128xi1> to vector<16x128xi32>
    %356 = arith.sitofp %355 : vector<16x128xi32> to vector<16x128xf32>
    %357 = arith.mulf %350, %356 : vector<16x128xf32>
    %cst_146 = arith.constant dense<0.000000e+00> : vector<16xf32>
    %358 = vector.multi_reduction <add>, %357, %cst_146 [1] : vector<16x128xf32> to vector<16xf32>
    %359 = vector.shape_cast %358 : vector<16xf32> to vector<16x1xf32>
    %cst_147 = arith.constant 0.000000e+00 : f32
    %360 = vector.broadcast %cst_147 : f32 to vector<16x1xf32>
    %361 = arith.subf %360, %359 : vector<16x1xf32>
    %c0_148 = arith.constant 0 : index
    %c0_149 = arith.constant 0 : index
    %362 = vector.load %arg4[%c0_148, %c0_149] : memref<16x1xf32, #tpu.memory_space<vmem>>, vector<16x1xf32>
    %363 = arith.mulf %361, %362 : vector<16x1xf32>
    %cst_150 = arith.constant dense<0.000000e+00> : vector<1xf32>
    %364 = vector.multi_reduction <add>, %363, %cst_150 [0] : vector<16x1xf32> to vector<1xf32>
    %365 = vector.shape_cast %364 : vector<1xf32> to vector<1x1xf32>
    %cst_151 = arith.constant dense<0.000000e+00> : vector<1xf32>
    %366 = vector.multi_reduction <add>, %362, %cst_151 [0] : vector<16x1xf32> to vector<1xf32>
    %367 = vector.shape_cast %366 : vector<1xf32> to vector<1x1xf32>
    %cst_152 = arith.constant 1.000000e+00 : f32
    %368 = vector.broadcast %cst_152 : f32 to vector<1x1xf32>
    %369 = arith.maximumf %367, %368 : vector<1x1xf32>
    %370 = tpu.reciprocal %369 {approx = true} : vector<1x1xf32> -> vector<1x1xf32>
    %371 = arith.mulf %365, %370 : vector<1x1xf32>
    %c0_153 = arith.constant 0 : index
    %c0_154 = arith.constant 0 : index
    %372 = vector.load %arg23[%c0_153, %c0_154] : memref<1x1xf32, #tpu.memory_space<vmem>>, vector<1x1xf32>
    tpu.vector_store %arg23[%c0_153, %c0_154], %371 {strides = array<i32>} : memref<1x1xf32, #tpu.memory_space<vmem>>, vector<1x1xf32>,
    return
  }
}

</mosaic_0001>

<llo_original>
// kernel: eq.8
$region0: #{eq.8}
  %s0 = inlined_call_operand.vmem [shape: s32[2,8], index: 0, kind: input, shape index: {}]
  %s1 = inlined_call_operand.vmem [shape: s32[16], index: 1, kind: output, shape index: {}]
  $region1: #{eq.8} parent=0
    #allocation0 [shape = 'u8[4096]{0}', space=vmem, size = 0x1000, scoped, tag = 'scoped mem for output reshape']
    #allocation1 [shape = 'u8[4096]{0}', space=vmem, size = 0x1000, scoped, tag = 'scoped mem for input reshape']
    %s3 = sshll.u32 1, 2
    %s4 = ssub.s32 %s3, 1
    %v5 = vld [vmem:[%s0] sm:%s4]
    %6 = vst [vmem:[#allocation1] sm:%s4] %v5
    %v7 = vld [vmem:[#allocation1] sm:$0x1]
    %vm8 = vcmask 64512
    %9 = vst.msk [vmem:[#allocation0] sm:$0x1] %vm8, %v7
    %s10 = scalar_lea.vmem [#allocation1], 1
    %v11 = vld [vmem:[%s10] sm:$0x1]
    %12 = vrot.lane.b32.xlu0 %v11, 8
    %v13 = vpop.permute.xlu0 %12
    %vm14 = vcmask 130112
    %15 = vst.msk [vmem:[#allocation0] sm:$0x1] %vm14, %v13
    %s17 = sshll.u32 1, 1
    %s18 = ssub.s32 %s17, 1
    %v20 = vld [vmem:[#allocation0] sm:%s18]
    %s21 = sshll.u32 1, 1
    %s22 = ssub.s32 %s21, 1
    %23 = vst [vmem:[%s1] sm:%s22] %v20

// kernel: ner_forward.1
$region0: #{ner_forward.1}
  #allocation0 [shape = 'u32[]', space=smem, size = 0x4, offset = 0x4, fixed_abs, tag = 'smem constant byte address 0x4 - core index']
  #allocation1 [shape = 'u32[144,128]{1,0:T(1,128)}', space=vmem, size = 0x12000, scoped, tag = 'internal scratch']
  %s0 = inlined_call_operand.vmem [shape: s32[16,1], index: 0, kind: input, shape index: {}]
  %s1 = inlined_call_operand.vmem [shape: f32[16,32], index: 1, kind: input, shape index: {}]
  %s2 = inlined_call_operand.vmem [shape: f32[16,16], index: 2, kind: input, shape index: {}]
  %s3 = inlined_call_operand.vmem [shape: s32[16,1], index: 3, kind: input, shape index: {}]
  %s4 = inlined_call_operand.vmem [shape: f32[16,1], index: 4, kind: input, shape index: {}]
  %s5 = inlined_call_operand.vmem [shape: f32[100,32], index: 5, kind: input, shape index: {}]
  %s6 = inlined_call_operand.vmem [shape: f32[1,32], index: 6, kind: input, shape index: {}]
  %s7 = inlined_call_operand.vmem [shape: f32[1,32], index: 7, kind: input, shape index: {}]
  %s8 = inlined_call_operand.vmem [shape: f32[2,32,128], index: 8, kind: input, shape index: {}]
  %s9 = inlined_call_operand.vmem [shape: f32[2,1,128], index: 9, kind: input, shape index: {}]
  %s10 = inlined_call_operand.vmem [shape: f32[2,4,8,32], index: 10, kind: input, shape index: {}]
  %s11 = inlined_call_operand.vmem [shape: f32[2,1,32], index: 11, kind: input, shape index: {}]
  %s12 = inlined_call_operand.vmem [shape: f32[2,1,32], index: 12, kind: input, shape index: {}]
  %s13 = inlined_call_operand.vmem [shape: f32[2,1,32], index: 13, kind: input, shape index: {}]
  %s14 = inlined_call_operand.vmem [shape: f32[2,32,64], index: 14, kind: input, shape index: {}]
  %s15 = inlined_call_operand.vmem [shape: f32[2,1,64], index: 15, kind: input, shape index: {}]
  %s16 = inlined_call_operand.vmem [shape: f32[2,64,32], index: 16, kind: input, shape index: {}]
  %s17 = inlined_call_operand.vmem [shape: f32[2,1,32], index: 17, kind: input, shape index: {}]
  %s18 = inlined_call_operand.vmem [shape: f32[2,1,32], index: 18, kind: input, shape index: {}]
  %s19 = inlined_call_operand.vmem [shape: f32[2,1,32], index: 19, kind: input, shape index: {}]
  %s20 = inlined_call_operand.vmem [shape: f32[32,128], index: 20, kind: input, shape index: {}]
  %s21 = inlined_call_operand.vmem [shape: f32[1,128], index: 21, kind: input, shape index: {}]
  %s22 = inlined_call_operand.vmem [shape: f32[16,128], index: 22, kind: output, shape index: {0}]
  %s23 = inlined_call_operand.hbm [shape: f32[1,1], index: 23, kind: output, shape index: {1}]
  %24 = xla_tuple %s22, %s23
  %s25 = sld [smem:[#allocation0]]
  $region106: #{ner_forward.1} parent=0
    _
  %s27 = ssub.s32 1, %s25
  %s28 = scalar_select 0, %s27, %s25
  $region1: #{ner_forward.1} parent=0
    #allocation2 [shape = 'u8[512]{0}', space=vmem, size = 0x400, scoped, tag = 'output window, operand 1, single buffered']
    #allocation3 [shape = 's32[1]{0}', space=sflag, size = 0x4, scoped, tag = 'scoped memory for ner_forward.1']
    %29 = vsyncpa [#allocation3], 0
    // Predicated region
    $region2: #{ner_forward.1} parent=1 // pred_check
      _
    $region3: #{ner_forward.1} parent=1 // pred_check_branch
      %31 = sbr.rel (0) target = $region5
    $region4: #{ner_forward.1} parent=1 // pred_region
      _
    $region5: #{ner_forward.1} parent=1 // pred_fallthru
      _
    // Predicated region
    $region6: #{ner_forward.1} parent=1 // pred_check
      _
    $region7: #{ner_forward.1} parent=1 // pred_check_branch
      %33 = sbr.rel (0) target = $region9
    $region8: #{ner_forward.1} parent=1 // pred_region
      _
    $region9: #{ner_forward.1} parent=1 // pred_fallthru
      _
    // Predicated region
    $region10: #{ner_forward.1} parent=1 // pred_check
      _
    $region11: #{ner_forward.1} parent=1 // pred_check_branch
      %35 = sbr.rel (0) target = $region13
    $region12: #{ner_forward.1} parent=1 // pred_region
      _
    $region13: #{ner_forward.1} parent=1 // pred_fallthru
      _
    // Predicated region
    $region14: #{ner_forward.1} parent=1 // pred_check
      _
    $region15: #{ner_forward.1} parent=1 // pred_check_branch
      %37 = sbr.rel (0) target = $region17
    $region16: #{ner_forward.1} parent=1 // pred_region
      _
    $region17: #{ner_forward.1} parent=1 // pred_fallthru
      _
    // Predicated region
    $region18: #{ner_forward.1} parent=1 // pred_check
      _
    $region19: #{ner_forward.1} parent=1 // pred_check_branch
      %39 = sbr.rel (0) target = $region21
    $region20: #{ner_forward.1} parent=1 // pred_region
      _
    $region21: #{ner_forward.1} parent=1 // pred_fallthru
      _
    // Predicated region
    $region22: #{ner_forward.1} parent=1 // pred_check
      _
    $region23: #{ner_forward.1} parent=1 // pred_check_branch
      %41 = sbr.rel (0) target = $region25
    $region24: #{ner_forward.1} parent=1 // pred_region
      _
    $region25: #{ner_forward.1} parent=1 // pred_fallthru
      _
    // Predicated region
    $region26: #{ner_forward.1} parent=1 // pred_check
      _
    $region27: #{ner_forward.1} parent=1 // pred_check_branch
      %43 = sbr.rel (0) target = $region29
    $region28: #{ner_forward.1} parent=1 // pred_region
      _
    $region29: #{ner_forward.1} parent=1 // pred_fallthru
      _
    // Predicated region
    $region30: #{ner_forward.1} parent=1 // pred_check
      _
    $region31: #{ner_forward.1} parent=1 // pred_check_branch
      %45 = sbr.rel (0) target = $region33
    $region32: #{ner_forward.1} parent=1 // pred_region
      _
    $region33: #{ner_forward.1} parent=1 // pred_fallthru
      _
    // Predicated region
    $region34: #{ner_forward.1} parent=1 // pred_check
      _
    $region35: #{ner_forward.1} parent=1 // pred_check_branch
      %47 = sbr.rel (0) target = $region37
    $region36: #{ner_forward.1} parent=1 // pred_region
      _
    $region37: #{ner_forward.1} parent=1 // pred_fallthru
      _
    // Predicated region
    $region38: #{ner_forward.1} parent=1 // pred_check
      _
    $region39: #{ner_forward.1} parent=1 // pred_check_branch
      %49 = sbr.rel (0) target = $region41
    $region40: #{ner_forward.1} parent=1 // pred_region
      _
    $region41: #{ner_forward.1} parent=1 // pred_fallthru
      _
    // Predicated region
    $region42: #{ner_forward.1} parent=1 // pred_check
      _
    $region43: #{ner_forward.1} parent=1 // pred_check_branch
      %51 = sbr.rel (0) target = $region45
    $region44: #{ner_forward.1} parent=1 // pred_region
      _
    $region45: #{ner_forward.1} parent=1 // pred_fallthru
      _
    // Predicated region
    $region46: #{ner_forward.1} parent=1 // pred_check
      _
    $region47: #{ner_forward.1} parent=1 // pred_check_branch
      %53 = sbr.rel (0) target = $region49
    $region48: #{ner_forward.1} parent=1 // pred_region
      _
    $region49: #{ner_forward.1} parent=1 // pred_fallthru
      _
    // Predicated region
    $region50: #{ner_forward.1} parent=1 // pred_check
      _
    $region51: #{ner_forward.1} parent=1 // pred_check_branch
      %55 = sbr.rel (0) target = $region53
    $region52: #{ner_forward.1} parent=1 // pred_region
      _
    $region53: #{ner_forward.1} parent=1 // pred_fallthru
      _
    // Predicated region
    $region54: #{ner_forward.1} parent=1 // pred_check
      _
    $region55: #{ner_forward.1} parent=1 // pred_check_branch
      %57 = sbr.rel (0) target = $region57
    $region56: #{ner_forward.1} parent=1 // pred_region
      _
    $region57: #{ner_forward.1} parent=1 // pred_fallthru
      _
    // Predicated region
    $region58: #{ner_forward.1} parent=1 // pred_check
      _
    $region59: #{ner_forward.1} parent=1 // pred_check_branch
      %59 = sbr.rel (0) target = $region61
    $region60: #{ner_forward.1} parent=1 // pred_region
      _
    $region61: #{ner_forward.1} parent=1 // pred_fallthru
      _
    // Predicated region
    $region62: #{ner_forward.1} parent=1 // pred_check
      _
    $region63: #{ner_forward.1} parent=1 // pred_check_branch
      %61 = sbr.rel (0) target = $region65
    $region64: #{ner_forward.1} parent=1 // pred_region
      _
    $region65: #{ner_forward.1} parent=1 // pred_fallthru
      _
    // Predicated region
    $region66: #{ner_forward.1} parent=1 // pred_check
      _
    $region67: #{ner_forward.1} parent=1 // pred_check_branch
      %63 = sbr.rel (0) target = $region69
    $region68: #{ner_forward.1} parent=1 // pred_region
      _
    $region69: #{ner_forward.1} parent=1 // pred_fallthru
      _
    // Predicated region
    $region70: #{ner_forward.1} parent=1 // pred_check
      _
    $region71: #{ner_forward.1} parent=1 // pred_check_branch
      %65 = sbr.rel (0) target = $region73
    $region72: #{ner_forward.1} parent=1 // pred_region
      _
    $region73: #{ner_forward.1} parent=1 // pred_fallthru
      _
    // Predicated region
    $region74: #{ner_forward.1} parent=1 // pred_check
      _
    $region75: #{ner_forward.1} parent=1 // pred_check_branch
      %67 = sbr.rel (0) target = $region77
    $region76: #{ner_forward.1} parent=1 // pred_region
      _
    $region77: #{ner_forward.1} parent=1 // pred_fallthru
      _
    // Predicated region
    $region78: #{ner_forward.1} parent=1 // pred_check
      _
    $region79: #{ner_forward.1} parent=1 // pred_check_branch
      %69 = sbr.rel (0) target = $region81
    $region80: #{ner_forward.1} parent=1 // pred_region
      _
    $region81: #{ner_forward.1} parent=1 // pred_fallthru
      _
    // Predicated region
    $region82: #{ner_forward.1} parent=1 // pred_check
      _
    $region83: #{ner_forward.1} parent=1 // pred_check_branch
      %71 = sbr.rel (0) target = $region85
    $region84: #{ner_forward.1} parent=1 // pred_region
      _
    $region85: #{ner_forward.1} parent=1 // pred_fallthru
      _
    // Predicated region
    $region86: #{ner_forward.1} parent=1 // pred_check
      _
    $region87: #{ner_forward.1} parent=1 // pred_check_branch
      %73 = sbr.rel (0) target = $region89
    $region88: #{ner_forward.1} parent=1 // pred_region
      _
    $region89: #{ner_forward.1} parent=1 // pred_fallthru
      _
    %v74 = vld [vmem:[%s0] sm:$0xff]
    %v75 = vld [vmem:[%s0 + $0x8] sm:$0xff]
    %v76 = vlaneseq
    %v77 = vand.u32 %v76, 127
    %78 = vset.pattern.permute.xlu0 0
    %79 = vperm.xlu0 %78, %v74
    %v80 = vpop.permute.xlu0 %79
    %81 = vset.pattern.permute.xlu0 0
    %82 = vperm.xlu0 %81, %v75
    %v83 = vpop.permute.xlu0 %82
    %vm84 = vcmp.eq.s32.totalorder %v77, %v80
    %vm85 = vcmp.eq.s32.totalorder %v77, %v83
    %v86 = vsel %vm84, 1, 0
    %v87 = vsel %vm85, 1, 0
    %v88 = vcvt.s32.f32 %v86
    %v89 = vcvt.s32.f32 %v87
    %v90 = vld [vmem:[%s5] sm:$0xff]
    %v91 = vld [vmem:[%s5 + $0x8] sm:$0xff]
    %v92 = vld [vmem:[%s5 + $0x10] sm:$0xff]
    %v93 = vld [vmem:[%s5 + $0x18] sm:$0xff]
    %v94 = vld [vmem:[%s5 + $0x20] sm:$0xff]
    %v95 = vld [vmem:[%s5 + $0x28] sm:$0xff]
    %v96 = vld [vmem:[%s5 + $0x30] sm:$0xff]
    %v97 = vld [vmem:[%s5 + $0x38] sm:$0xff]
    %v98 = vld [vmem:[%s5 + $0x40] sm:$0xff]
    %v99 = vld [vmem:[%s5 + $0x48] sm:$0xff]
    %v100 = vld [vmem:[%s5 + $0x50] sm:$0xff]
    %v101 = vld [vmem:[%s5 + $0x58] sm:$0xff]
    %v102 = vld [vmem:[%s5 + $0x60] sm:$0xf]
    %v103 = vld [vmem:[%s1] sm:$0xff]
    %v104 = vld [vmem:[%s1 + $0x8] sm:$0xff]
    %vm105 = vcmask 818176
    %v107 = vsel %vm105, %v88, 0
    %v110 = vsel %vm105, %v89, 0
    %vm112 = vcmask 1043456
    %v114 = vsel %vm112, %v102, 0
    %116 = vmatprep.subr.mxu0 0.0
    %117 = vmatpush1.msra.mxu0 0.0
    %118 = vmatprep.subr.mxu0 0.0
    %119 = vmatpush1.msra.mxu0 0.0
    %120 = vmatprep.subr.mxu0 0.0
    %121 = vmatpush1.msra.mxu0 0.0
    %122 = vmatprep.subr.mxu0 0.0
    %123 = vmatpush1.msra.mxu0 %v114
    %124 = vmatprep.subr.mxu0 0.0
    %125 = vmatpush1.msra.mxu0 %v101
    %126 = vmatprep.subr.mxu0 0.0
    %127 = vmatpush1.msra.mxu0 %v100
    %128 = vmatprep.subr.mxu0 0.0
    %129 = vmatpush1.msra.mxu0 %v99
    %130 = vmatprep.subr.mxu0 0.0
    %131 = vmatpush1.msra.mxu0 %v98
    %132 = vmatprep.subr.mxu0 0.0
    %133 = vmatpush1.msra.mxu0 %v97
    %134 = vmatprep.subr.mxu0 0.0
    %135 = vmatpush1.msra.mxu0 %v96
    %136 = vmatprep.subr.mxu0 0.0
    %137 = vmatpush1.msra.mxu0 %v95
    %138 = vmatprep.subr.mxu0 0.0
    %139 = vmatpush1.msra.mxu0 %v94
    %140 = vmatprep.subr.mxu0 0.0
    %141 = vmatpush1.msra.mxu0 %v93
    %142 = vmatprep.subr.mxu0 0.0
    %143 = vmatpush1.msra.mxu0 %v92
    %144 = vmatprep.subr.mxu0 0.0
    %145 = vmatpush1.msra.mxu0 %v91
    %146 = vmatprep.subr.mxu0 0.0
    %147 = vmatpush1.msra.mxu0 %v90
    %148 = vmatprep.subr.mxu0 0.0
    %149 = vmatpush2.msra.mxu0 0.0
    %150 = vmatprep.subr.mxu0 0.0
    %151 = vmatpush2.msra.mxu0 0.0
    %152 = vmatprep.subr.mxu0 0.0
    %153 = vmatpush2.msra.mxu0 0.0
    %154 = vmatprep.subr.mxu0 0.0
    %155 = vmatpush2.msra.mxu0 0.0
    %156 = vmatprep.subr.mxu0 0.0
    %157 = vmatpush2.msra.mxu0 0.0
    %158 = vmatprep.subr.mxu0 0.0
    %159 = vmatpush2.msra.mxu0 0.0
    %160 = vmatprep.subr.mxu0 0.0
    %161 = vmatpush2.msra.mxu0 0.0
    %162 = vmatprep.subr.mxu0 0.0
    %163 = vmatpush2.msra.mxu0 0.0
    %164 = vmatprep.subr.mxu0 0.0
    %165 = vmatpush2.msra.mxu0 0.0
    %166 = vmatprep.subr.mxu0 0.0
    %167 = vmatpush2.msra.mxu0 0.0
    %168 = vmatprep.subr.mxu0 0.0
    %169 = vmatpush2.msra.mxu0 0.0
    %170 = vmatprep.subr.mxu0 0.0
    %171 = vmatpush2.msra.mxu0 0.0
    %172 = vmatprep.subr.mxu0 0.0
    %173 = vmatpush2.msra.mxu0 0.0
    %174 = vmatprep.subr.mxu0 0.0
    %175 = vmatpush2.msra.mxu0 0.0
    %176 = vmatprep.subr.mxu0 0.0
    %177 = vmatpush2.msra.mxu0 0.0
    %178 = vmatprep.subr.mxu0 0.0
    %179 = vmatpush2.msra.mxu0 0.0
    %180 = vmatprep.mubr.f32.mxu0 0.0
    %181 = vmatmul.mubr.f32.gmra.mxu0 %v107
    %v182 = vpop.f32.mrf.mxu0
    %v183 = vadd.f32 %v103, %v182
    %v184 = vpop.f32.mrf.mxu0
    %185 = vmatprep.mubr.f32.mxu0 0.0
    %186 = vmatmul.mubr.f32.gmra.mxu0 %v110
    %v187 = vpop.f32.mrf.mxu0
    %v188 = vadd.f32 %v104, %v187
    %v189 = vpop.f32.mrf.mxu0
    %190 = vdwg.mxu0
    %v191 = vld [vmem:[%s6] sm:$0x1]
    %v192 = vld [vmem:[%s7] sm:$0x1]
    %vm193 = vcmask 261120
    %v194 = vsel %vm193, %v183, 0.0
    %195 = vadd.xlane.f32.xlu0 %v194
    %v196 = vpop.xlane.xlu0 %195
    %v197 = vsel %vm193, %v188, 0.0
    %198 = vadd.xlane.f32.xlu0 %v197
    %v199 = vpop.xlane.xlu0 %198
    %v200 = vrcp.pop 32.0
    %v201 = vmul.f32 %v196, %v200
    %v202 = vmul.f32 %v199, %v200
    %v203 = vsub.f32 %v183, %v201
    %v204 = vsub.f32 %v188, %v202
    %v205 = vmul.f32 %v203, %v203
    %v206 = vmul.f32 %v204, %v204
    %v207 = vsel %vm193, %v205, 0.0
    %208 = vadd.xlane.f32.xlu0 %v207
    %v209 = vpop.xlane.xlu0 %208
    %v210 = vsel %vm193, %v206, 0.0
    %211 = vadd.xlane.f32.xlu0 %v210
    %v212 = vpop.xlane.xlu0 %211
    %v213 = vmul.f32 %v209, %v200
    %v214 = vmul.f32 %v212, %v200
    %v215 = vadd.f32 %v213, 1e-12
    %v216 = vadd.f32 %v214, 1e-12
    %v217 = vrsqrt.pop %v215
    %v218 = vrsqrt.pop %v216
    %v219 = vmul.f32 %v203, %v217
    %v220 = vmul.f32 %v204, %v218
    %v222 = vlaneseq
    %v223 = vshrl.u32 %v222, 7
    %v224 = vsub.s32 0, %v223
    %v225 = vrot.slane %v191, %v224
    %v227 = vmul.f32 %v219, %v225
    %v228 = vmul.f32 %v220, %v225
    %v230 = vlaneseq
    %v231 = vshrl.u32 %v230, 7
    %v232 = vsub.s32 0, %v231
    %v233 = vrot.slane %v192, %v232
    %v235 = vadd.f32 %v227, %v233
    %v236 = vadd.f32 %v228, %v233
    %v237 = vld [vmem:[%s2] sm:$0xff]
    %v238 = vld [vmem:[%s2 + $0x8] sm:$0xff]
    %v239 = vld [vmem:[%s8] sm:$0xff]
    %v240 = vld [vmem:[%s8 + $0x8] sm:$0xff]
    %v241 = vld [vmem:[%s8 + $0x10] sm:$0xff]
    %v242 = vld [vmem:[%s8 + $0x18] sm:$0xff]
    %v243 = vld [vmem:[%s9] sm:$0x1]
    %v245 = vlaneseq
    %v246 = vshrl.u32 %v245, 7
    %v247 = vsub.s32 0, %v246
    %v248 = vrot.slane %v243, %v247
    %v251 = vsel %vm193, %v235, 0
    %v254 = vsel %vm193, %v236, 0
    %256 = vmatprep.subr.mxu0 0.0
    %257 = vmatpush1.msra.mxu0 0.0
    %258 = vmatprep.subr.mxu0 0.0
    %259 = vmatpush1.msra.mxu0 0.0
    %260 = vmatprep.subr.mxu0 0.0
    %261 = vmatpush1.msra.mxu0 0.0
    %262 = vmatprep.subr.mxu0 0.0
    %263 = vmatpush1.msra.mxu0 0.0
    %264 = vmatprep.subr.mxu0 0.0
    %265 = vmatpush1.msra.mxu0 0.0
    %266 = vmatprep.subr.mxu0 0.0
    %267 = vmatpush1.msra.mxu0 0.0
    %268 = vmatprep.subr.mxu0 0.0
    %269 = vmatpush1.msra.mxu0 0.0
    %270 = vmatprep.subr.mxu0 0.0
    %271 = vmatpush1.msra.mxu0 0.0
    %272 = vmatprep.subr.mxu0 0.0
    %273 = vmatpush1.msra.mxu0 0.0
    %274 = vmatprep.subr.mxu0 0.0
    %275 = vmatpush1.msra.mxu0 0.0
    %276 = vmatprep.subr.mxu0 0.0
    %277 = vmatpush1.msra.mxu0 0.0
    %278 = vmatprep.subr.mxu0 0.0
    %279 = vmatpush1.msra.mxu0 0.0
    %280 = vmatprep.subr.mxu0 0.0
    %281 = vmatpush1.msra.mxu0 %v242
    %282 = vmatprep.subr.mxu0 0.0
    %283 = vmatpush1.msra.mxu0 %v241
    %284 = vmatprep.subr.mxu0 0.0
    %285 = vmatpush1.msra.mxu0 %v240
    %286 = vmatprep.subr.mxu0 0.0
    %287 = vmatpush1.msra.mxu0 %v239
    %288 = vmatprep.subr.mxu0 0.0
    %289 = vmatpush2.msra.mxu0 0.0
    %290 = vmatprep.subr.mxu0 0.0
    %291 = vmatpush2.msra.mxu0 0.0
    %292 = vmatprep.subr.mxu0 0.0
    %293 = vmatpush2.msra.mxu0 0.0
    %294 = vmatprep.subr.mxu0 0.0
    %295 = vmatpush2.msra.mxu0 0.0
    %296 = vmatprep.subr.mxu0 0.0
    %297 = vmatpush2.msra.mxu0 0.0
    %298 = vmatprep.subr.mxu0 0.0
    %299 = vmatpush2.msra.mxu0 0.0
    %300 = vmatprep.subr.mxu0 0.0
    %301 = vmatpush2.msra.mxu0 0.0
    %302 = vmatprep.subr.mxu0 0.0
    %303 = vmatpush2.msra.mxu0 0.0
    %304 = vmatprep.subr.mxu0 0.0
    %305 = vmatpush2.msra.mxu0 0.0
    %306 = vmatprep.subr.mxu0 0.0
    %307 = vmatpush2.msra.mxu0 0.0
    %308 = vmatprep.subr.mxu0 0.0
    %309 = vmatpush2.msra.mxu0 0.0
    %310 = vmatprep.subr.mxu0 0.0
    %311 = vmatpush2.msra.mxu0 0.0
    %312 = vmatprep.subr.mxu0 0.0
    %313 = vmatpush2.msra.mxu0 0.0
    %314 = vmatprep.subr.mxu0 0.0
    %315 = vmatpush2.msra.mxu0 0.0
    %316 = vmatprep.subr.mxu0 0.0
    %317 = vmatpush2.msra.mxu0 0.0
    %318 = vmatprep.subr.mxu0 0.0
    %319 = vmatpush2.msra.mxu0 0.0
    %320 = vmatprep.mubr.f32.mxu0 0.0
    %321 = vmatmul.mubr.f32.gmra.mxu0 %v251
    %v322 = vpop.f32.mrf.mxu0
    %v323 = vadd.f32 %v248, %v322
    %v324 = vpop.f32.mrf.mxu0
    %325 = vmatprep.mubr.f32.mxu0 0.0
    %326 = vmatmul.mubr.f32.gmra.mxu0 %v254
    %v327 = vpop.f32.mrf.mxu0
    %v328 = vadd.f32 %v248, %v327
    %v329 = vpop.f32.mrf.mxu0
    %330 = vdwg.mxu0
    %333 = vrot.lane.b32.xlu0 %v323, 120
    %v334 = vpop.permute.xlu0 %333
    %335 = vrot.lane.b32.xlu0 %v328, 120
    %v336 = vpop.permute.xlu0 %335
    %337 = vrot.lane.b32.xlu0 %v323, 112
    %v338 = vpop.permute.xlu0 %337
    %339 = vrot.lane.b32.xlu0 %v328, 112
    %v340 = vpop.permute.xlu0 %339
    %341 = vrot.lane.b32.xlu0 %v323, 104
    %v342 = vpop.permute.xlu0 %341
    %343 = vrot.lane.b32.xlu0 %v328, 104
    %v344 = vpop.permute.xlu0 %343
    %345 = vrot.lane.b32.xlu0 %v323, 96
    %v346 = vpop.permute.xlu0 %345
    %347 = vrot.lane.b32.xlu0 %v328, 96
    %v348 = vpop.permute.xlu0 %347
    %vm349 = vcmask 64512
    %v350 = vsel %vm349, %v323, 0
    %v352 = vsel %vm349, %v328, 0
    %v354 = vsel %vm349, %v346, 0
    %v356 = vsel %vm349, %v348, 0
    %358 = vmatprep.subr.mxu0 0.0
    %359 = vmatpush1.xpose.msra.mxu0 0.0
    %360 = vmatprep.subr.mxu0 0.0
    %361 = vmatpush1.xpose.msra.mxu0 0.0
    %362 = vmatprep.subr.mxu0 0.0
    %363 = vmatpush1.xpose.msra.mxu0 0.0
    %364 = vmatprep.subr.mxu0 0.0
    %365 = vmatpush1.xpose.msra.mxu0 0.0
    %366 = vmatprep.subr.mxu0 0.0
    %367 = vmatpush1.xpose.msra.mxu0 0.0
    %368 = vmatprep.subr.mxu0 0.0
    %369 = vmatpush1.xpose.msra.mxu0 0.0
    %370 = vmatprep.subr.mxu0 0.0
    %371 = vmatpush1.xpose.msra.mxu0 0.0
    %372 = vmatprep.subr.mxu0 0.0
    %373 = vmatpush1.xpose.msra.mxu0 0.0
    %374 = vmatprep.subr.mxu0 0.0
    %375 = vmatpush1.xpose.msra.mxu0 0.0
    %376 = vmatprep.subr.mxu0 0.0
    %377 = vmatpush1.xpose.msra.mxu0 0.0
    %378 = vmatprep.subr.mxu0 0.0
    %379 = vmatpush1.xpose.msra.mxu0 0.0
    %380 = vmatprep.subr.mxu0 0.0
    %381 = vmatpush1.xpose.msra.mxu0 0.0
    %382 = vmatprep.subr.mxu0 0.0
    %383 = vmatpush1.xpose.msra.mxu0 0.0
    %384 = vmatprep.subr.mxu0 0.0
    %385 = vmatpush1.xpose.msra.mxu0 0.0
    %386 = vmatprep.subr.mxu0 0.0
    %387 = vmatpush1.xpose.msra.mxu0 %v356
    %388 = vmatprep.subr.mxu0 0.0
    %389 = vmatpush1.xpose.msra.mxu0 %v354
    %390 = vmatprep.subr.mxu0 0.0
    %391 = vmatpush2.xpose.msra.mxu0 0.0
    %392 = vmatprep.subr.mxu0 0.0
    %393 = vmatpush2.xpose.msra.mxu0 0.0
    %394 = vmatprep.subr.mxu0 0.0
    %395 = vmatpush2.xpose.msra.mxu0 0.0
    %396 = vmatprep.subr.mxu0 0.0
    %397 = vmatpush2.xpose.msra.mxu0 0.0
    %398 = vmatprep.subr.mxu0 0.0
    %399 = vmatpush2.xpose.msra.mxu0 0.0
    %400 = vmatprep.subr.mxu0 0.0
    %401 = vmatpush2.xpose.msra.mxu0 0.0
    %402 = vmatprep.subr.mxu0 0.0
    %403 = vmatpush2.xpose.msra.mxu0 0.0
    %404 = vmatprep.subr.mxu0 0.0
    %405 = vmatpush2.xpose.msra.mxu0 0.0
    %406 = vmatprep.subr.mxu0 0.0
    %407 = vmatpush2.xpose.msra.mxu0 0.0
    %408 = vmatprep.subr.mxu0 0.0
    %409 = vmatpush2.xpose.msra.mxu0 0.0
    %410 = vmatprep.subr.mxu0 0.0
    %411 = vmatpush2.xpose.msra.mxu0 0.0
    %412 = vmatprep.subr.mxu0 0.0
    %413 = vmatpush2.xpose.msra.mxu0 0.0
    %414 = vmatprep.subr.mxu0 0.0
    %415 = vmatpush2.xpose.msra.mxu0 0.0
    %416 = vmatprep.subr.mxu0 0.0
    %417 = vmatpush2.xpose.msra.mxu0 0.0
    %418 = vmatprep.subr.mxu0 0.0
    %419 = vmatpush2.xpose.msra.mxu0 0.0
    %420 = vmatprep.subr.mxu0 0.0
    %421 = vmatpush2.xpose.msra.mxu0 0.0
    %422 = vmatprep.mubr.f32.mxu0 0.0
    %423 = vmatmul.mubr.f32.gmra.mxu0 %v350
    %v424 = vpop.f32.mrf.mxu0
    %v425 = vadd.f32 0.0, %v424
    %v426 = vpop.f32.mrf.mxu0
    %427 = vmatprep.mubr.f32.mxu0 0.0
    %428 = vmatmul.mubr.f32.gmra.mxu0 %v352
    %v429 = vpop.f32.mrf.mxu0
    %v430 = vadd.f32 0.0, %v429
    %v431 = vpop.f32.mrf.mxu0
    %432 = vdwg.mxu0
    %433 = vrot.lane.b32.xlu0 %v334, 96
    %v434 = vpop.permute.xlu0 %433
    %435 = vrot.lane.b32.xlu0 %v336, 96
    %v436 = vpop.permute.xlu0 %435
    %v437 = vsel %vm349, %v334, 0
    %v439 = vsel %vm349, %v336, 0
    %v441 = vsel %vm349, %v434, 0
    %v443 = vsel %vm349, %v436, 0
    %445 = vmatprep.subr.mxu0 0.0
    %446 = vmatpush1.xpose.msra.mxu0 0.0
    %447 = vmatprep.subr.mxu0 0.0
    %448 = vmatpush1.xpose.msra.mxu0 0.0
    %449 = vmatprep.subr.mxu0 0.0
    %450 = vmatpush1.xpose.msra.mxu0 0.0
    %451 = vmatprep.subr.mxu0 0.0
    %452 = vmatpush1.xpose.msra.mxu0 0.0
    %453 = vmatprep.subr.mxu0 0.0
    %454 = vmatpush1.xpose.msra.mxu0 0.0
    %455 = vmatprep.subr.mxu0 0.0
    %456 = vmatpush1.xpose.msra.mxu0 0.0
    %457 = vmatprep.subr.mxu0 0.0
    %458 = vmatpush1.xpose.msra.mxu0 0.0
    %459 = vmatprep.subr.mxu0 0.0
    %460 = vmatpush1.xpose.msra.mxu0 0.0
    %461 = vmatprep.subr.mxu0 0.0
    %462 = vmatpush1.xpose.msra.mxu0 0.0
    %463 = vmatprep.subr.mxu0 0.0
    %464 = vmatpush1.xpose.msra.mxu0 0.0
    %465 = vmatprep.subr.mxu0 0.0
    %466 = vmatpush1.xpose.msra.mxu0 0.0
    %467 = vmatprep.subr.mxu0 0.0
    %468 = vmatpush1.xpose.msra.mxu0 0.0
    %469 = vmatprep.subr.mxu0 0.0
    %470 = vmatpush1.xpose.msra.mxu0 0.0
    %471 = vmatprep.subr.mxu0 0.0
    %472 = vmatpush1.xpose.msra.mxu0 0.0
    %473 = vmatprep.subr.mxu0 0.0
    %474 = vmatpush1.xpose.msra.mxu0 %v443
    %475 = vmatprep.subr.mxu0 0.0
    %476 = vmatpush1.xpose.msra.mxu0 %v441
    %477 = vmatprep.subr.mxu0 0.0
    %478 = vmatpush2.xpose.msra.mxu0 0.0
    %479 = vmatprep.subr.mxu0 0.0
    %480 = vmatpush2.xpose.msra.mxu0 0.0
    %481 = vmatprep.subr.mxu0 0.0
    %482 = vmatpush2.xpose.msra.mxu0 0.0
    %483 = vmatprep.subr.mxu0 0.0
    %484 = vmatpush2.xpose.msra.mxu0 0.0
    %485 = vmatprep.subr.mxu0 0.0
    %486 = vmatpush2.xpose.msra.mxu0 0.0
    %487 = vmatprep.subr.mxu0 0.0
    %488 = vmatpush2.xpose.msra.mxu0 0.0
    %489 = vmatprep.subr.mxu0 0.0
    %490 = vmatpush2.xpose.msra.mxu0 0.0
    %491 = vmatprep.subr.mxu0 0.0
    %492 = vmatpush2.xpose.msra.mxu0 0.0
    %493 = vmatprep.subr.mxu0 0.0
    %494 = vmatpush2.xpose.msra.mxu0 0.0
    %495 = vmatprep.subr.mxu0 0.0
    %496 = vmatpush2.xpose.msra.mxu0 0.0
    %497 = vmatprep.subr.mxu0 0.0
    %498 = vmatpush2.xpose.msra.mxu0 0.0
    %499 = vmatprep.subr.mxu0 0.0
    %500 = vmatpush2.xpose.msra.mxu0 0.0
    %501 = vmatprep.subr.mxu0 0.0
    %502 = vmatpush2.xpose.msra.mxu0 0.0
    %503 = vmatprep.subr.mxu0 0.0
    %504 = vmatpush2.xpose.msra.mxu0 0.0
    %505 = vmatprep.subr.mxu0 0.0
    %506 = vmatpush2.xpose.msra.mxu0 0.0
    %507 = vmatprep.subr.mxu0 0.0
    %508 = vmatpush2.xpose.msra.mxu0 0.0
    %509 = vmatprep.mubr.f32.mxu0 0.0
    %510 = vmatmul.mubr.f32.gmra.mxu0 %v437
    %v511 = vpop.f32.mrf.mxu0
    %v512 = vadd.f32 0.0, %v511
    %v513 = vpop.f32.mrf.mxu0
    %514 = vmatprep.mubr.f32.mxu0 0.0
    %515 = vmatmul.mubr.f32.gmra.mxu0 %v439
    %v516 = vpop.f32.mrf.mxu0
    %v517 = vadd.f32 0.0, %v516
    %v518 = vpop.f32.mrf.mxu0
    %519 = vdwg.mxu0
    %520 = vrot.lane.b32.xlu0 %v338, 96
    %v521 = vpop.permute.xlu0 %520
    %522 = vrot.lane.b32.xlu0 %v340, 96
    %v523 = vpop.permute.xlu0 %522
    %v524 = vsel %vm349, %v338, 0
    %v526 = vsel %vm349, %v340, 0
    %v528 = vsel %vm349, %v521, 0
    %v530 = vsel %vm349, %v523, 0
    %532 = vmatprep.subr.mxu0 0.0
    %533 = vmatpush1.xpose.msra.mxu0 0.0
    %534 = vmatprep.subr.mxu0 0.0
    %535 = vmatpush1.xpose.msra.mxu0 0.0
    %536 = vmatprep.subr.mxu0 0.0
    %537 = vmatpush1.xpose.msra.mxu0 0.0
    %538 = vmatprep.subr.mxu0 0.0
    %539 = vmatpush1.xpose.msra.mxu0 0.0
    %540 = vmatprep.subr.mxu0 0.0
    %541 = vmatpush1.xpose.msra.mxu0 0.0
    %542 = vmatprep.subr.mxu0 0.0
    %543 = vmatpush1.xpose.msra.mxu0 0.0
    %544 = vmatprep.subr.mxu0 0.0
    %545 = vmatpush1.xpose.msra.mxu0 0.0
    %546 = vmatprep.subr.mxu0 0.0
    %547 = vmatpush1.xpose.msra.mxu0 0.0
    %548 = vmatprep.subr.mxu0 0.0
    %549 = vmatpush1.xpose.msra.mxu0 0.0
    %550 = vmatprep.subr.mxu0 0.0
    %551 = vmatpush1.xpose.msra.mxu0 0.0
    %552 = vmatprep.subr.mxu0 0.0
    %553 = vmatpush1.xpose.msra.mxu0 0.0
    %554 = vmatprep.subr.mxu0 0.0
    %555 = vmatpush1.xpose.msra.mxu0 0.0
    %556 = vmatprep.subr.mxu0 0.0
    %557 = vmatpush1.xpose.msra.mxu0 0.0
    %558 = vmatprep.subr.mxu0 0.0
    %559 = vmatpush1.xpose.msra.mxu0 0.0
    %560 = vmatprep.subr.mxu0 0.0
    %561 = vmatpush1.xpose.msra.mxu0 %v530
    %562 = vmatprep.subr.mxu0 0.0
    %563 = vmatpush1.xpose.msra.mxu0 %v528
    %564 = vmatprep.subr.mxu0 0.0
    %565 = vmatpush2.xpose.msra.mxu0 0.0
    %566 = vmatprep.subr.mxu0 0.0
    %567 = vmatpush2.xpose.msra.mxu0 0.0
    %568 = vmatprep.subr.mxu0 0.0
    %569 = vmatpush2.xpose.msra.mxu0 0.0
    %570 = vmatprep.subr.mxu0 0.0
    %571 = vmatpush2.xpose.msra.mxu0 0.0
    %572 = vmatprep.subr.mxu0 0.0
    %573 = vmatpush2.xpose.msra.mxu0 0.0
    %574 = vmatprep.subr.mxu0 0.0
    %575 = vmatpush2.xpose.msra.mxu0 0.0
    %576 = vmatprep.subr.mxu0 0.0
    %577 = vmatpush2.xpose.msra.mxu0 0.0
    %578 = vmatprep.subr.mxu0 0.0
    %579 = vmatpush2.xpose.msra.mxu0 0.0
    %580 = vmatprep.subr.mxu0 0.0
    %581 = vmatpush2.xpose.msra.mxu0 0.0
    %582 = vmatprep.subr.mxu0 0.0
    %583 = vmatpush2.xpose.msra.mxu0 0.0
    %584 = vmatprep.subr.mxu0 0.0
    %585 = vmatpush2.xpose.msra.mxu0 0.0
    %586 = vmatprep.subr.mxu0 0.0
    %587 = vmatpush2.xpose.msra.mxu0 0.0
    %588 = vmatprep.subr.mxu0 0.0
    %589 = vmatpush2.xpose.msra.mxu0 0.0
    %590 = vmatprep.subr.mxu0 0.0
    %591 = vmatpush2.xpose.msra.mxu0 0.0
    %592 = vmatprep.subr.mxu0 0.0
    %593 = vmatpush2.xpose.msra.mxu0 0.0
    %594 = vmatprep.subr.mxu0 0.0
    %595 = vmatpush2.xpose.msra.mxu0 0.0
    %596 = vmatprep.mubr.f32.mxu0 0.0
    %597 = vmatmul.mubr.f32.gmra.mxu0 %v524
    %v598 = vpop.f32.mrf.mxu0
    %v599 = vadd.f32 0.0, %v598
    %v600 = vpop.f32.mrf.mxu0
    %601 = vmatprep.mubr.f32.mxu0 0.0
    %602 = vmatmul.mubr.f32.gmra.mxu0 %v526
    %v603 = vpop.f32.mrf.mxu0
    %v604 = vadd.f32 0.0, %v603
    %v605 = vpop.f32.mrf.mxu0
    %606 = vdwg.mxu0
    %607 = vrot.lane.b32.xlu0 %v342, 96
    %v608 = vpop.permute.xlu0 %607
    %609 = vrot.lane.b32.xlu0 %v344, 96
    %v610 = vpop.permute.xlu0 %609
    %v611 = vsel %vm349, %v342, 0
    %v613 = vsel %vm349, %v344, 0
    %v615 = vsel %vm349, %v608, 0
    %v617 = vsel %vm349, %v610, 0
    %619 = vmatprep.subr.mxu0 0.0
    %620 = vmatpush1.xpose.msra.mxu0 0.0
    %621 = vmatprep.subr.mxu0 0.0
    %622 = vmatpush1.xpose.msra.mxu0 0.0
    %623 = vmatprep.subr.mxu0 0.0
    %624 = vmatpush1.xpose.msra.mxu0 0.0
    %625 = vmatprep.subr.mxu0 0.0
    %626 = vmatpush1.xpose.msra.mxu0 0.0
    %627 = vmatprep.subr.mxu0 0.0
    %628 = vmatpush1.xpose.msra.mxu0 0.0
    %629 = vmatprep.subr.mxu0 0.0
    %630 = vmatpush1.xpose.msra.mxu0 0.0
    %631 = vmatprep.subr.mxu0 0.0
    %632 = vmatpush1.xpose.msra.mxu0 0.0
    %633 = vmatprep.subr.mxu0 0.0
    %634 = vmatpush1.xpose.msra.mxu0 0.0
    %635 = vmatprep.subr.mxu0 0.0
    %636 = vmatpush1.xpose.msra.mxu0 0.0
    %637 = vmatprep.subr.mxu0 0.0
    %638 = vmatpush1.xpose.msra.mxu0 0.0
    %639 = vmatprep.subr.mxu0 0.0
    %640 = vmatpush1.xpose.msra.mxu0 0.0
    %641 = vmatprep.subr.mxu0 0.0
    %642 = vmatpush1.xpose.msra.mxu0 0.0
    %643 = vmatprep.subr.mxu0 0.0
    %644 = vmatpush1.xpose.msra.mxu0 0.0
    %645 = vmatprep.subr.mxu0 0.0
    %646 = vmatpush1.xpose.msra.mxu0 0.0
    %647 = vmatprep.subr.mxu0 0.0
    %648 = vmatpush1.xpose.msra.mxu0 %v617
    %649 = vmatprep.subr.mxu0 0.0
    %650 = vmatpush1.xpose.msra.mxu0 %v615
    %651 = vmatprep.subr.mxu0 0.0
    %652 = vmatpush2.xpose.msra.mxu0 0.0
    %653 = vmatprep.subr.mxu0 0.0
    %654 = vmatpush2.xpose.msra.mxu0 0.0
    %655 = vmatprep.subr.mxu0 0.0
    %656 = vmatpush2.xpose.msra.mxu0 0.0
    %657 = vmatprep.subr.mxu0 0.0
    %658 = vmatpush2.xpose.msra.mxu0 0.0
    %659 = vmatprep.subr.mxu0 0.0
    %660 = vmatpush2.xpose.msra.mxu0 0.0
    %661 = vmatprep.subr.mxu0 0.0
    %662 = vmatpush2.xpose.msra.mxu0 0.0
    %663 = vmatprep.subr.mxu0 0.0
    %664 = vmatpush2.xpose.msra.mxu0 0.0
    %665 = vmatprep.subr.mxu0 0.0
    %666 = vmatpush2.xpose.msra.mxu0 0.0
    %667 = vmatprep.subr.mxu0 0.0
    %668 = vmatpush2.xpose.msra.mxu0 0.0
    %669 = vmatprep.subr.mxu0 0.0
    %670 = vmatpush2.xpose.msra.mxu0 0.0
    %671 = vmatprep.subr.mxu0 0.0
    %672 = vmatpush2.xpose.msra.mxu0 0.0
    %673 = vmatprep.subr.mxu0 0.0
    %674 = vmatpush2.xpose.msra.mxu0 0.0
    %675 = vmatprep.subr.mxu0 0.0
    %676 = vmatpush2.xpose.msra.mxu0 0.0
    %677 = vmatprep.subr.mxu0 0.0
    %678 = vmatpush2.xpose.msra.mxu0 0.0
    %679 = vmatprep.subr.mxu0 0.0
    %680 = vmatpush2.xpose.msra.mxu0 0.0
    %681 = vmatprep.subr.mxu0 0.0
    %682 = vmatpush2.xpose.msra.mxu0 0.0
    %683 = vmatprep.mubr.f32.mxu0 0.0
    %684 = vmatmul.mubr.f32.gmra.mxu0 %v611
    %v685 = vpop.f32.mrf.mxu0
    %v686 = vadd.f32 0.0, %v685
    %v687 = vpop.f32.mrf.mxu0
    %688 = vmatprep.mubr.f32.mxu0 0.0
    %689 = vmatmul.mubr.f32.gmra.mxu0 %v613
    %v690 = vpop.f32.mrf.mxu0
    %v691 = vadd.f32 0.0, %v690
    %v692 = vpop.f32.mrf.mxu0
    %693 = vdwg.mxu0
    %v694 = vmul.f32 %v425, 0.35355338
    %v695 = vmul.f32 %v430, 0.35355338
    %v696 = vmul.f32 %v512, 0.35355338
    %v697 = vmul.f32 %v517, 0.35355338
    %v698 = vmul.f32 %v599, 0.35355338
    %v699 = vmul.f32 %v604, 0.35355338
    %v700 = vmul.f32 %v686, 0.35355338
    %v701 = vmul.f32 %v691, 0.35355338
    %v702 = vadd.f32 %v694, %v237
    %v703 = vadd.f32 %v695, %v238
    %v704 = vadd.f32 %v696, %v237
    %v705 = vadd.f32 %v697, %v238
    %v706 = vadd.f32 %v698, %v237
    %v707 = vadd.f32 %v699, %v238
    %v708 = vadd.f32 %v700, %v237
    %v709 = vadd.f32 %v701, %v238
    %vm710 = vcmask 130048
    %v711 = vsel %vm710, %v702, -inf
    %712 = vmax.xlane.f32.xlu0 %v711
    %v713 = vpop.xlane.xlu0 %712
    %v714 = vsel %vm710, %v703, -inf
    %715 = vmax.xlane.f32.xlu0 %v714
    %v716 = vpop.xlane.xlu0 %715
    %v717 = vsel %vm710, %v704, -inf
    %718 = vmax.xlane.f32.xlu0 %v717
    %v719 = vpop.xlane.xlu0 %718
    %v720 = vsel %vm710, %v705, -inf
    %721 = vmax.xlane.f32.xlu0 %v720
    %v722 = vpop.xlane.xlu0 %721
    %v723 = vsel %vm710, %v706, -inf
    %724 = vmax.xlane.f32.xlu0 %v723
    %v725 = vpop.xlane.xlu0 %724
    %v726 = vsel %vm710, %v707, -inf
    %727 = vmax.xlane.f32.xlu0 %v726
    %v728 = vpop.xlane.xlu0 %727
    %v729 = vsel %vm710, %v708, -inf
    %730 = vmax.xlane.f32.xlu0 %v729
    %v731 = vpop.xlane.xlu0 %730
    %v732 = vsel %vm710, %v709, -inf
    %733 = vmax.xlane.f32.xlu0 %v732
    %v734 = vpop.xlane.xlu0 %733
    %v735 = vsub.f32 %v702, %v713
    %v736 = vsub.f32 %v703, %v716
    %v737 = vsub.f32 %v704, %v719
    %v738 = vsub.f32 %v705, %v722
    %v739 = vsub.f32 %v706, %v725
    %v740 = vsub.f32 %v707, %v728
    %v741 = vsub.f32 %v708, %v731
    %v742 = vsub.f32 %v709, %v734
    %v743 = vmul.f32 %v735, 1.442695
    %v744 = vpow.pop %v743
    %v745 = vmul.f32 %v736, 1.442695
    %v746 = vpow.pop %v745
    %v747 = vmul.f32 %v737, 1.442695
    %v748 = vpow.pop %v747
    %v749 = vmul.f32 %v738, 1.442695
    %v750 = vpow.pop %v749
    %v751 = vmul.f32 %v739, 1.442695
    %v752 = vpow.pop %v751
    %v753 = vmul.f32 %v740, 1.442695
    %v754 = vpow.pop %v753
    %v755 = vmul.f32 %v741, 1.442695
    %v756 = vpow.pop %v755
    %v757 = vmul.f32 %v742, 1.442695
    %v758 = vpow.pop %v757
    %v759 = vsel %vm710, %v744, 0.0
    %760 = vadd.xlane.f32.xlu0 %v759
    %v761 = vpop.xlane.xlu0 %760
    %v762 = vsel %vm710, %v746, 0.0
    %763 = vadd.xlane.f32.xlu0 %v762
    %v764 = vpop.xlane.xlu0 %763
    %v765 = vsel %vm710, %v748, 0.0
    %766 = vadd.xlane.f32.xlu0 %v765
    %v767 = vpop.xlane.xlu0 %766
    %v768 = vsel %vm710, %v750, 0.0
    %769 = vadd.xlane.f32.xlu0 %v768
    %v770 = vpop.xlane.xlu0 %769
    %v771 = vsel %vm710, %v752, 0.0
    %772 = vadd.xlane.f32.xlu0 %v771
    %v773 = vpop.xlane.xlu0 %772
    %v774 = vsel %vm710, %v754, 0.0
    %775 = vadd.xlane.f32.xlu0 %v774
    %v776 = vpop.xlane.xlu0 %775
    %v777 = vsel %vm710, %v756, 0.0
    %778 = vadd.xlane.f32.xlu0 %v777
    %v779 = vpop.xlane.xlu0 %778
    %v780 = vsel %vm710, %v758, 0.0
    %781 = vadd.xlane.f32.xlu0 %v780
    %v782 = vpop.xlane.xlu0 %781
    %v783 = vrcp.pop %v761
    %v784 = vrcp.pop %v764
    %v785 = vrcp.pop %v767
    %v786 = vrcp.pop %v770
    %v787 = vrcp.pop %v773
    %v788 = vrcp.pop %v776
    %v789 = vrcp.pop %v779
    %v790 = vrcp.pop %v782
    %v791 = vmul.f32 %v744, %v783
    %v792 = vmul.f32 %v746, %v784
    %v793 = vmul.f32 %v748, %v785
    %v794 = vmul.f32 %v750, %v786
    %v795 = vmul.f32 %v752, %v787
    %v796 = vmul.f32 %v754, %v788
    %v797 = vmul.f32 %v756, %v789
    %v798 = vmul.f32 %v758, %v790
    %799 = vrot.lane.b32.xlu0 %v323, 64
    %v800 = vpop.permute.xlu0 %799
    %801 = vrot.lane.b32.xlu0 %v328, 64
    %v802 = vpop.permute.xlu0 %801
    %v806 = vsel %vm710, %v791, 0
    %v809 = vsel %vm710, %v792, 0
    %811 = vmatprep.subr.mxu0 0.0
    %812 = vmatpush1.msra.mxu0 0.0
    %813 = vmatprep.subr.mxu0 0.0
    %814 = vmatpush1.msra.mxu0 0.0
    %815 = vmatprep.subr.mxu0 0.0
    %816 = vmatpush1.msra.mxu0 0.0
    %817 = vmatprep.subr.mxu0 0.0
    %818 = vmatpush1.msra.mxu0 0.0
    %819 = vmatprep.subr.mxu0 0.0
    %820 = vmatpush1.msra.mxu0 0.0
    %821 = vmatprep.subr.mxu0 0.0
    %822 = vmatpush1.msra.mxu0 0.0
    %823 = vmatprep.subr.mxu0 0.0
    %824 = vmatpush1.msra.mxu0 0.0
    %825 = vmatprep.subr.mxu0 0.0
    %826 = vmatpush1.msra.mxu0 0.0
    %827 = vmatprep.subr.mxu0 0.0
    %828 = vmatpush1.msra.mxu0 0.0
    %829 = vmatprep.subr.mxu0 0.0
    %830 = vmatpush1.msra.mxu0 0.0
    %831 = vmatprep.subr.mxu0 0.0
    %832 = vmatpush1.msra.mxu0 0.0
    %833 = vmatprep.subr.mxu0 0.0
    %834 = vmatpush1.msra.mxu0 0.0
    %835 = vmatprep.subr.mxu0 0.0
    %836 = vmatpush1.msra.mxu0 0.0
    %837 = vmatprep.subr.mxu0 0.0
    %838 = vmatpush1.msra.mxu0 0.0
    %839 = vmatprep.subr.mxu0 0.0
    %840 = vmatpush1.msra.mxu0 %v802
    %841 = vmatprep.subr.mxu0 0.0
    %842 = vmatpush1.msra.mxu0 %v800
    %843 = vmatprep.subr.mxu0 0.0
    %844 = vmatpush2.msra.mxu0 0.0
    %845 = vmatprep.subr.mxu0 0.0
    %846 = vmatpush2.msra.mxu0 0.0
    %847 = vmatprep.subr.mxu0 0.0
    %848 = vmatpush2.msra.mxu0 0.0
    %849 = vmatprep.subr.mxu0 0.0
    %850 = vmatpush2.msra.mxu0 0.0
    %851 = vmatprep.subr.mxu0 0.0
    %852 = vmatpush2.msra.mxu0 0.0
    %853 = vmatprep.subr.mxu0 0.0
    %854 = vmatpush2.msra.mxu0 0.0
    %855 = vmatprep.subr.mxu0 0.0
    %856 = vmatpush2.msra.mxu0 0.0
    %857 = vmatprep.subr.mxu0 0.0
    %858 = vmatpush2.msra.mxu0 0.0
    %859 = vmatprep.subr.mxu0 0.0
    %860 = vmatpush2.msra.mxu0 0.0
    %861 = vmatprep.subr.mxu0 0.0
    %862 = vmatpush2.msra.mxu0 0.0
    %863 = vmatprep.subr.mxu0 0.0
    %864 = vmatpush2.msra.mxu0 0.0
    %865 = vmatprep.subr.mxu0 0.0
    %866 = vmatpush2.msra.mxu0 0.0
    %867 = vmatprep.subr.mxu0 0.0
    %868 = vmatpush2.msra.mxu0 0.0
    %869 = vmatprep.subr.mxu0 0.0
    %870 = vmatpush2.msra.mxu0 0.0
    %871 = vmatprep.subr.mxu0 0.0
    %872 = vmatpush2.msra.mxu0 0.0
    %873 = vmatprep.subr.mxu0 0.0
    %874 = vmatpush2.msra.mxu0 0.0
    %875 = vmatprep.mubr.f32.mxu0 0.0
    %876 = vmatmul.mubr.f32.gmra.mxu0 %v806
    %v877 = vpop.f32.mrf.mxu0
    %v878 = vadd.f32 0.0, %v877
    %v879 = vpop.f32.mrf.mxu0
    %880 = vmatprep.mubr.f32.mxu0 0.0
    %881 = vmatmul.mubr.f32.gmra.mxu0 %v809
    %v882 = vpop.f32.mrf.mxu0
    %v883 = vadd.f32 0.0, %v882
    %v884 = vpop.f32.mrf.mxu0
    %885 = vdwg.mxu0
    %886 = vrot.lane.b32.xlu0 %v334, 64
    %v887 = vpop.permute.xlu0 %886
    %888 = vrot.lane.b32.xlu0 %v336, 64
    %v889 = vpop.permute.xlu0 %888
    %v893 = vsel %vm710, %v793, 0
    %v896 = vsel %vm710, %v794, 0
    %898 = vmatprep.subr.mxu0 0.0
    %899 = vmatpush1.msra.mxu0 0.0
    %900 = vmatprep.subr.mxu0 0.0
    %901 = vmatpush1.msra.mxu0 0.0
    %902 = vmatprep.subr.mxu0 0.0
    %903 = vmatpush1.msra.mxu0 0.0
    %904 = vmatprep.subr.mxu0 0.0
    %905 = vmatpush1.msra.mxu0 0.0
    %906 = vmatprep.subr.mxu0 0.0
    %907 = vmatpush1.msra.mxu0 0.0
    %908 = vmatprep.subr.mxu0 0.0
    %909 = vmatpush1.msra.mxu0 0.0
    %910 = vmatprep.subr.mxu0 0.0
    %911 = vmatpush1.msra.mxu0 0.0
    %912 = vmatprep.subr.mxu0 0.0
    %913 = vmatpush1.msra.mxu0 0.0
    %914 = vmatprep.subr.mxu0 0.0
    %915 = vmatpush1.msra.mxu0 0.0
    %916 = vmatprep.subr.mxu0 0.0
    %917 = vmatpush1.msra.mxu0 0.0
    %918 = vmatprep.subr.mxu0 0.0
    %919 = vmatpush1.msra.mxu0 0.0
    %920 = vmatprep.subr.mxu0 0.0
    %921 = vmatpush1.msra.mxu0 0.0
    %922 = vmatprep.subr.mxu0 0.0
    %923 = vmatpush1.msra.mxu0 0.0
    %924 = vmatprep.subr.mxu0 0.0
    %925 = vmatpush1.msra.mxu0 0.0
    %926 = vmatprep.subr.mxu0 0.0
    %927 = vmatpush1.msra.mxu0 %v889
    %928 = vmatprep.subr.mxu0 0.0
    %929 = vmatpush1.msra.mxu0 %v887
    %930 = vmatprep.subr.mxu0 0.0
    %931 = vmatpush2.msra.mxu0 0.0
    %932 = vmatprep.subr.mxu0 0.0
    %933 = vmatpush2.msra.mxu0 0.0
    %934 = vmatprep.subr.mxu0 0.0
    %935 = vmatpush2.msra.mxu0 0.0
    %936 = vmatprep.subr.mxu0 0.0
    %937 = vmatpush2.msra.mxu0 0.0
    %938 = vmatprep.subr.mxu0 0.0
    %939 = vmatpush2.msra.mxu0 0.0
    %940 = vmatprep.subr.mxu0 0.0
    %941 = vmatpush2.msra.mxu0 0.0
    %942 = vmatprep.subr.mxu0 0.0
    %943 = vmatpush2.msra.mxu0 0.0
    %944 = vmatprep.subr.mxu0 0.0
    %945 = vmatpush2.msra.mxu0 0.0
    %946 = vmatprep.subr.mxu0 0.0
    %947 = vmatpush2.msra.mxu0 0.0
    %948 = vmatprep.subr.mxu0 0.0
    %949 = vmatpush2.msra.mxu0 0.0
    %950 = vmatprep.subr.mxu0 0.0
    %951 = vmatpush2.msra.mxu0 0.0
    %952 = vmatprep.subr.mxu0 0.0
    %953 = vmatpush2.msra.mxu0 0.0
    %954 = vmatprep.subr.mxu0 0.0
    %955 = vmatpush2.msra.mxu0 0.0
    %956 = vmatprep.subr.mxu0 0.0
    %957 = vmatpush2.msra.mxu0 0.0
    %958 = vmatprep.subr.mxu0 0.0
    %959 = vmatpush2.msra.mxu0 0.0
    %960 = vmatprep.subr.mxu0 0.0
    %961 = vmatpush2.msra.mxu0 0.0
    %962 = vmatprep.mubr.f32.mxu0 0.0
    %963 = vmatmul.mubr.f32.gmra.mxu0 %v893
    %v964 = vpop.f32.mrf.mxu0
    %v965 = vadd.f32 0.0, %v964
    %v966 = vpop.f32.mrf.mxu0
    %967 = vmatprep.mubr.f32.mxu0 0.0
    %968 = vmatmul.mubr.f32.gmra.mxu0 %v896
    %v969 = vpop.f32.mrf.mxu0
    %v970 = vadd.f32 0.0, %v969
    %v971 = vpop.f32.mrf.mxu0
    %972 = vdwg.mxu0
    %973 = vrot.lane.b32.xlu0 %v338, 64
    %v974 = vpop.permute.xlu0 %973
    %975 = vrot.lane.b32.xlu0 %v340, 64
    %v976 = vpop.permute.xlu0 %975
    %v980 = vsel %vm710, %v795, 0
    %v983 = vsel %vm710, %v796, 0
    %985 = vmatprep.subr.mxu0 0.0
    %986 = vmatpush1.msra.mxu0 0.0
    %987 = vmatprep.subr.mxu0 0.0
    %988 = vmatpush1.msra.mxu0 0.0
    %989 = vmatprep.subr.mxu0 0.0
    %990 = vmatpush1.msra.mxu0 0.0
    %991 = vmatprep.subr.mxu0 0.0
    %992 = vmatpush1.msra.mxu0 0.0
    %993 = vmatprep.subr.mxu0 0.0
    %994 = vmatpush1.msra.mxu0 0.0
    %995 = vmatprep.subr.mxu0 0.0
    %996 = vmatpush1.msra.mxu0 0.0
    %997 = vmatprep.subr.mxu0 0.0
    %998 = vmatpush1.msra.mxu0 0.0
    %999 = vmatprep.subr.mxu0 0.0
    %1000 = vmatpush1.msra.mxu0 0.0
    %1001 = vmatprep.subr.mxu0 0.0
    %1002 = vmatpush1.msra.mxu0 0.0
    %1003 = vmatprep.subr.mxu0 0.0
    %1004 = vmatpush1.msra.mxu0 0.0
    %1005 = vmatprep.subr.mxu0 0.0
    %1006 = vmatpush1.msra.mxu0 0.0
    %1007 = vmatprep.subr.mxu0 0.0
    %1008 = vmatpush1.msra.mxu0 0.0
    %1009 = vmatprep.subr.mxu0 0.0
    %1010 = vmatpush1.msra.mxu0 0.0
    %1011 = vmatprep.subr.mxu0 0.0
    %1012 = vmatpush1.msra.mxu0 0.0
    %1013 = vmatprep.subr.mxu0 0.0
    %1014 = vmatpush1.msra.mxu0 %v976
    %1015 = vmatprep.subr.mxu0 0.0
    %1016 = vmatpush1.msra.mxu0 %v974
    %1017 = vmatprep.subr.mxu0 0.0
    %1018 = vmatpush2.msra.mxu0 0.0
    %1019 = vmatprep.subr.mxu0 0.0
    %1020 = vmatpush2.msra.mxu0 0.0
    %1021 = vmatprep.subr.mxu0 0.0
    %1022 = vmatpush2.msra.mxu0 0.0
    %1023 = vmatprep.subr.mxu0 0.0
    %1024 = vmatpush2.msra.mxu0 0.0
    %1025 = vmatprep.subr.mxu0 0.0
    %1026 = vmatpush2.msra.mxu0 0.0
    %1027 = vmatprep.subr.mxu0 0.0
    %1028 = vmatpush2.msra.mxu0 0.0
    %1029 = vmatprep.subr.mxu0 0.0
    %1030 = vmatpush2.msra.mxu0 0.0
    %1031 = vmatprep.subr.mxu0 0.0
    %1032 = vmatpush2.msra.mxu0 0.0
    %1033 = vmatprep.subr.mxu0 0.0
    %1034 = vmatpush2.msra.mxu0 0.0
    %1035 = vmatprep.subr.mxu0 0.0
    %1036 = vmatpush2.msra.mxu0 0.0
    %1037 = vmatprep.subr.mxu0 0.0
    %1038 = vmatpush2.msra.mxu0 0.0
    %1039 = vmatprep.subr.mxu0 0.0
    %1040 = vmatpush2.msra.mxu0 0.0
    %1041 = vmatprep.subr.mxu0 0.0
    %1042 = vmatpush2.msra.mxu0 0.0
    %1043 = vmatprep.subr.mxu0 0.0
    %1044 = vmatpush2.msra.mxu0 0.0
    %1045 = vmatprep.subr.mxu0 0.0
    %1046 = vmatpush2.msra.mxu0 0.0
    %1047 = vmatprep.subr.mxu0 0.0
    %1048 = vmatpush2.msra.mxu0 0.0
    %1049 = vmatprep.mubr.f32.mxu0 0.0
    %1050 = vmatmul.mubr.f32.gmra.mxu0 %v980
    %v1051 = vpop.f32.mrf.mxu0
    %v1052 = vadd.f32 0.0, %v1051
    %v1053 = vpop.f32.mrf.mxu0
    %1054 = vmatprep.mubr.f32.mxu0 0.0
    %1055 = vmatmul.mubr.f32.gmra.mxu0 %v983
    %v1056 = vpop.f32.mrf.mxu0
    %v1057 = vadd.f32 0.0, %v1056
    %v1058 = vpop.f32.mrf.mxu0
    %1059 = vdwg.mxu0
    %1060 = vrot.lane.b32.xlu0 %v342, 64
    %v1061 = vpop.permute.xlu0 %1060
    %1062 = vrot.lane.b32.xlu0 %v344, 64
    %v1063 = vpop.permute.xlu0 %1062
    %v1067 = vsel %vm710, %v797, 0
    %v1070 = vsel %vm710, %v798, 0
    %1072 = vmatprep.subr.mxu0 0.0
    %1073 = vmatpush1.msra.mxu0 0.0
    %1074 = vmatprep.subr.mxu0 0.0
    %1075 = vmatpush1.msra.mxu0 0.0
    %1076 = vmatprep.subr.mxu0 0.0
    %1077 = vmatpush1.msra.mxu0 0.0
    %1078 = vmatprep.subr.mxu0 0.0
    %1079 = vmatpush1.msra.mxu0 0.0
    %1080 = vmatprep.subr.mxu0 0.0
    %1081 = vmatpush1.msra.mxu0 0.0
    %1082 = vmatprep.subr.mxu0 0.0
    %1083 = vmatpush1.msra.mxu0 0.0
    %1084 = vmatprep.subr.mxu0 0.0
    %1085 = vmatpush1.msra.mxu0 0.0
    %1086 = vmatprep.subr.mxu0 0.0
    %1087 = vmatpush1.msra.mxu0 0.0
    %1088 = vmatprep.subr.mxu0 0.0
    %1089 = vmatpush1.msra.mxu0 0.0
    %1090 = vmatprep.subr.mxu0 0.0
    %1091 = vmatpush1.msra.mxu0 0.0
    %1092 = vmatprep.subr.mxu0 0.0
    %1093 = vmatpush1.msra.mxu0 0.0
    %1094 = vmatprep.subr.mxu0 0.0
    %1095 = vmatpush1.msra.mxu0 0.0
    %1096 = vmatprep.subr.mxu0 0.0
    %1097 = vmatpush1.msra.mxu0 0.0
    %1098 = vmatprep.subr.mxu0 0.0
    %1099 = vmatpush1.msra.mxu0 0.0
    %1100 = vmatprep.subr.mxu0 0.0
    %1101 = vmatpush1.msra.mxu0 %v1063
    %1102 = vmatprep.subr.mxu0 0.0
    %1103 = vmatpush1.msra.mxu0 %v1061
    %1104 = vmatprep.subr.mxu0 0.0
    %1105 = vmatpush2.msra.mxu0 0.0
    %1106 = vmatprep.subr.mxu0 0.0
    %1107 = vmatpush2.msra.mxu0 0.0
    %1108 = vmatprep.subr.mxu0 0.0
    %1109 = vmatpush2.msra.mxu0 0.0
    %1110 = vmatprep.subr.mxu0 0.0
    %1111 = vmatpush2.msra.mxu0 0.0
    %1112 = vmatprep.subr.mxu0 0.0
    %1113 = vmatpush2.msra.mxu0 0.0
    %1114 = vmatprep.subr.mxu0 0.0
    %1115 = vmatpush2.msra.mxu0 0.0
    %1116 = vmatprep.subr.mxu0 0.0
    %1117 = vmatpush2.msra.mxu0 0.0
    %1118 = vmatprep.subr.mxu0 0.0
    %1119 = vmatpush2.msra.mxu0 0.0
    %1120 = vmatprep.subr.mxu0 0.0
    %1121 = vmatpush2.msra.mxu0 0.0
    %1122 = vmatprep.subr.mxu0 0.0
    %1123 = vmatpush2.msra.mxu0 0.0
    %1124 = vmatprep.subr.mxu0 0.0
    %1125 = vmatpush2.msra.mxu0 0.0
    %1126 = vmatprep.subr.mxu0 0.0
    %1127 = vmatpush2.msra.mxu0 0.0
    %1128 = vmatprep.subr.mxu0 0.0
    %1129 = vmatpush2.msra.mxu0 0.0
    %1130 = vmatprep.subr.mxu0 0.0
    %1131 = vmatpush2.msra.mxu0 0.0
    %1132 = vmatprep.subr.mxu0 0.0
    %1133 = vmatpush2.msra.mxu0 0.0
    %1134 = vmatprep.subr.mxu0 0.0
    %1135 = vmatpush2.msra.mxu0 0.0
    %1136 = vmatprep.mubr.f32.mxu0 0.0
    %1137 = vmatmul.mubr.f32.gmra.mxu0 %v1067
    %v1138 = vpop.f32.mrf.mxu0
    %v1139 = vadd.f32 0.0, %v1138
    %v1140 = vpop.f32.mrf.mxu0
    %1141 = vmatprep.mubr.f32.mxu0 0.0
    %1142 = vmatmul.mubr.f32.gmra.mxu0 %v1070
    %v1143 = vpop.f32.mrf.mxu0
    %v1144 = vadd.f32 0.0, %v1143
    %v1145 = vpop.f32.mrf.mxu0
    %1146 = vdwg.mxu0
    %v1147 = vld [vmem:[%s10] sm:$0xff]
    %v1148 = vld [vmem:[%s10 + $0x8] sm:$0xff]
    %v1149 = vld [vmem:[%s10 + $0x10] sm:$0xff]
    %v1150 = vld [vmem:[%s10 + $0x18] sm:$0xff]
    %v1152 = vsel %vm349, %v878, 0
    %v1155 = vsel %vm349, %v883, 0
    %1157 = vmatprep.subr.mxu0 0.0
    %1158 = vmatpush1.msra.mxu0 0.0
    %1159 = vmatprep.subr.mxu0 0.0
    %1160 = vmatpush1.msra.mxu0 0.0
    %1161 = vmatprep.subr.mxu0 0.0
    %1162 = vmatpush1.msra.mxu0 0.0
    %1163 = vmatprep.subr.mxu0 0.0
    %1164 = vmatpush1.msra.mxu0 0.0
    %1165 = vmatprep.subr.mxu0 0.0
    %1166 = vmatpush1.msra.mxu0 0.0
    %1167 = vmatprep.subr.mxu0 0.0
    %1168 = vmatpush1.msra.mxu0 0.0
    %1169 = vmatprep.subr.mxu0 0.0
    %1170 = vmatpush1.msra.mxu0 0.0
    %1171 = vmatprep.subr.mxu0 0.0
    %1172 = vmatpush1.msra.mxu0 0.0
    %1173 = vmatprep.subr.mxu0 0.0
    %1174 = vmatpush1.msra.mxu0 0.0
    %1175 = vmatprep.subr.mxu0 0.0
    %1176 = vmatpush1.msra.mxu0 0.0
    %1177 = vmatprep.subr.mxu0 0.0
    %1178 = vmatpush1.msra.mxu0 0.0
    %1179 = vmatprep.subr.mxu0 0.0
    %1180 = vmatpush1.msra.mxu0 0.0
    %1181 = vmatprep.subr.mxu0 0.0
    %1182 = vmatpush1.msra.mxu0 0.0
    %1183 = vmatprep.subr.mxu0 0.0
    %1184 = vmatpush1.msra.mxu0 0.0
    %1185 = vmatprep.subr.mxu0 0.0
    %1186 = vmatpush1.msra.mxu0 0.0
    %1187 = vmatprep.subr.mxu0 0.0
    %1188 = vmatpush1.msra.mxu0 %v1147
    %1189 = vmatprep.subr.mxu0 0.0
    %1190 = vmatpush2.msra.mxu0 0.0
    %1191 = vmatprep.subr.mxu0 0.0
    %1192 = vmatpush2.msra.mxu0 0.0
    %1193 = vmatprep.subr.mxu0 0.0
    %1194 = vmatpush2.msra.mxu0 0.0
    %1195 = vmatprep.subr.mxu0 0.0
    %1196 = vmatpush2.msra.mxu0 0.0
    %1197 = vmatprep.subr.mxu0 0.0
    %1198 = vmatpush2.msra.mxu0 0.0
    %1199 = vmatprep.subr.mxu0 0.0
    %1200 = vmatpush2.msra.mxu0 0.0
    %1201 = vmatprep.subr.mxu0 0.0
    %1202 = vmatpush2.msra.mxu0 0.0
    %1203 = vmatprep.subr.mxu0 0.0
    %1204 = vmatpush2.msra.mxu0 0.0
    %1205 = vmatprep.subr.mxu0 0.0
    %1206 = vmatpush2.msra.mxu0 0.0
    %1207 = vmatprep.subr.mxu0 0.0
    %1208 = vmatpush2.msra.mxu0 0.0
    %1209 = vmatprep.subr.mxu0 0.0
    %1210 = vmatpush2.msra.mxu0 0.0
    %1211 = vmatprep.subr.mxu0 0.0
    %1212 = vmatpush2.msra.mxu0 0.0
    %1213 = vmatprep.subr.mxu0 0.0
    %1214 = vmatpush2.msra.mxu0 0.0
    %1215 = vmatprep.subr.mxu0 0.0
    %1216 = vmatpush2.msra.mxu0 0.0
    %1217 = vmatprep.subr.mxu0 0.0
    %1218 = vmatpush2.msra.mxu0 0.0
    %1219 = vmatprep.subr.mxu0 0.0
    %1220 = vmatpush2.msra.mxu0 0.0
    %1221 = vmatprep.mubr.f32.mxu0 0.0
    %1222 = vmatmul.mubr.f32.gmra.mxu0 %v1152
    %v1223 = vpop.f32.mrf.mxu0
    %v1224 = vadd.f32 0.0, %v1223
    %v1225 = vpop.f32.mrf.mxu0
    %1226 = vmatprep.mubr.f32.mxu0 0.0
    %1227 = vmatmul.mubr.f32.gmra.mxu0 %v1155
    %v1228 = vpop.f32.mrf.mxu0
    %v1229 = vadd.f32 0.0, %v1228
    %v1230 = vpop.f32.mrf.mxu0
    %1231 = vdwg.mxu0
    %v1233 = vsel %vm349, %v965, 0
    %v1236 = vsel %vm349, %v970, 0
    %1238 = vmatprep.subr.mxu0 0.0
    %1239 = vmatpush1.msra.mxu0 0.0
    %1240 = vmatprep.subr.mxu0 0.0
    %1241 = vmatpush1.msra.mxu0 0.0
    %1242 = vmatprep.subr.mxu0 0.0
    %1243 = vmatpush1.msra.mxu0 0.0
    %1244 = vmatprep.subr.mxu0 0.0
    %1245 = vmatpush1.msra.mxu0 0.0
    %1246 = vmatprep.subr.mxu0 0.0
    %1247 = vmatpush1.msra.mxu0 0.0
    %1248 = vmatprep.subr.mxu0 0.0
    %1249 = vmatpush1.msra.mxu0 0.0
    %1250 = vmatprep.subr.mxu0 0.0
    %1251 = vmatpush1.msra.mxu0 0.0
    %1252 = vmatprep.subr.mxu0 0.0
    %1253 = vmatpush1.msra.mxu0 0.0
    %1254 = vmatprep.subr.mxu0 0.0
    %1255 = vmatpush1.msra.mxu0 0.0
    %1256 = vmatprep.subr.mxu0 0.0
    %1257 = vmatpush1.msra.mxu0 0.0
    %1258 = vmatprep.subr.mxu0 0.0
    %1259 = vmatpush1.msra.mxu0 0.0
    %1260 = vmatprep.subr.mxu0 0.0
    %1261 = vmatpush1.msra.mxu0 0.0
    %1262 = vmatprep.subr.mxu0 0.0
    %1263 = vmatpush1.msra.mxu0 0.0
    %1264 = vmatprep.subr.mxu0 0.0
    %1265 = vmatpush1.msra.mxu0 0.0
    %1266 = vmatprep.subr.mxu0 0.0
    %1267 = vmatpush1.msra.mxu0 0.0
    %1268 = vmatprep.subr.mxu0 0.0
    %1269 = vmatpush1.msra.mxu0 %v1148
    %1270 = vmatprep.subr.mxu0 0.0
    %1271 = vmatpush2.msra.mxu0 0.0
    %1272 = vmatprep.subr.mxu0 0.0
    %1273 = vmatpush2.msra.mxu0 0.0
    %1274 = vmatprep.subr.mxu0 0.0
    %1275 = vmatpush2.msra.mxu0 0.0
    %1276 = vmatprep.subr.mxu0 0.0
    %1277 = vmatpush2.msra.mxu0 0.0
    %1278 = vmatprep.subr.mxu0 0.0
    %1279 = vmatpush2.msra.mxu0 0.0
    %1280 = vmatprep.subr.mxu0 0.0
    %1281 = vmatpush2.msra.mxu0 0.0
    %1282 = vmatprep.subr.mxu0 0.0
    %1283 = vmatpush2.msra.mxu0 0.0
    %1284 = vmatprep.subr.mxu0 0.0
    %1285 = vmatpush2.msra.mxu0 0.0
    %1286 = vmatprep.subr.mxu0 0.0
    %1287 = vmatpush2.msra.mxu0 0.0
    %1288 = vmatprep.subr.mxu0 0.0
    %1289 = vmatpush2.msra.mxu0 0.0
    %1290 = vmatprep.subr.mxu0 0.0
    %1291 = vmatpush2.msra.mxu0 0.0
    %1292 = vmatprep.subr.mxu0 0.0
    %1293 = vmatpush2.msra.mxu0 0.0
    %1294 = vmatprep.subr.mxu0 0.0
    %1295 = vmatpush2.msra.mxu0 0.0
    %1296 = vmatprep.subr.mxu0 0.0
    %1297 = vmatpush2.msra.mxu0 0.0
    %1298 = vmatprep.subr.mxu0 0.0
    %1299 = vmatpush2.msra.mxu0 0.0
    %1300 = vmatprep.subr.mxu0 0.0
    %1301 = vmatpush2.msra.mxu0 0.0
    %1302 = vmatprep.mubr.f32.mxu0 0.0
    %1303 = vmatmul.mubr.f32.gmra.mxu0 %v1233
    %v1304 = vpop.f32.mrf.mxu0
    %v1305 = vadd.f32 0.0, %v1304
    %v1306 = vpop.f32.mrf.mxu0
    %1307 = vmatprep.mubr.f32.mxu0 0.0
    %1308 = vmatmul.mubr.f32.gmra.mxu0 %v1236
    %v1309 = vpop.f32.mrf.mxu0
    %v1310 = vadd.f32 0.0, %v1309
    %v1311 = vpop.f32.mrf.mxu0
    %1312 = vdwg.mxu0
    %v1314 = vsel %vm349, %v1052, 0
    %v1317 = vsel %vm349, %v1057, 0
    %1319 = vmatprep.subr.mxu0 0.0
    %1320 = vmatpush1.msra.mxu0 0.0
    %1321 = vmatprep.subr.mxu0 0.0
    %1322 = vmatpush1.msra.mxu0 0.0
    %1323 = vmatprep.subr.mxu0 0.0
    %1324 = vmatpush1.msra.mxu0 0.0
    %1325 = vmatprep.subr.mxu0 0.0
    %1326 = vmatpush1.msra.mxu0 0.0
    %1327 = vmatprep.subr.mxu0 0.0
    %1328 = vmatpush1.msra.mxu0 0.0
    %1329 = vmatprep.subr.mxu0 0.0
    %1330 = vmatpush1.msra.mxu0 0.0
    %1331 = vmatprep.subr.mxu0 0.0
    %1332 = vmatpush1.msra.mxu0 0.0
    %1333 = vmatprep.subr.mxu0 0.0
    %1334 = vmatpush1.msra.mxu0 0.0
    %1335 = vmatprep.subr.mxu0 0.0
    %1336 = vmatpush1.msra.mxu0 0.0
    %1337 = vmatprep.subr.mxu0 0.0
    %1338 = vmatpush1.msra.mxu0 0.0
    %1339 = vmatprep.subr.mxu0 0.0
    %1340 = vmatpush1.msra.mxu0 0.0
    %1341 = vmatprep.subr.mxu0 0.0
    %1342 = vmatpush1.msra.mxu0 0.0
    %1343 = vmatprep.subr.mxu0 0.0
    %1344 = vmatpush1.msra.mxu0 0.0
    %1345 = vmatprep.subr.mxu0 0.0
    %1346 = vmatpush1.msra.mxu0 0.0
    %1347 = vmatprep.subr.mxu0 0.0
    %1348 = vmatpush1.msra.mxu0 0.0
    %1349 = vmatprep.subr.mxu0 0.0
    %1350 = vmatpush1.msra.mxu0 %v1149
    %1351 = vmatprep.subr.mxu0 0.0
    %1352 = vmatpush2.msra.mxu0 0.0
    %1353 = vmatprep.subr.mxu0 0.0
    %1354 = vmatpush2.msra.mxu0 0.0
    %1355 = vmatprep.subr.mxu0 0.0
    %1356 = vmatpush2.msra.mxu0 0.0
    %1357 = vmatprep.subr.mxu0 0.0
    %1358 = vmatpush2.msra.mxu0 0.0
    %1359 = vmatprep.subr.mxu0 0.0
    %1360 = vmatpush2.msra.mxu0 0.0
    %1361 = vmatprep.subr.mxu0 0.0
    %1362 = vmatpush2.msra.mxu0 0.0
    %1363 = vmatprep.subr.mxu0 0.0
    %1364 = vmatpush2.msra.mxu0 0.0
    %1365 = vmatprep.subr.mxu0 0.0
    %1366 = vmatpush2.msra.mxu0 0.0
    %1367 = vmatprep.subr.mxu0 0.0
    %1368 = vmatpush2.msra.mxu0 0.0
    %1369 = vmatprep.subr.mxu0 0.0
    %1370 = vmatpush2.msra.mxu0 0.0
    %1371 = vmatprep.subr.mxu0 0.0
    %1372 = vmatpush2.msra.mxu0 0.0
    %1373 = vmatprep.subr.mxu0 0.0
    %1374 = vmatpush2.msra.mxu0 0.0
    %1375 = vmatprep.subr.mxu0 0.0
    %1376 = vmatpush2.msra.mxu0 0.0
    %1377 = vmatprep.subr.mxu0 0.0
    %1378 = vmatpush2.msra.mxu0 0.0
    %1379 = vmatprep.subr.mxu0 0.0
    %1380 = vmatpush2.msra.mxu0 0.0
    %1381 = vmatprep.subr.mxu0 0.0
    %1382 = vmatpush2.msra.mxu0 0.0
    %1383 = vmatprep.mubr.f32.mxu0 0.0
    %1384 = vmatmul.mubr.f32.gmra.mxu0 %v1314
    %v1385 = vpop.f32.mrf.mxu0
    %v1386 = vadd.f32 0.0, %v1385
    %v1387 = vpop.f32.mrf.mxu0
    %1388 = vmatprep.mubr.f32.mxu0 0.0
    %1389 = vmatmul.mubr.f32.gmra.mxu0 %v1317
    %v1390 = vpop.f32.mrf.mxu0
    %v1391 = vadd.f32 0.0, %v1390
    %v1392 = vpop.f32.mrf.mxu0
    %1393 = vdwg.mxu0
    %v1395 = vsel %vm349, %v1139, 0
    %v1398 = vsel %vm349, %v1144, 0
    %1400 = vmatprep.subr.mxu0 0.0
    %1401 = vmatpush1.msra.mxu0 0.0
    %1402 = vmatprep.subr.mxu0 0.0
    %1403 = vmatpush1.msra.mxu0 0.0
    %1404 = vmatprep.subr.mxu0 0.0
    %1405 = vmatpush1.msra.mxu0 0.0
    %1406 = vmatprep.subr.mxu0 0.0
    %1407 = vmatpush1.msra.mxu0 0.0
    %1408 = vmatprep.subr.mxu0 0.0
    %1409 = vmatpush1.msra.mxu0 0.0
    %1410 = vmatprep.subr.mxu0 0.0
    %1411 = vmatpush1.msra.mxu0 0.0
    %1412 = vmatprep.subr.mxu0 0.0
    %1413 = vmatpush1.msra.mxu0 0.0
    %1414 = vmatprep.subr.mxu0 0.0
    %1415 = vmatpush1.msra.mxu0 0.0
    %1416 = vmatprep.subr.mxu0 0.0
    %1417 = vmatpush1.msra.mxu0 0.0
    %1418 = vmatprep.subr.mxu0 0.0
    %1419 = vmatpush1.msra.mxu0 0.0
    %1420 = vmatprep.subr.mxu0 0.0
    %1421 = vmatpush1.msra.mxu0 0.0
    %1422 = vmatprep.subr.mxu0 0.0
    %1423 = vmatpush1.msra.mxu0 0.0
    %1424 = vmatprep.subr.mxu0 0.0
    %1425 = vmatpush1.msra.mxu0 0.0
    %1426 = vmatprep.subr.mxu0 0.0
    %1427 = vmatpush1.msra.mxu0 0.0
    %1428 = vmatprep.subr.mxu0 0.0
    %1429 = vmatpush1.msra.mxu0 0.0
    %1430 = vmatprep.subr.mxu0 0.0
    %1431 = vmatpush1.msra.mxu0 %v1150
    %1432 = vmatprep.subr.mxu0 0.0
    %1433 = vmatpush2.msra.mxu0 0.0
    %1434 = vmatprep.subr.mxu0 0.0
    %1435 = vmatpush2.msra.mxu0 0.0
    %1436 = vmatprep.subr.mxu0 0.0
    %1437 = vmatpush2.msra.mxu0 0.0
    %1438 = vmatprep.subr.mxu0 0.0
    %1439 = vmatpush2.msra.mxu0 0.0
    %1440 = vmatprep.subr.mxu0 0.0
    %1441 = vmatpush2.msra.mxu0 0.0
    %1442 = vmatprep.subr.mxu0 0.0
    %1443 = vmatpush2.msra.mxu0 0.0
    %1444 = vmatprep.subr.mxu0 0.0
    %1445 = vmatpush2.msra.mxu0 0.0
    %1446 = vmatprep.subr.mxu0 0.0
    %1447 = vmatpush2.msra.mxu0 0.0
    %1448 = vmatprep.subr.mxu0 0.0
    %1449 = vmatpush2.msra.mxu0 0.0
    %1450 = vmatprep.subr.mxu0 0.0
    %1451 = vmatpush2.msra.mxu0 0.0
    %1452 = vmatprep.subr.mxu0 0.0
    %1453 = vmatpush2.msra.mxu0 0.0
    %1454 = vmatprep.subr.mxu0 0.0
    %1455 = vmatpush2.msra.mxu0 0.0
    %1456 = vmatprep.subr.mxu0 0.0
    %1457 = vmatpush2.msra.mxu0 0.0
    %1458 = vmatprep.subr.mxu0 0.0
    %1459 = vmatpush2.msra.mxu0 0.0
    %1460 = vmatprep.subr.mxu0 0.0
    %1461 = vmatpush2.msra.mxu0 0.0
    %1462 = vmatprep.subr.mxu0 0.0
    %1463 = vmatpush2.msra.mxu0 0.0
    %1464 = vmatprep.mubr.f32.mxu0 0.0
    %1465 = vmatmul.mubr.f32.gmra.mxu0 %v1395
    %v1466 = vpop.f32.mrf.mxu0
    %v1467 = vadd.f32 0.0, %v1466
    %v1468 = vpop.f32.mrf.mxu0
    %1469 = vmatprep.mubr.f32.mxu0 0.0
    %1470 = vmatmul.mubr.f32.gmra.mxu0 %v1398
    %v1471 = vpop.f32.mrf.mxu0
    %v1472 = vadd.f32 0.0, %v1471
    %v1473 = vpop.f32.mrf.mxu0
    %1474 = vdwg.mxu0
    %v1475 = vadd.f32 %v1224, %v1305
    %v1476 = vadd.f32 %v1229, %v1310
    %v1477 = vadd.f32 %v1475, %v1386
    %v1478 = vadd.f32 %v1476, %v1391
    %v1479 = vadd.f32 %v1477, %v1467
    %v1480 = vadd.f32 %v1478, %v1472
    %v1481 = vld [vmem:[%s11] sm:$0x1]
    %v1483 = vlaneseq
    %v1484 = vshrl.u32 %v1483, 7
    %v1485 = vsub.s32 0, %v1484
    %v1486 = vrot.slane %v1481, %v1485
    %v1488 = vadd.f32 %v1479, %v1486
    %v1489 = vadd.f32 %v1480, %v1486
    %v1490 = vadd.f32 %v235, %v1488
    %v1491 = vadd.f32 %v236, %v1489
    %v1492 = vld [vmem:[%s12] sm:$0x1]
    %v1493 = vld [vmem:[%s13] sm:$0x1]
    %v1494 = vsel %vm193, %v1490, 0.0
    %1495 = vadd.xlane.f32.xlu0 %v1494
    %v1496 = vpop.xlane.xlu0 %1495
    %v1497 = vsel %vm193, %v1491, 0.0
    %1498 = vadd.xlane.f32.xlu0 %v1497
    %v1499 = vpop.xlane.xlu0 %1498
    %v1500 = vmul.f32 %v1496, %v200
    %v1501 = vmul.f32 %v1499, %v200
    %v1502 = vsub.f32 %v1490, %v1500
    %v1503 = vsub.f32 %v1491, %v1501
    %v1504 = vmul.f32 %v1502, %v1502
    %v1505 = vmul.f32 %v1503, %v1503
    %v1506 = vsel %vm193, %v1504, 0.0
    %1507 = vadd.xlane.f32.xlu0 %v1506
    %v1508 = vpop.xlane.xlu0 %1507
    %v1509 = vsel %vm193, %v1505, 0.0
    %1510 = vadd.xlane.f32.xlu0 %v1509
    %v1511 = vpop.xlane.xlu0 %1510
    %v1512 = vmul.f32 %v1508, %v200
    %v1513 = vmul.f32 %v1511, %v200
    %v1514 = vadd.f32 %v1512, 1e-12
    %v1515 = vadd.f32 %v1513, 1e-12
    %v1516 = vrsqrt.pop %v1514
    %v1517 = vrsqrt.pop %v1515
    %v1518 = vmul.f32 %v1502, %v1516
    %v1519 = vmul.f32 %v1503, %v1517
    %v1521 = vlaneseq
    %v1522 = vshrl.u32 %v1521, 7
    %v1523 = vsub.s32 0, %v1522
    %v1524 = vrot.slane %v1492, %v1523
    %v1526 = vmul.f32 %v1518, %v1524
    %v1527 = vmul.f32 %v1519, %v1524
    %v1529 = vlaneseq
    %v1530 = vshrl.u32 %v1529, 7
    %v1531 = vsub.s32 0, %v1530
    %v1532 = vrot.slane %v1493, %v1531
    %v1534 = vadd.f32 %v1526, %v1532
    %v1535 = vadd.f32 %v1527, %v1532
    %v1536 = vld [vmem:[%s14] sm:$0xff]
    %v1537 = vld [vmem:[%s14 + $0x8] sm:$0xff]
    %v1538 = vld [vmem:[%s14 + $0x10] sm:$0xff]
    %v1539 = vld [vmem:[%s14 + $0x18] sm:$0xff]
    %v1540 = vld [vmem:[%s15] sm:$0x1]
    %v1542 = vlaneseq
    %v1543 = vshrl.u32 %v1542, 7
    %v1544 = vsub.s32 0, %v1543
    %v1545 = vrot.slane %v1540, %v1544
    %v1548 = vsel %vm193, %v1534, 0
    %v1551 = vsel %vm193, %v1535, 0
    %1553 = vmatprep.subr.mxu0 0.0
    %1554 = vmatpush1.msra.mxu0 0.0
    %1555 = vmatprep.subr.mxu0 0.0
    %1556 = vmatpush1.msra.mxu0 0.0
    %1557 = vmatprep.subr.mxu0 0.0
    %1558 = vmatpush1.msra.mxu0 0.0
    %1559 = vmatprep.subr.mxu0 0.0
    %1560 = vmatpush1.msra.mxu0 0.0
    %1561 = vmatprep.subr.mxu0 0.0
    %1562 = vmatpush1.msra.mxu0 0.0
    %1563 = vmatprep.subr.mxu0 0.0
    %1564 = vmatpush1.msra.mxu0 0.0
    %1565 = vmatprep.subr.mxu0 0.0
    %1566 = vmatpush1.msra.mxu0 0.0
    %1567 = vmatprep.subr.mxu0 0.0
    %1568 = vmatpush1.msra.mxu0 0.0
    %1569 = vmatprep.subr.mxu0 0.0
    %1570 = vmatpush1.msra.mxu0 0.0
    %1571 = vmatprep.subr.mxu0 0.0
    %1572 = vmatpush1.msra.mxu0 0.0
    %1573 = vmatprep.subr.mxu0 0.0
    %1574 = vmatpush1.msra.mxu0 0.0
    %1575 = vmatprep.subr.mxu0 0.0
    %1576 = vmatpush1.msra.mxu0 0.0
    %1577 = vmatprep.subr.mxu0 0.0
    %1578 = vmatpush1.msra.mxu0 %v1539
    %1579 = vmatprep.subr.mxu0 0.0
    %1580 = vmatpush1.msra.mxu0 %v1538
    %1581 = vmatprep.subr.mxu0 0.0
    %1582 = vmatpush1.msra.mxu0 %v1537
    %1583 = vmatprep.subr.mxu0 0.0
    %1584 = vmatpush1.msra.mxu0 %v1536
    %1585 = vmatprep.subr.mxu0 0.0
    %1586 = vmatpush2.msra.mxu0 0.0
    %1587 = vmatprep.subr.mxu0 0.0
    %1588 = vmatpush2.msra.mxu0 0.0
    %1589 = vmatprep.subr.mxu0 0.0
    %1590 = vmatpush2.msra.mxu0 0.0
    %1591 = vmatprep.subr.mxu0 0.0
    %1592 = vmatpush2.msra.mxu0 0.0
    %1593 = vmatprep.subr.mxu0 0.0
    %1594 = vmatpush2.msra.mxu0 0.0
    %1595 = vmatprep.subr.mxu0 0.0
    %1596 = vmatpush2.msra.mxu0 0.0
    %1597 = vmatprep.subr.mxu0 0.0
    %1598 = vmatpush2.msra.mxu0 0.0
    %1599 = vmatprep.subr.mxu0 0.0
    %1600 = vmatpush2.msra.mxu0 0.0
    %1601 = vmatprep.subr.mxu0 0.0
    %1602 = vmatpush2.msra.mxu0 0.0
    %1603 = vmatprep.subr.mxu0 0.0
    %1604 = vmatpush2.msra.mxu0 0.0
    %1605 = vmatprep.subr.mxu0 0.0
    %1606 = vmatpush2.msra.mxu0 0.0
    %1607 = vmatprep.subr.mxu0 0.0
    %1608 = vmatpush2.msra.mxu0 0.0
    %1609 = vmatprep.subr.mxu0 0.0
    %1610 = vmatpush2.msra.mxu0 0.0
    %1611 = vmatprep.subr.mxu0 0.0
    %1612 = vmatpush2.msra.mxu0 0.0
    %1613 = vmatprep.subr.mxu0 0.0
    %1614 = vmatpush2.msra.mxu0 0.0
    %1615 = vmatprep.subr.mxu0 0.0
    %1616 = vmatpush2.msra.mxu0 0.0
    %1617 = vmatprep.mubr.f32.mxu0 0.0
    %1618 = vmatmul.mubr.f32.gmra.mxu0 %v1548
    %v1619 = vpop.f32.mrf.mxu0
    %v1620 = vadd.f32 %v1545, %v1619
    %v1621 = vpop.f32.mrf.mxu0
    %1622 = vmatprep.mubr.f32.mxu0 0.0
    %1623 = vmatmul.mubr.f32.gmra.mxu0 %v1551
    %v1624 = vpop.f32.mrf.mxu0
    %v1625 = vadd.f32 %v1545, %v1624
    %v1626 = vpop.f32.mrf.mxu0
    %1627 = vdwg.mxu0
    %v1628 = vmul.f32 %v1620, 0.5
    %v1629 = vmul.f32 %v1625, 0.5
    %v1630 = vmul.f32 %v1620, 0.044715
    %v1631 = vmul.f32 %v1625, 0.044715
    %v1632 = vmul.f32 %v1630, %v1620
    %v1633 = vmul.f32 %v1631, %v1625
    %v1634 = vmul.f32 %v1632, %v1620
    %v1635 = vmul.f32 %v1633, %v1625
    %v1636 = vadd.f32 %v1620, %v1634
    %v1637 = vadd.f32 %v1625, %v1635
    %v1638 = vmul.f32 %v1636, 0.7978846
    %v1639 = vmul.f32 %v1637, 0.7978846
    %v1640 = vtanh.pop %v1638
    %v1641 = vtanh.pop %v1639
    %v1642 = vadd.f32 %v1640, 1.0
    %v1643 = vadd.f32 %v1641, 1.0
    %v1644 = vmul.f32 %v1628, %v1642
    %v1645 = vmul.f32 %v1629, %v1643
    %v1646 = vld [vmem:[%s16] sm:$0xff]
    %v1647 = vld [vmem:[%s16 + $0x8] sm:$0xff]
    %v1648 = vld [vmem:[%s16 + $0x10] sm:$0xff]
    %v1649 = vld [vmem:[%s16 + $0x18] sm:$0xff]
    %v1650 = vld [vmem:[%s16 + $0x20] sm:$0xff]
    %v1651 = vld [vmem:[%s16 + $0x28] sm:$0xff]
    %v1652 = vld [vmem:[%s16 + $0x30] sm:$0xff]
    %v1653 = vld [vmem:[%s16 + $0x38] sm:$0xff]
    %v1654 = vld [vmem:[%s17] sm:$0x1]
    %v1656 = vlaneseq
    %v1657 = vshrl.u32 %v1656, 7
    %v1658 = vsub.s32 0, %v1657
    %v1659 = vrot.slane %v1654, %v1658
    %vm1661 = vcmask 523264
    %v1663 = vsel %vm1661, %v1644, 0
    %v1666 = vsel %vm1661, %v1645, 0
    %1668 = vmatprep.subr.mxu0 0.0
    %1669 = vmatpush1.msra.mxu0 0.0
    %1670 = vmatprep.subr.mxu0 0.0
    %1671 = vmatpush1.msra.mxu0 0.0
    %1672 = vmatprep.subr.mxu0 0.0
    %1673 = vmatpush1.msra.mxu0 0.0
    %1674 = vmatprep.subr.mxu0 0.0
    %1675 = vmatpush1.msra.mxu0 0.0
    %1676 = vmatprep.subr.mxu0 0.0
    %1677 = vmatpush1.msra.mxu0 0.0
    %1678 = vmatprep.subr.mxu0 0.0
    %1679 = vmatpush1.msra.mxu0 0.0
    %1680 = vmatprep.subr.mxu0 0.0
    %1681 = vmatpush1.msra.mxu0 0.0
    %1682 = vmatprep.subr.mxu0 0.0
    %1683 = vmatpush1.msra.mxu0 0.0
    %1684 = vmatprep.subr.mxu0 0.0
    %1685 = vmatpush1.msra.mxu0 %v1653
    %1686 = vmatprep.subr.mxu0 0.0
    %1687 = vmatpush1.msra.mxu0 %v1652
    %1688 = vmatprep.subr.mxu0 0.0
    %1689 = vmatpush1.msra.mxu0 %v1651
    %1690 = vmatprep.subr.mxu0 0.0
    %1691 = vmatpush1.msra.mxu0 %v1650
    %1692 = vmatprep.subr.mxu0 0.0
    %1693 = vmatpush1.msra.mxu0 %v1649
    %1694 = vmatprep.subr.mxu0 0.0
    %1695 = vmatpush1.msra.mxu0 %v1648
    %1696 = vmatprep.subr.mxu0 0.0
    %1697 = vmatpush1.msra.mxu0 %v1647
    %1698 = vmatprep.subr.mxu0 0.0
    %1699 = vmatpush1.msra.mxu0 %v1646
    %1700 = vmatprep.subr.mxu0 0.0
    %1701 = vmatpush2.msra.mxu0 0.0
    %1702 = vmatprep.subr.mxu0 0.0
    %1703 = vmatpush2.msra.mxu0 0.0
    %1704 = vmatprep.subr.mxu0 0.0
    %1705 = vmatpush2.msra.mxu0 0.0
    %1706 = vmatprep.subr.mxu0 0.0
    %1707 = vmatpush2.msra.mxu0 0.0
    %1708 = vmatprep.subr.mxu0 0.0
    %1709 = vmatpush2.msra.mxu0 0.0
    %1710 = vmatprep.subr.mxu0 0.0
    %1711 = vmatpush2.msra.mxu0 0.0
    %1712 = vmatprep.subr.mxu0 0.0
    %1713 = vmatpush2.msra.mxu0 0.0
    %1714 = vmatprep.subr.mxu0 0.0
    %1715 = vmatpush2.msra.mxu0 0.0
    %1716 = vmatprep.subr.mxu0 0.0
    %1717 = vmatpush2.msra.mxu0 0.0
    %1718 = vmatprep.subr.mxu0 0.0
    %1719 = vmatpush2.msra.mxu0 0.0
    %1720 = vmatprep.subr.mxu0 0.0
    %1721 = vmatpush2.msra.mxu0 0.0
    %1722 = vmatprep.subr.mxu0 0.0
    %1723 = vmatpush2.msra.mxu0 0.0
    %1724 = vmatprep.subr.mxu0 0.0
    %1725 = vmatpush2.msra.mxu0 0.0
    %1726 = vmatprep.subr.mxu0 0.0
    %1727 = vmatpush2.msra.mxu0 0.0
    %1728 = vmatprep.subr.mxu0 0.0
    %1729 = vmatpush2.msra.mxu0 0.0
    %1730 = vmatprep.subr.mxu0 0.0
    %1731 = vmatpush2.msra.mxu0 0.0
    %1732 = vmatprep.mubr.f32.mxu0 0.0
    %1733 = vmatmul.mubr.f32.gmra.mxu0 %v1663
    %v1734 = vpop.f32.mrf.mxu0
    %v1735 = vadd.f32 %v1659, %v1734
    %v1736 = vpop.f32.mrf.mxu0
    %1737 = vmatprep.mubr.f32.mxu0 0.0
    %1738 = vmatmul.mubr.f32.gmra.mxu0 %v1666
    %v1739 = vpop.f32.mrf.mxu0
    %v1740 = vadd.f32 %v1659, %v1739
    %v1741 = vpop.f32.mrf.mxu0
    %1742 = vdwg.mxu0
    %v1743 = vadd.f32 %v1534, %v1735
    %v1744 = vadd.f32 %v1535, %v1740
    %v1745 = vld [vmem:[%s18] sm:$0x1]
    %v1746 = vld [vmem:[%s19] sm:$0x1]
    %v1747 = vsel %vm193, %v1743, 0.0
    %1748 = vadd.xlane.f32.xlu0 %v1747
    %v1749 = vpop.xlane.xlu0 %1748
    %v1750 = vsel %vm193, %v1744, 0.0
    %1751 = vadd.xlane.f32.xlu0 %v1750
    %v1752 = vpop.xlane.xlu0 %1751
    %v1753 = vmul.f32 %v1749, %v200
    %v1754 = vmul.f32 %v1752, %v200
    %v1755 = vsub.f32 %v1743, %v1753
    %v1756 = vsub.f32 %v1744, %v1754
    %v1757 = vmul.f32 %v1755, %v1755
    %v1758 = vmul.f32 %v1756, %v1756
    %v1759 = vsel %vm193, %v1757, 0.0
    %1760 = vadd.xlane.f32.xlu0 %v1759
    %v1761 = vpop.xlane.xlu0 %1760
    %v1762 = vsel %vm193, %v1758, 0.0
    %1763 = vadd.xlane.f32.xlu0 %v1762
    %v1764 = vpop.xlane.xlu0 %1763
    %v1765 = vmul.f32 %v1761, %v200
    %v1766 = vmul.f32 %v1764, %v200
    %v1767 = vadd.f32 %v1765, 1e-12
    %v1768 = vadd.f32 %v1766, 1e-12
    %v1769 = vrsqrt.pop %v1767
    %v1770 = vrsqrt.pop %v1768
    %v1771 = vmul.f32 %v1755, %v1769
    %v1772 = vmul.f32 %v1756, %v1770
    %v1774 = vlaneseq
    %v1775 = vshrl.u32 %v1774, 7
    %v1776 = vsub.s32 0, %v1775
    %v1777 = vrot.slane %v1745, %v1776
    %v1779 = vmul.f32 %v1771, %v1777
    %v1780 = vmul.f32 %v1772, %v1777
    %v1782 = vlaneseq
    %v1783 = vshrl.u32 %v1782, 7
    %v1784 = vsub.s32 0, %v1783
    %v1785 = vrot.slane %v1746, %v1784
    %v1787 = vadd.f32 %v1779, %v1785
    %v1788 = vadd.f32 %v1780, %v1785
    %s1789 = scalar_lea.vmem %s8, 32
    %v1790 = vld [vmem:[%s1789] sm:$0xff]
    %v1791 = vld [vmem:[%s1789 + $0x8] sm:$0xff]
    %v1792 = vld [vmem:[%s1789 + $0x10] sm:$0xff]
    %v1793 = vld [vmem:[%s1789 + $0x18] sm:$0xff]
    %s1794 = scalar_lea.vmem %s9, 1
    %v1795 = vld [vmem:[%s1794] sm:$0x1]
    %v1797 = vlaneseq
    %v1798 = vshrl.u32 %v1797, 7
    %v1799 = vsub.s32 0, %v1798
    %v1800 = vrot.slane %v1795, %v1799
    %v1803 = vsel %vm193, %v1787, 0
    %v1806 = vsel %vm193, %v1788, 0
    %1808 = vmatprep.subr.mxu0 0.0
    %1809 = vmatpush1.msra.mxu0 0.0
    %1810 = vmatprep.subr.mxu0 0.0
    %1811 = vmatpush1.msra.mxu0 0.0
    %1812 = vmatprep.subr.mxu0 0.0
    %1813 = vmatpush1.msra.mxu0 0.0
    %1814 = vmatprep.subr.mxu0 0.0
    %1815 = vmatpush1.msra.mxu0 0.0
    %1816 = vmatprep.subr.mxu0 0.0
    %1817 = vmatpush1.msra.mxu0 0.0
    %1818 = vmatprep.subr.mxu0 0.0
    %1819 = vmatpush1.msra.mxu0 0.0
    %1820 = vmatprep.subr.mxu0 0.0
    %1821 = vmatpush1.msra.mxu0 0.0
    %1822 = vmatprep.subr.mxu0 0.0
    %1823 = vmatpush1.msra.mxu0 0.0
    %1824 = vmatprep.subr.mxu0 0.0
    %1825 = vmatpush1.msra.mxu0 0.0
    %1826 = vmatprep.subr.mxu0 0.0
    %1827 = vmatpush1.msra.mxu0 0.0
    %1828 = vmatprep.subr.mxu0 0.0
    %1829 = vmatpush1.msra.mxu0 0.0
    %1830 = vmatprep.subr.mxu0 0.0
    %1831 = vmatpush1.msra.mxu0 0.0
    %1832 = vmatprep.subr.mxu0 0.0
    %1833 = vmatpush1.msra.mxu0 %v1793
    %1834 = vmatprep.subr.mxu0 0.0
    %1835 = vmatpush1.msra.mxu0 %v1792
    %1836 = vmatprep.subr.mxu0 0.0
    %1837 = vmatpush1.msra.mxu0 %v1791
    %1838 = vmatprep.subr.mxu0 0.0
    %1839 = vmatpush1.msra.mxu0 %v1790
    %1840 = vmatprep.subr.mxu0 0.0
    %1841 = vmatpush2.msra.mxu0 0.0
    %1842 = vmatprep.subr.mxu0 0.0
    %1843 = vmatpush2.msra.mxu0 0.0
    %1844 = vmatprep.subr.mxu0 0.0
    %1845 = vmatpush2.msra.mxu0 0.0
    %1846 = vmatprep.subr.mxu0 0.0
    %1847 = vmatpush2.msra.mxu0 0.0
    %1848 = vmatprep.subr.mxu0 0.0
    %1849 = vmatpush2.msra.mxu0 0.0
    %1850 = vmatprep.subr.mxu0 0.0
    %1851 = vmatpush2.msra.mxu0 0.0
    %1852 = vmatprep.subr.mxu0 0.0
    %1853 = vmatpush2.msra.mxu0 0.0
    %1854 = vmatprep.subr.mxu0 0.0
    %1855 = vmatpush2.msra.mxu0 0.0
    %1856 = vmatprep.subr.mxu0 0.0
    %1857 = vmatpush2.msra.mxu0 0.0
    %1858 = vmatprep.subr.mxu0 0.0
    %1859 = vmatpush2.msra.mxu0 0.0
    %1860 = vmatprep.subr.mxu0 0.0
    %1861 = vmatpush2.msra.mxu0 0.0
    %1862 = vmatprep.subr.mxu0 0.0
    %1863 = vmatpush2.msra.mxu0 0.0
    %1864 = vmatprep.subr.mxu0 0.0
    %1865 = vmatpush2.msra.mxu0 0.0
    %1866 = vmatprep.subr.mxu0 0.0
    %1867 = vmatpush2.msra.mxu0 0.0
    %1868 = vmatprep.subr.mxu0 0.0
    %1869 = vmatpush2.msra.mxu0 0.0
    %1870 = vmatprep.subr.mxu0 0.0
    %1871 = vmatpush2.msra.mxu0 0.0
    %1872 = vmatprep.mubr.f32.mxu0 0.0
    %1873 = vmatmul.mubr.f32.gmra.mxu0 %v1803
    %v1874 = vpop.f32.mrf.mxu0
    %v1875 = vadd.f32 %v1800, %v1874
    %v1876 = vpop.f32.mrf.mxu0
    %1877 = vmatprep.mubr.f32.mxu0 0.0
    %1878 = vmatmul.mubr.f32.gmra.mxu0 %v1806
    %v1879 = vpop.f32.mrf.mxu0
    %v1880 = vadd.f32 %v1800, %v1879
    %v1881 = vpop.f32.mrf.mxu0
    %1882 = vdwg.mxu0
    %1885 = vrot.lane.b32.xlu0 %v1875, 120
    %v1886 = vpop.permute.xlu0 %1885
    %1887 = vrot.lane.b32.xlu0 %v1880, 120
    %v1888 = vpop.permute.xlu0 %1887
    %1889 = vrot.lane.b32.xlu0 %v1875, 112
    %v1890 = vpop.permute.xlu0 %1889
    %1891 = vrot.lane.b32.xlu0 %v1880, 112
    %v1892 = vpop.permute.xlu0 %1891
    %1893 = vrot.lane.b32.xlu0 %v1875, 104
    %v1894 = vpop.permute.xlu0 %1893
    %1895 = vrot.lane.b32.xlu0 %v1880, 104
    %v1896 = vpop.permute.xlu0 %1895
    %1897 = vrot.lane.b32.xlu0 %v1875, 96
    %v1898 = vpop.permute.xlu0 %1897
    %1899 = vrot.lane.b32.xlu0 %v1880, 96
    %v1900 = vpop.permute.xlu0 %1899
    %v1901 = vsel %vm349, %v1875, 0
    %v1903 = vsel %vm349, %v1880, 0
    %v1905 = vsel %vm349, %v1898, 0
    %v1907 = vsel %vm349, %v1900, 0
    %1909 = vmatprep.subr.mxu0 0.0
    %1910 = vmatpush1.xpose.msra.mxu0 0.0
    %1911 = vmatprep.subr.mxu0 0.0
    %1912 = vmatpush1.xpose.msra.mxu0 0.0
    %1913 = vmatprep.subr.mxu0 0.0
    %1914 = vmatpush1.xpose.msra.mxu0 0.0
    %1915 = vmatprep.subr.mxu0 0.0
    %1916 = vmatpush1.xpose.msra.mxu0 0.0
    %1917 = vmatprep.subr.mxu0 0.0
    %1918 = vmatpush1.xpose.msra.mxu0 0.0
    %1919 = vmatprep.subr.mxu0 0.0
    %1920 = vmatpush1.xpose.msra.mxu0 0.0
    %1921 = vmatprep.subr.mxu0 0.0
    %1922 = vmatpush1.xpose.msra.mxu0 0.0
    %1923 = vmatprep.subr.mxu0 0.0
    %1924 = vmatpush1.xpose.msra.mxu0 0.0
    %1925 = vmatprep.subr.mxu0 0.0
    %1926 = vmatpush1.xpose.msra.mxu0 0.0
    %1927 = vmatprep.subr.mxu0 0.0
    %1928 = vmatpush1.xpose.msra.mxu0 0.0
    %1929 = vmatprep.subr.mxu0 0.0
    %1930 = vmatpush1.xpose.msra.mxu0 0.0
    %1931 = vmatprep.subr.mxu0 0.0
    %1932 = vmatpush1.xpose.msra.mxu0 0.0
    %1933 = vmatprep.subr.mxu0 0.0
    %1934 = vmatpush1.xpose.msra.mxu0 0.0
    %1935 = vmatprep.subr.mxu0 0.0
    %1936 = vmatpush1.xpose.msra.mxu0 0.0
    %1937 = vmatprep.subr.mxu0 0.0
    %1938 = vmatpush1.xpose.msra.mxu0 %v1907
    %1939 = vmatprep.subr.mxu0 0.0
    %1940 = vmatpush1.xpose.msra.mxu0 %v1905
    %1941 = vmatprep.subr.mxu0 0.0
    %1942 = vmatpush2.xpose.msra.mxu0 0.0
    %1943 = vmatprep.subr.mxu0 0.0
    %1944 = vmatpush2.xpose.msra.mxu0 0.0
    %1945 = vmatprep.subr.mxu0 0.0
    %1946 = vmatpush2.xpose.msra.mxu0 0.0
    %1947 = vmatprep.subr.mxu0 0.0
    %1948 = vmatpush2.xpose.msra.mxu0 0.0
    %1949 = vmatprep.subr.mxu0 0.0
    %1950 = vmatpush2.xpose.msra.mxu0 0.0
    %1951 = vmatprep.subr.mxu0 0.0
    %1952 = vmatpush2.xpose.msra.mxu0 0.0
    %1953 = vmatprep.subr.mxu0 0.0
    %1954 = vmatpush2.xpose.msra.mxu0 0.0
    %1955 = vmatprep.subr.mxu0 0.0
    %1956 = vmatpush2.xpose.msra.mxu0 0.0
    %1957 = vmatprep.subr.mxu0 0.0
    %1958 = vmatpush2.xpose.msra.mxu0 0.0
    %1959 = vmatprep.subr.mxu0 0.0
    %1960 = vmatpush2.xpose.msra.mxu0 0.0
    %1961 = vmatprep.subr.mxu0 0.0
    %1962 = vmatpush2.xpose.msra.mxu0 0.0
    %1963 = vmatprep.subr.mxu0 0.0
    %1964 = vmatpush2.xpose.msra.mxu0 0.0
    %1965 = vmatprep.subr.mxu0 0.0
    %1966 = vmatpush2.xpose.msra.mxu0 0.0
    %1967 = vmatprep.subr.mxu0 0.0
    %1968 = vmatpush2.xpose.msra.mxu0 0.0
    %1969 = vmatprep.subr.mxu0 0.0
    %1970 = vmatpush2.xpose.msra.mxu0 0.0
    %1971 = vmatprep.subr.mxu0 0.0
    %1972 = vmatpush2.xpose.msra.mxu0 0.0
    %1973 = vmatprep.mubr.f32.mxu0 0.0
    %1974 = vmatmul.mubr.f32.gmra.mxu0 %v1901
    %v1975 = vpop.f32.mrf.mxu0
    %v1976 = vadd.f32 0.0, %v1975
    %v1977 = vpop.f32.mrf.mxu0
    %1978 = vmatprep.mubr.f32.mxu0 0.0
    %1979 = vmatmul.mubr.f32.gmra.mxu0 %v1903
    %v1980 = vpop.f32.mrf.mxu0
    %v1981 = vadd.f32 0.0, %v1980
    %v1982 = vpop.f32.mrf.mxu0
    %1983 = vdwg.mxu0
    %1984 = vrot.lane.b32.xlu0 %v1886, 96
    %v1985 = vpop.permute.xlu0 %1984
    %1986 = vrot.lane.b32.xlu0 %v1888, 96
    %v1987 = vpop.permute.xlu0 %1986
    %v1988 = vsel %vm349, %v1886, 0
    %v1990 = vsel %vm349, %v1888, 0
    %v1992 = vsel %vm349, %v1985, 0
    %v1994 = vsel %vm349, %v1987, 0
    %1996 = vmatprep.subr.mxu0 0.0
    %1997 = vmatpush1.xpose.msra.mxu0 0.0
    %1998 = vmatprep.subr.mxu0 0.0
    %1999 = vmatpush1.xpose.msra.mxu0 0.0
    %2000 = vmatprep.subr.mxu0 0.0
    %2001 = vmatpush1.xpose.msra.mxu0 0.0
    %2002 = vmatprep.subr.mxu0 0.0
    %2003 = vmatpush1.xpose.msra.mxu0 0.0
    %2004 = vmatprep.subr.mxu0 0.0
    %2005 = vmatpush1.xpose.msra.mxu0 0.0
    %2006 = vmatprep.subr.mxu0 0.0
    %2007 = vmatpush1.xpose.msra.mxu0 0.0
    %2008 = vmatprep.subr.mxu0 0.0
    %2009 = vmatpush1.xpose.msra.mxu0 0.0
    %2010 = vmatprep.subr.mxu0 0.0
    %2011 = vmatpush1.xpose.msra.mxu0 0.0
    %2012 = vmatprep.subr.mxu0 0.0
    %2013 = vmatpush1.xpose.msra.mxu0 0.0
    %2014 = vmatprep.subr.mxu0 0.0
    %2015 = vmatpush1.xpose.msra.mxu0 0.0
    %2016 = vmatprep.subr.mxu0 0.0
    %2017 = vmatpush1.xpose.msra.mxu0 0.0
    %2018 = vmatprep.subr.mxu0 0.0
    %2019 = vmatpush1.xpose.msra.mxu0 0.0
    %2020 = vmatprep.subr.mxu0 0.0
    %2021 = vmatpush1.xpose.msra.mxu0 0.0
    %2022 = vmatprep.subr.mxu0 0.0
    %2023 = vmatpush1.xpose.msra.mxu0 0.0
    %2024 = vmatprep.subr.mxu0 0.0
    %2025 = vmatpush1.xpose.msra.mxu0 %v1994
    %2026 = vmatprep.subr.mxu0 0.0
    %2027 = vmatpush1.xpose.msra.mxu0 %v1992
    %2028 = vmatprep.subr.mxu0 0.0
    %2029 = vmatpush2.xpose.msra.mxu0 0.0
    %2030 = vmatprep.subr.mxu0 0.0
    %2031 = vmatpush2.xpose.msra.mxu0 0.0
    %2032 = vmatprep.subr.mxu0 0.0
    %2033 = vmatpush2.xpose.msra.mxu0 0.0
    %2034 = vmatprep.subr.mxu0 0.0
    %2035 = vmatpush2.xpose.msra.mxu0 0.0
    %2036 = vmatprep.subr.mxu0 0.0
    %2037 = vmatpush2.xpose.msra.mxu0 0.0
    %2038 = vmatprep.subr.mxu0 0.0
    %2039 = vmatpush2.xpose.msra.mxu0 0.0
    %2040 = vmatprep.subr.mxu0 0.0
    %2041 = vmatpush2.xpose.msra.mxu0 0.0
    %2042 = vmatprep.subr.mxu0 0.0
    %2043 = vmatpush2.xpose.msra.mxu0 0.0
    %2044 = vmatprep.subr.mxu0 0.0
    %2045 = vmatpush2.xpose.msra.mxu0 0.0
    %2046 = vmatprep.subr.mxu0 0.0
    %2047 = vmatpush2.xpose.msra.mxu0 0.0
    %2048 = vmatprep.subr.mxu0 0.0
    %2049 = vmatpush2.xpose.msra.mxu0 0.0
    %2050 = vmatprep.subr.mxu0 0.0
    %2051 = vmatpush2.xpose.msra.mxu0 0.0
    %2052 = vmatprep.subr.mxu0 0.0
    %2053 = vmatpush2.xpose.msra.mxu0 0.0
    %2054 = vmatprep.subr.mxu0 0.0
    %2055 = vmatpush2.xpose.msra.mxu0 0.0
    %2056 = vmatprep.subr.mxu0 0.0
    %2057 = vmatpush2.xpose.msra.mxu0 0.0
    %2058 = vmatprep.subr.mxu0 0.0
    %2059 = vmatpush2.xpose.msra.mxu0 0.0
    %2060 = vmatprep.mubr.f32.mxu0 0.0
    %2061 = vmatmul.mubr.f32.gmra.mxu0 %v1988
    %v2062 = vpop.f32.mrf.mxu0
    %v2063 = vadd.f32 0.0, %v2062
    %v2064 = vpop.f32.mrf.mxu0
    %2065 = vmatprep.mubr.f32.mxu0 0.0
    %2066 = vmatmul.mubr.f32.gmra.mxu0 %v1990
    %v2067 = vpop.f32.mrf.mxu0
    %v2068 = vadd.f32 0.0, %v2067
    %v2069 = vpop.f32.mrf.mxu0
    %2070 = vdwg.mxu0
    %2071 = vrot.lane.b32.xlu0 %v1890, 96
    %v2072 = vpop.permute.xlu0 %2071
    %2073 = vrot.lane.b32.xlu0 %v1892, 96
    %v2074 = vpop.permute.xlu0 %2073
    %v2075 = vsel %vm349, %v1890, 0
    %v2077 = vsel %vm349, %v1892, 0
    %v2079 = vsel %vm349, %v2072, 0
    %v2081 = vsel %vm349, %v2074, 0
    %2083 = vmatprep.subr.mxu0 0.0
    %2084 = vmatpush1.xpose.msra.mxu0 0.0
    %2085 = vmatprep.subr.mxu0 0.0
    %2086 = vmatpush1.xpose.msra.mxu0 0.0
    %2087 = vmatprep.subr.mxu0 0.0
    %2088 = vmatpush1.xpose.msra.mxu0 0.0
    %2089 = vmatprep.subr.mxu0 0.0
    %2090 = vmatpush1.xpose.msra.mxu0 0.0
    %2091 = vmatprep.subr.mxu0 0.0
    %2092 = vmatpush1.xpose.msra.mxu0 0.0
    %2093 = vmatprep.subr.mxu0 0.0
    %2094 = vmatpush1.xpose.msra.mxu0 0.0
    %2095 = vmatprep.subr.mxu0 0.0
    %2096 = vmatpush1.xpose.msra.mxu0 0.0
    %2097 = vmatprep.subr.mxu0 0.0
    %2098 = vmatpush1.xpose.msra.mxu0 0.0
    %2099 = vmatprep.subr.mxu0 0.0
    %2100 = vmatpush1.xpose.msra.mxu0 0.0
    %2101 = vmatprep.subr.mxu0 0.0
    %2102 = vmatpush1.xpose.msra.mxu0 0.0
    %2103 = vmatprep.subr.mxu0 0.0
    %2104 = vmatpush1.xpose.msra.mxu0 0.0
    %2105 = vmatprep.subr.mxu0 0.0
    %2106 = vmatpush1.xpose.msra.mxu0 0.0
    %2107 = vmatprep.subr.mxu0 0.0
    %2108 = vmatpush1.xpose.msra.mxu0 0.0
    %2109 = vmatprep.subr.mxu0 0.0
    %2110 = vmatpush1.xpose.msra.mxu0 0.0
    %2111 = vmatprep.subr.mxu0 0.0
    %2112 = vmatpush1.xpose.msra.mxu0 %v2081
    %2113 = vmatprep.subr.mxu0 0.0
    %2114 = vmatpush1.xpose.msra.mxu0 %v2079
    %2115 = vmatprep.subr.mxu0 0.0
    %2116 = vmatpush2.xpose.msra.mxu0 0.0
    %2117 = vmatprep.subr.mxu0 0.0
    %2118 = vmatpush2.xpose.msra.mxu0 0.0
    %2119 = vmatprep.subr.mxu0 0.0
    %2120 = vmatpush2.xpose.msra.mxu0 0.0
    %2121 = vmatprep.subr.mxu0 0.0
    %2122 = vmatpush2.xpose.msra.mxu0 0.0
    %2123 = vmatprep.subr.mxu0 0.0
    %2124 = vmatpush2.xpose.msra.mxu0 0.0
    %2125 = vmatprep.subr.mxu0 0.0
    %2126 = vmatpush2.xpose.msra.mxu0 0.0
    %2127 = vmatprep.subr.mxu0 0.0
    %2128 = vmatpush2.xpose.msra.mxu0 0.0
    %2129 = vmatprep.subr.mxu0 0.0
    %2130 = vmatpush2.xpose.msra.mxu0 0.0
    %2131 = vmatprep.subr.mxu0 0.0
    %2132 = vmatpush2.xpose.msra.mxu0 0.0
    %2133 = vmatprep.subr.mxu0 0.0
    %2134 = vmatpush2.xpose.msra.mxu0 0.0
    %2135 = vmatprep.subr.mxu0 0.0
    %2136 = vmatpush2.xpose.msra.mxu0 0.0
    %2137 = vmatprep.subr.mxu0 0.0
    %2138 = vmatpush2.xpose.msra.mxu0 0.0
    %2139 = vmatprep.subr.mxu0 0.0
    %2140 = vmatpush2.xpose.msra.mxu0 0.0
    %2141 = vmatprep.subr.mxu0 0.0
    %2142 = vmatpush2.xpose.msra.mxu0 0.0
    %2143 = vmatprep.subr.mxu0 0.0
    %2144 = vmatpush2.xpose.msra.mxu0 0.0
    %2145 = vmatprep.subr.mxu0 0.0
    %2146 = vmatpush2.xpose.msra.mxu0 0.0
    %2147 = vmatprep.mubr.f32.mxu0 0.0
    %2148 = vmatmul.mubr.f32.gmra.mxu0 %v2075
    %v2149 = vpop.f32.mrf.mxu0
    %v2150 = vadd.f32 0.0, %v2149
    %v2151 = vpop.f32.mrf.mxu0
    %2152 = vmatprep.mubr.f32.mxu0 0.0
    %2153 = vmatmul.mubr.f32.gmra.mxu0 %v2077
    %v2154 = vpop.f32.mrf.mxu0
    %v2155 = vadd.f32 0.0, %v2154
    %v2156 = vpop.f32.mrf.mxu0
    %2157 = vdwg.mxu0
    %2158 = vrot.lane.b32.xlu0 %v1894, 96
    %v2159 = vpop.permute.xlu0 %2158
    %2160 = vrot.lane.b32.xlu0 %v1896, 96
    %v2161 = vpop.permute.xlu0 %2160
    %v2162 = vsel %vm349, %v1894, 0
    %v2164 = vsel %vm349, %v1896, 0
    %v2166 = vsel %vm349, %v2159, 0
    %v2168 = vsel %vm349, %v2161, 0
    %2170 = vmatprep.subr.mxu0 0.0
    %2171 = vmatpush1.xpose.msra.mxu0 0.0
    %2172 = vmatprep.subr.mxu0 0.0
    %2173 = vmatpush1.xpose.msra.mxu0 0.0
    %2174 = vmatprep.subr.mxu0 0.0
    %2175 = vmatpush1.xpose.msra.mxu0 0.0
    %2176 = vmatprep.subr.mxu0 0.0
    %2177 = vmatpush1.xpose.msra.mxu0 0.0
    %2178 = vmatprep.subr.mxu0 0.0
    %2179 = vmatpush1.xpose.msra.mxu0 0.0
    %2180 = vmatprep.subr.mxu0 0.0
    %2181 = vmatpush1.xpose.msra.mxu0 0.0
    %2182 = vmatprep.subr.mxu0 0.0
    %2183 = vmatpush1.xpose.msra.mxu0 0.0
    %2184 = vmatprep.subr.mxu0 0.0
    %2185 = vmatpush1.xpose.msra.mxu0 0.0
    %2186 = vmatprep.subr.mxu0 0.0
    %2187 = vmatpush1.xpose.msra.mxu0 0.0
    %2188 = vmatprep.subr.mxu0 0.0
    %2189 = vmatpush1.xpose.msra.mxu0 0.0
    %2190 = vmatprep.subr.mxu0 0.0
    %2191 = vmatpush1.xpose.msra.mxu0 0.0
    %2192 = vmatprep.subr.mxu0 0.0
    %2193 = vmatpush1.xpose.msra.mxu0 0.0
    %2194 = vmatprep.subr.mxu0 0.0
    %2195 = vmatpush1.xpose.msra.mxu0 0.0
    %2196 = vmatprep.subr.mxu0 0.0
    %2197 = vmatpush1.xpose.msra.mxu0 0.0
    %2198 = vmatprep.subr.mxu0 0.0
    %2199 = vmatpush1.xpose.msra.mxu0 %v2168
    %2200 = vmatprep.subr.mxu0 0.0
    %2201 = vmatpush1.xpose.msra.mxu0 %v2166
    %2202 = vmatprep.subr.mxu0 0.0
    %2203 = vmatpush2.xpose.msra.mxu0 0.0
    %2204 = vmatprep.subr.mxu0 0.0
    %2205 = vmatpush2.xpose.msra.mxu0 0.0
    %2206 = vmatprep.subr.mxu0 0.0
    %2207 = vmatpush2.xpose.msra.mxu0 0.0
    %2208 = vmatprep.subr.mxu0 0.0
    %2209 = vmatpush2.xpose.msra.mxu0 0.0
    %2210 = vmatprep.subr.mxu0 0.0
    %2211 = vmatpush2.xpose.msra.mxu0 0.0
    %2212 = vmatprep.subr.mxu0 0.0
    %2213 = vmatpush2.xpose.msra.mxu0 0.0
    %2214 = vmatprep.subr.mxu0 0.0
    %2215 = vmatpush2.xpose.msra.mxu0 0.0
    %2216 = vmatprep.subr.mxu0 0.0
    %2217 = vmatpush2.xpose.msra.mxu0 0.0
    %2218 = vmatprep.subr.mxu0 0.0
    %2219 = vmatpush2.xpose.msra.mxu0 0.0
    %2220 = vmatprep.subr.mxu0 0.0
    %2221 = vmatpush2.xpose.msra.mxu0 0.0
    %2222 = vmatprep.subr.mxu0 0.0
    %2223 = vmatpush2.xpose.msra.mxu0 0.0
    %2224 = vmatprep.subr.mxu0 0.0
    %2225 = vmatpush2.xpose.msra.mxu0 0.0
    %2226 = vmatprep.subr.mxu0 0.0
    %2227 = vmatpush2.xpose.msra.mxu0 0.0
    %2228 = vmatprep.subr.mxu0 0.0
    %2229 = vmatpush2.xpose.msra.mxu0 0.0
    %2230 = vmatprep.subr.mxu0 0.0
    %2231 = vmatpush2.xpose.msra.mxu0 0.0
    %2232 = vmatprep.subr.mxu0 0.0
    %2233 = vmatpush2.xpose.msra.mxu0 0.0
    %2234 = vmatprep.mubr.f32.mxu0 0.0
    %2235 = vmatmul.mubr.f32.gmra.mxu0 %v2162
    %v2236 = vpop.f32.mrf.mxu0
    %v2237 = vadd.f32 0.0, %v2236
    %v2238 = vpop.f32.mrf.mxu0
    %2239 = vmatprep.mubr.f32.mxu0 0.0
    %2240 = vmatmul.mubr.f32.gmra.mxu0 %v2164
    %v2241 = vpop.f32.mrf.mxu0
    %v2242 = vadd.f32 0.0, %v2241
    %v2243 = vpop.f32.mrf.mxu0
    %2244 = vdwg.mxu0
    %v2245 = vmul.f32 %v1976, 0.35355338
    %v2246 = vmul.f32 %v1981, 0.35355338
    %v2247 = vmul.f32 %v2063, 0.35355338
    %v2248 = vmul.f32 %v2068, 0.35355338
    %v2249 = vmul.f32 %v2150, 0.35355338
    %v2250 = vmul.f32 %v2155, 0.35355338
    %v2251 = vmul.f32 %v2237, 0.35355338
    %v2252 = vmul.f32 %v2242, 0.35355338
    %v2253 = vadd.f32 %v2245, %v237
    %v2254 = vadd.f32 %v2246, %v238
    %v2255 = vadd.f32 %v2247, %v237
    %v2256 = vadd.f32 %v2248, %v238
    %v2257 = vadd.f32 %v2249, %v237
    %v2258 = vadd.f32 %v2250, %v238
    %v2259 = vadd.f32 %v2251, %v237
    %v2260 = vadd.f32 %v2252, %v238
    %v2261 = vsel %vm710, %v2253, -inf
    %2262 = vmax.xlane.f32.xlu0 %v2261
    %v2263 = vpop.xlane.xlu0 %2262
    %v2264 = vsel %vm710, %v2254, -inf
    %2265 = vmax.xlane.f32.xlu0 %v2264
    %v2266 = vpop.xlane.xlu0 %2265
    %v2267 = vsel %vm710, %v2255, -inf
    %2268 = vmax.xlane.f32.xlu0 %v2267
    %v2269 = vpop.xlane.xlu0 %2268
    %v2270 = vsel %vm710, %v2256, -inf
    %2271 = vmax.xlane.f32.xlu0 %v2270
    %v2272 = vpop.xlane.xlu0 %2271
    %v2273 = vsel %vm710, %v2257, -inf
    %2274 = vmax.xlane.f32.xlu0 %v2273
    %v2275 = vpop.xlane.xlu0 %2274
    %v2276 = vsel %vm710, %v2258, -inf
    %2277 = vmax.xlane.f32.xlu0 %v2276
    %v2278 = vpop.xlane.xlu0 %2277
    %v2279 = vsel %vm710, %v2259, -inf
    %2280 = vmax.xlane.f32.xlu0 %v2279
    %v2281 = vpop.xlane.xlu0 %2280
    %v2282 = vsel %vm710, %v2260, -inf
    %2283 = vmax.xlane.f32.xlu0 %v2282
    %v2284 = vpop.xlane.xlu0 %2283
    %v2285 = vsub.f32 %v2253, %v2263
    %v2286 = vsub.f32 %v2254, %v2266
    %v2287 = vsub.f32 %v2255, %v2269
    %v2288 = vsub.f32 %v2256, %v2272
    %v2289 = vsub.f32 %v2257, %v2275
    %v2290 = vsub.f32 %v2258, %v2278
    %v2291 = vsub.f32 %v2259, %v2281
    %v2292 = vsub.f32 %v2260, %v2284
    %v2293 = vmul.f32 %v2285, 1.442695
    %v2294 = vpow.pop %v2293
    %v2295 = vmul.f32 %v2286, 1.442695
    %v2296 = vpow.pop %v2295
    %v2297 = vmul.f32 %v2287, 1.442695
    %v2298 = vpow.pop %v2297
    %v2299 = vmul.f32 %v2288, 1.442695
    %v2300 = vpow.pop %v2299
    %v2301 = vmul.f32 %v2289, 1.442695
    %v2302 = vpow.pop %v2301
    %v2303 = vmul.f32 %v2290, 1.442695
    %v2304 = vpow.pop %v2303
    %v2305 = vmul.f32 %v2291, 1.442695
    %v2306 = vpow.pop %v2305
    %v2307 = vmul.f32 %v2292, 1.442695
    %v2308 = vpow.pop %v2307
    %v2309 = vsel %vm710, %v2294, 0.0
    %2310 = vadd.xlane.f32.xlu0 %v2309
    %v2311 = vpop.xlane.xlu0 %2310
    %v2312 = vsel %vm710, %v2296, 0.0
    %2313 = vadd.xlane.f32.xlu0 %v2312
    %v2314 = vpop.xlane.xlu0 %2313
    %v2315 = vsel %vm710, %v2298, 0.0
    %2316 = vadd.xlane.f32.xlu0 %v2315
    %v2317 = vpop.xlane.xlu0 %2316
    %v2318 = vsel %vm710, %v2300, 0.0
    %2319 = vadd.xlane.f32.xlu0 %v2318
    %v2320 = vpop.xlane.xlu0 %2319
    %v2321 = vsel %vm710, %v2302, 0.0
    %2322 = vadd.xlane.f32.xlu0 %v2321
    %v2323 = vpop.xlane.xlu0 %2322
    %v2324 = vsel %vm710, %v2304, 0.0
    %2325 = vadd.xlane.f32.xlu0 %v2324
    %v2326 = vpop.xlane.xlu0 %2325
    %v2327 = vsel %vm710, %v2306, 0.0
    %2328 = vadd.xlane.f32.xlu0 %v2327
    %v2329 = vpop.xlane.xlu0 %2328
    %v2330 = vsel %vm710, %v2308, 0.0
    %2331 = vadd.xlane.f32.xlu0 %v2330
    %v2332 = vpop.xlane.xlu0 %2331
    %v2333 = vrcp.pop %v2311
    %v2334 = vrcp.pop %v2314
    %v2335 = vrcp.pop %v2317
    %v2336 = vrcp.pop %v2320
    %v2337 = vrcp.pop %v2323
    %v2338 = vrcp.pop %v2326
    %v2339 = vrcp.pop %v2329
    %v2340 = vrcp.pop %v2332
    %v2341 = vmul.f32 %v2294, %v2333
    %v2342 = vmul.f32 %v2296, %v2334
    %v2343 = vmul.f32 %v2298, %v2335
    %v2344 = vmul.f32 %v2300, %v2336
    %v2345 = vmul.f32 %v2302, %v2337
    %v2346 = vmul.f32 %v2304, %v2338
    %v2347 = vmul.f32 %v2306, %v2339
    %v2348 = vmul.f32 %v2308, %v2340
    %2349 = vrot.lane.b32.xlu0 %v1875, 64
    %v2350 = vpop.permute.xlu0 %2349
    %2351 = vrot.lane.b32.xlu0 %v1880, 64
    %v2352 = vpop.permute.xlu0 %2351
    %v2356 = vsel %vm710, %v2341, 0
    %v2359 = vsel %vm710, %v2342, 0
    %2361 = vmatprep.subr.mxu0 0.0
    %2362 = vmatpush1.msra.mxu0 0.0
    %2363 = vmatprep.subr.mxu0 0.0
    %2364 = vmatpush1.msra.mxu0 0.0
    %2365 = vmatprep.subr.mxu0 0.0
    %2366 = vmatpush1.msra.mxu0 0.0
    %2367 = vmatprep.subr.mxu0 0.0
    %2368 = vmatpush1.msra.mxu0 0.0
    %2369 = vmatprep.subr.mxu0 0.0
    %2370 = vmatpush1.msra.mxu0 0.0
    %2371 = vmatprep.subr.mxu0 0.0
    %2372 = vmatpush1.msra.mxu0 0.0
    %2373 = vmatprep.subr.mxu0 0.0
    %2374 = vmatpush1.msra.mxu0 0.0
    %2375 = vmatprep.subr.mxu0 0.0
    %2376 = vmatpush1.msra.mxu0 0.0
    %2377 = vmatprep.subr.mxu0 0.0
    %2378 = vmatpush1.msra.mxu0 0.0
    %2379 = vmatprep.subr.mxu0 0.0
    %2380 = vmatpush1.msra.mxu0 0.0
    %2381 = vmatprep.subr.mxu0 0.0
    %2382 = vmatpush1.msra.mxu0 0.0
    %2383 = vmatprep.subr.mxu0 0.0
    %2384 = vmatpush1.msra.mxu0 0.0
    %2385 = vmatprep.subr.mxu0 0.0
    %2386 = vmatpush1.msra.mxu0 0.0
    %2387 = vmatprep.subr.mxu0 0.0
    %2388 = vmatpush1.msra.mxu0 0.0
    %2389 = vmatprep.subr.mxu0 0.0
    %2390 = vmatpush1.msra.mxu0 %v2352
    %2391 = vmatprep.subr.mxu0 0.0
    %2392 = vmatpush1.msra.mxu0 %v2350
    %2393 = vmatprep.subr.mxu0 0.0
    %2394 = vmatpush2.msra.mxu0 0.0
    %2395 = vmatprep.subr.mxu0 0.0
    %2396 = vmatpush2.msra.mxu0 0.0
    %2397 = vmatprep.subr.mxu0 0.0
    %2398 = vmatpush2.msra.mxu0 0.0
    %2399 = vmatprep.subr.mxu0 0.0
    %2400 = vmatpush2.msra.mxu0 0.0
    %2401 = vmatprep.subr.mxu0 0.0
    %2402 = vmatpush2.msra.mxu0 0.0
    %2403 = vmatprep.subr.mxu0 0.0
    %2404 = vmatpush2.msra.mxu0 0.0
    %2405 = vmatprep.subr.mxu0 0.0
    %2406 = vmatpush2.msra.mxu0 0.0
    %2407 = vmatprep.subr.mxu0 0.0
    %2408 = vmatpush2.msra.mxu0 0.0
    %2409 = vmatprep.subr.mxu0 0.0
    %2410 = vmatpush2.msra.mxu0 0.0
    %2411 = vmatprep.subr.mxu0 0.0
    %2412 = vmatpush2.msra.mxu0 0.0
    %2413 = vmatprep.subr.mxu0 0.0
    %2414 = vmatpush2.msra.mxu0 0.0
    %2415 = vmatprep.subr.mxu0 0.0
    %2416 = vmatpush2.msra.mxu0 0.0
    %2417 = vmatprep.subr.mxu0 0.0
    %2418 = vmatpush2.msra.mxu0 0.0
    %2419 = vmatprep.subr.mxu0 0.0
    %2420 = vmatpush2.msra.mxu0 0.0
    %2421 = vmatprep.subr.mxu0 0.0
    %2422 = vmatpush2.msra.mxu0 0.0
    %2423 = vmatprep.subr.mxu0 0.0
    %2424 = vmatpush2.msra.mxu0 0.0
    %2425 = vmatprep.mubr.f32.mxu0 0.0
    %2426 = vmatmul.mubr.f32.gmra.mxu0 %v2356
    %v2427 = vpop.f32.mrf.mxu0
    %v2428 = vadd.f32 0.0, %v2427
    %v2429 = vpop.f32.mrf.mxu0
    %2430 = vmatprep.mubr.f32.mxu0 0.0
    %2431 = vmatmul.mubr.f32.gmra.mxu0 %v2359
    %v2432 = vpop.f32.mrf.mxu0
    %v2433 = vadd.f32 0.0, %v2432
    %v2434 = vpop.f32.mrf.mxu0
    %2435 = vdwg.mxu0
    %2436 = vrot.lane.b32.xlu0 %v1886, 64
    %v2437 = vpop.permute.xlu0 %2436
    %2438 = vrot.lane.b32.xlu0 %v1888, 64
    %v2439 = vpop.permute.xlu0 %2438
    %v2443 = vsel %vm710, %v2343, 0
    %v2446 = vsel %vm710, %v2344, 0
    %2448 = vmatprep.subr.mxu0 0.0
    %2449 = vmatpush1.msra.mxu0 0.0
    %2450 = vmatprep.subr.mxu0 0.0
    %2451 = vmatpush1.msra.mxu0 0.0
    %2452 = vmatprep.subr.mxu0 0.0
    %2453 = vmatpush1.msra.mxu0 0.0
    %2454 = vmatprep.subr.mxu0 0.0
    %2455 = vmatpush1.msra.mxu0 0.0
    %2456 = vmatprep.subr.mxu0 0.0
    %2457 = vmatpush1.msra.mxu0 0.0
    %2458 = vmatprep.subr.mxu0 0.0
    %2459 = vmatpush1.msra.mxu0 0.0
    %2460 = vmatprep.subr.mxu0 0.0
    %2461 = vmatpush1.msra.mxu0 0.0
    %2462 = vmatprep.subr.mxu0 0.0
    %2463 = vmatpush1.msra.mxu0 0.0
    %2464 = vmatprep.subr.mxu0 0.0
    %2465 = vmatpush1.msra.mxu0 0.0
    %2466 = vmatprep.subr.mxu0 0.0
    %2467 = vmatpush1.msra.mxu0 0.0
    %2468 = vmatprep.subr.mxu0 0.0
    %2469 = vmatpush1.msra.mxu0 0.0
    %2470 = vmatprep.subr.mxu0 0.0
    %2471 = vmatpush1.msra.mxu0 0.0
    %2472 = vmatprep.subr.mxu0 0.0
    %2473 = vmatpush1.msra.mxu0 0.0
    %2474 = vmatprep.subr.mxu0 0.0
    %2475 = vmatpush1.msra.mxu0 0.0
    %2476 = vmatprep.subr.mxu0 0.0
    %2477 = vmatpush1.msra.mxu0 %v2439
    %2478 = vmatprep.subr.mxu0 0.0
    %2479 = vmatpush1.msra.mxu0 %v2437
    %2480 = vmatprep.subr.mxu0 0.0
    %2481 = vmatpush2.msra.mxu0 0.0
    %2482 = vmatprep.subr.mxu0 0.0
    %2483 = vmatpush2.msra.mxu0 0.0
    %2484 = vmatprep.subr.mxu0 0.0
    %2485 = vmatpush2.msra.mxu0 0.0
    %2486 = vmatprep.subr.mxu0 0.0
    %2487 = vmatpush2.msra.mxu0 0.0
    %2488 = vmatprep.subr.mxu0 0.0
    %2489 = vmatpush2.msra.mxu0 0.0
    %2490 = vmatprep.subr.mxu0 0.0
    %2491 = vmatpush2.msra.mxu0 0.0
    %2492 = vmatprep.subr.mxu0 0.0
    %2493 = vmatpush2.msra.mxu0 0.0
    %2494 = vmatprep.subr.mxu0 0.0
    %2495 = vmatpush2.msra.mxu0 0.0
    %2496 = vmatprep.subr.mxu0 0.0
    %2497 = vmatpush2.msra.mxu0 0.0
    %2498 = vmatprep.subr.mxu0 0.0
    %2499 = vmatpush2.msra.mxu0 0.0
    %2500 = vmatprep.subr.mxu0 0.0
    %2501 = vmatpush2.msra.mxu0 0.0
    %2502 = vmatprep.subr.mxu0 0.0
    %2503 = vmatpush2.msra.mxu0 0.0
    %2504 = vmatprep.subr.mxu0 0.0
    %2505 = vmatpush2.msra.mxu0 0.0
    %2506 = vmatprep.subr.mxu0 0.0
    %2507 = vmatpush2.msra.mxu0 0.0
    %2508 = vmatprep.subr.mxu0 0.0
    %2509 = vmatpush2.msra.mxu0 0.0
    %2510 = vmatprep.subr.mxu0 0.0
    %2511 = vmatpush2.msra.mxu0 0.0
    %2512 = vmatprep.mubr.f32.mxu0 0.0
    %2513 = vmatmul.mubr.f32.gmra.mxu0 %v2443
    %v2514 = vpop.f32.mrf.mxu0
    %v2515 = vadd.f32 0.0, %v2514
    %v2516 = vpop.f32.mrf.mxu0
    %2517 = vmatprep.mubr.f32.mxu0 0.0
    %2518 = vmatmul.mubr.f32.gmra.mxu0 %v2446
    %v2519 = vpop.f32.mrf.mxu0
    %v2520 = vadd.f32 0.0, %v2519
    %v2521 = vpop.f32.mrf.mxu0
    %2522 = vdwg.mxu0
    %2523 = vrot.lane.b32.xlu0 %v1890, 64
    %v2524 = vpop.permute.xlu0 %2523
    %2525 = vrot.lane.b32.xlu0 %v1892, 64
    %v2526 = vpop.permute.xlu0 %2525
    %v2530 = vsel %vm710, %v2345, 0
    %v2533 = vsel %vm710, %v2346, 0
    %2535 = vmatprep.subr.mxu0 0.0
    %2536 = vmatpush1.msra.mxu0 0.0
    %2537 = vmatprep.subr.mxu0 0.0
    %2538 = vmatpush1.msra.mxu0 0.0
    %2539 = vmatprep.subr.mxu0 0.0
    %2540 = vmatpush1.msra.mxu0 0.0
    %2541 = vmatprep.subr.mxu0 0.0
    %2542 = vmatpush1.msra.mxu0 0.0
    %2543 = vmatprep.subr.mxu0 0.0
    %2544 = vmatpush1.msra.mxu0 0.0
    %2545 = vmatprep.subr.mxu0 0.0
    %2546 = vmatpush1.msra.mxu0 0.0
    %2547 = vmatprep.subr.mxu0 0.0
    %2548 = vmatpush1.msra.mxu0 0.0
    %2549 = vmatprep.subr.mxu0 0.0
    %2550 = vmatpush1.msra.mxu0 0.0
    %2551 = vmatprep.subr.mxu0 0.0
    %2552 = vmatpush1.msra.mxu0 0.0
    %2553 = vmatprep.subr.mxu0 0.0
    %2554 = vmatpush1.msra.mxu0 0.0
    %2555 = vmatprep.subr.mxu0 0.0
    %2556 = vmatpush1.msra.mxu0 0.0
    %2557 = vmatprep.subr.mxu0 0.0
    %2558 = vmatpush1.msra.mxu0 0.0
    %2559 = vmatprep.subr.mxu0 0.0
    %2560 = vmatpush1.msra.mxu0 0.0
    %2561 = vmatprep.subr.mxu0 0.0
    %2562 = vmatpush1.msra.mxu0 0.0
    %2563 = vmatprep.subr.mxu0 0.0
    %2564 = vmatpush1.msra.mxu0 %v2526
    %2565 = vmatprep.subr.mxu0 0.0
    %2566 = vmatpush1.msra.mxu0 %v2524
    %2567 = vmatprep.subr.mxu0 0.0
    %2568 = vmatpush2.msra.mxu0 0.0
    %2569 = vmatprep.subr.mxu0 0.0
    %2570 = vmatpush2.msra.mxu0 0.0
    %2571 = vmatprep.subr.mxu0 0.0
    %2572 = vmatpush2.msra.mxu0 0.0
    %2573 = vmatprep.subr.mxu0 0.0
    %2574 = vmatpush2.msra.mxu0 0.0
    %2575 = vmatprep.subr.mxu0 0.0
    %2576 = vmatpush2.msra.mxu0 0.0
    %2577 = vmatprep.subr.mxu0 0.0
    %2578 = vmatpush2.msra.mxu0 0.0
    %2579 = vmatprep.subr.mxu0 0.0
    %2580 = vmatpush2.msra.mxu0 0.0
    %2581 = vmatprep.subr.mxu0 0.0
    %2582 = vmatpush2.msra.mxu0 0.0
    %2583 = vmatprep.subr.mxu0 0.0
    %2584 = vmatpush2.msra.mxu0 0.0
    %2585 = vmatprep.subr.mxu0 0.0
    %2586 = vmatpush2.msra.mxu0 0.0
    %2587 = vmatprep.subr.mxu0 0.0
    %2588 = vmatpush2.msra.mxu0 0.0
    %2589 = vmatprep.subr.mxu0 0.0
    %2590 = vmatpush2.msra.mxu0 0.0
    %2591 = vmatprep.subr.mxu0 0.0
    %2592 = vmatpush2.msra.mxu0 0.0
    %2593 = vmatprep.subr.mxu0 0.0
    %2594 = vmatpush2.msra.mxu0 0.0
    %2595 = vmatprep.subr.mxu0 0.0
    %2596 = vmatpush2.msra.mxu0 0.0
    %2597 = vmatprep.subr.mxu0 0.0
    %2598 = vmatpush2.msra.mxu0 0.0
    %2599 = vmatprep.mubr.f32.mxu0 0.0
    %2600 = vmatmul.mubr.f32.gmra.mxu0 %v2530
    %v2601 = vpop.f32.mrf.mxu0
    %v2602 = vadd.f32 0.0, %v2601
    %v2603 = vpop.f32.mrf.mxu0
    %2604 = vmatprep.mubr.f32.mxu0 0.0
    %2605 = vmatmul.mubr.f32.gmra.mxu0 %v2533
    %v2606 = vpop.f32.mrf.mxu0
    %v2607 = vadd.f32 0.0, %v2606
    %v2608 = vpop.f32.mrf.mxu0
    %2609 = vdwg.mxu0
    %2610 = vrot.lane.b32.xlu0 %v1894, 64
    %v2611 = vpop.permute.xlu0 %2610
    %2612 = vrot.lane.b32.xlu0 %v1896, 64
    %v2613 = vpop.permute.xlu0 %2612
    %v2617 = vsel %vm710, %v2347, 0
    %v2620 = vsel %vm710, %v2348, 0
    %2622 = vmatprep.subr.mxu0 0.0
    %2623 = vmatpush1.msra.mxu0 0.0
    %2624 = vmatprep.subr.mxu0 0.0
    %2625 = vmatpush1.msra.mxu0 0.0
    %2626 = vmatprep.subr.mxu0 0.0
    %2627 = vmatpush1.msra.mxu0 0.0
    %2628 = vmatprep.subr.mxu0 0.0
    %2629 = vmatpush1.msra.mxu0 0.0
    %2630 = vmatprep.subr.mxu0 0.0
    %2631 = vmatpush1.msra.mxu0 0.0
    %2632 = vmatprep.subr.mxu0 0.0
    %2633 = vmatpush1.msra.mxu0 0.0
    %2634 = vmatprep.subr.mxu0 0.0
    %2635 = vmatpush1.msra.mxu0 0.0
    %2636 = vmatprep.subr.mxu0 0.0
    %2637 = vmatpush1.msra.mxu0 0.0
    %2638 = vmatprep.subr.mxu0 0.0
    %2639 = vmatpush1.msra.mxu0 0.0
    %2640 = vmatprep.subr.mxu0 0.0
    %2641 = vmatpush1.msra.mxu0 0.0
    %2642 = vmatprep.subr.mxu0 0.0
    %2643 = vmatpush1.msra.mxu0 0.0
    %2644 = vmatprep.subr.mxu0 0.0
    %2645 = vmatpush1.msra.mxu0 0.0
    %2646 = vmatprep.subr.mxu0 0.0
    %2647 = vmatpush1.msra.mxu0 0.0
    %2648 = vmatprep.subr.mxu0 0.0
    %2649 = vmatpush1.msra.mxu0 0.0
    %2650 = vmatprep.subr.mxu0 0.0
    %2651 = vmatpush1.msra.mxu0 %v2613
    %2652 = vmatprep.subr.mxu0 0.0
    %2653 = vmatpush1.msra.mxu0 %v2611
    %2654 = vmatprep.subr.mxu0 0.0
    %2655 = vmatpush2.msra.mxu0 0.0
    %2656 = vmatprep.subr.mxu0 0.0
    %2657 = vmatpush2.msra.mxu0 0.0
    %2658 = vmatprep.subr.mxu0 0.0
    %2659 = vmatpush2.msra.mxu0 0.0
    %2660 = vmatprep.subr.mxu0 0.0
    %2661 = vmatpush2.msra.mxu0 0.0
    %2662 = vmatprep.subr.mxu0 0.0
    %2663 = vmatpush2.msra.mxu0 0.0
    %2664 = vmatprep.subr.mxu0 0.0
    %2665 = vmatpush2.msra.mxu0 0.0
    %2666 = vmatprep.subr.mxu0 0.0
    %2667 = vmatpush2.msra.mxu0 0.0
    %2668 = vmatprep.subr.mxu0 0.0
    %2669 = vmatpush2.msra.mxu0 0.0
    %2670 = vmatprep.subr.mxu0 0.0
    %2671 = vmatpush2.msra.mxu0 0.0
    %2672 = vmatprep.subr.mxu0 0.0
    %2673 = vmatpush2.msra.mxu0 0.0
    %2674 = vmatprep.subr.mxu0 0.0
    %2675 = vmatpush2.msra.mxu0 0.0
    %2676 = vmatprep.subr.mxu0 0.0
    %2677 = vmatpush2.msra.mxu0 0.0
    %2678 = vmatprep.subr.mxu0 0.0
    %2679 = vmatpush2.msra.mxu0 0.0
    %2680 = vmatprep.subr.mxu0 0.0
    %2681 = vmatpush2.msra.mxu0 0.0
    %2682 = vmatprep.subr.mxu0 0.0
    %2683 = vmatpush2.msra.mxu0 0.0
    %2684 = vmatprep.subr.mxu0 0.0
    %2685 = vmatpush2.msra.mxu0 0.0
    %2686 = vmatprep.mubr.f32.mxu0 0.0
    %2687 = vmatmul.mubr.f32.gmra.mxu0 %v2617
    %v2688 = vpop.f32.mrf.mxu0
    %v2689 = vadd.f32 0.0, %v2688
    %v2690 = vpop.f32.mrf.mxu0
    %2691 = vmatprep.mubr.f32.mxu0 0.0
    %2692 = vmatmul.mubr.f32.gmra.mxu0 %v2620
    %v2693 = vpop.f32.mrf.mxu0
    %v2694 = vadd.f32 0.0, %v2693
    %v2695 = vpop.f32.mrf.mxu0
    %2696 = vdwg.mxu0
    %s2697 = scalar_lea.vmem %s10, 32
    %v2698 = vld [vmem:[%s2697] sm:$0xff]
    %v2699 = vld [vmem:[%s2697 + $0x8] sm:$0xff]
    %v2700 = vld [vmem:[%s2697 + $0x10] sm:$0xff]
    %v2701 = vld [vmem:[%s2697 + $0x18] sm:$0xff]
    %v2703 = vsel %vm349, %v2428, 0
    %v2706 = vsel %vm349, %v2433, 0
    %2708 = vmatprep.subr.mxu0 0.0
    %2709 = vmatpush1.msra.mxu0 0.0
    %2710 = vmatprep.subr.mxu0 0.0
    %2711 = vmatpush1.msra.mxu0 0.0
    %2712 = vmatprep.subr.mxu0 0.0
    %2713 = vmatpush1.msra.mxu0 0.0
    %2714 = vmatprep.subr.mxu0 0.0
    %2715 = vmatpush1.msra.mxu0 0.0
    %2716 = vmatprep.subr.mxu0 0.0
    %2717 = vmatpush1.msra.mxu0 0.0
    %2718 = vmatprep.subr.mxu0 0.0
    %2719 = vmatpush1.msra.mxu0 0.0
    %2720 = vmatprep.subr.mxu0 0.0
    %2721 = vmatpush1.msra.mxu0 0.0
    %2722 = vmatprep.subr.mxu0 0.0
    %2723 = vmatpush1.msra.mxu0 0.0
    %2724 = vmatprep.subr.mxu0 0.0
    %2725 = vmatpush1.msra.mxu0 0.0
    %2726 = vmatprep.subr.mxu0 0.0
    %2727 = vmatpush1.msra.mxu0 0.0
    %2728 = vmatprep.subr.mxu0 0.0
    %2729 = vmatpush1.msra.mxu0 0.0
    %2730 = vmatprep.subr.mxu0 0.0
    %2731 = vmatpush1.msra.mxu0 0.0
    %2732 = vmatprep.subr.mxu0 0.0
    %2733 = vmatpush1.msra.mxu0 0.0
    %2734 = vmatprep.subr.mxu0 0.0
    %2735 = vmatpush1.msra.mxu0 0.0
    %2736 = vmatprep.subr.mxu0 0.0
    %2737 = vmatpush1.msra.mxu0 0.0
    %2738 = vmatprep.subr.mxu0 0.0
    %2739 = vmatpush1.msra.mxu0 %v2698
    %2740 = vmatprep.subr.mxu0 0.0
    %2741 = vmatpush2.msra.mxu0 0.0
    %2742 = vmatprep.subr.mxu0 0.0
    %2743 = vmatpush2.msra.mxu0 0.0
    %2744 = vmatprep.subr.mxu0 0.0
    %2745 = vmatpush2.msra.mxu0 0.0
    %2746 = vmatprep.subr.mxu0 0.0
    %2747 = vmatpush2.msra.mxu0 0.0
    %2748 = vmatprep.subr.mxu0 0.0
    %2749 = vmatpush2.msra.mxu0 0.0
    %2750 = vmatprep.subr.mxu0 0.0
    %2751 = vmatpush2.msra.mxu0 0.0
    %2752 = vmatprep.subr.mxu0 0.0
    %2753 = vmatpush2.msra.mxu0 0.0
    %2754 = vmatprep.subr.mxu0 0.0
    %2755 = vmatpush2.msra.mxu0 0.0
    %2756 = vmatprep.subr.mxu0 0.0
    %2757 = vmatpush2.msra.mxu0 0.0
    %2758 = vmatprep.subr.mxu0 0.0
    %2759 = vmatpush2.msra.mxu0 0.0
    %2760 = vmatprep.subr.mxu0 0.0
    %2761 = vmatpush2.msra.mxu0 0.0
    %2762 = vmatprep.subr.mxu0 0.0
    %2763 = vmatpush2.msra.mxu0 0.0
    %2764 = vmatprep.subr.mxu0 0.0
    %2765 = vmatpush2.msra.mxu0 0.0
    %2766 = vmatprep.subr.mxu0 0.0
    %2767 = vmatpush2.msra.mxu0 0.0
    %2768 = vmatprep.subr.mxu0 0.0
    %2769 = vmatpush2.msra.mxu0 0.0
    %2770 = vmatprep.subr.mxu0 0.0
    %2771 = vmatpush2.msra.mxu0 0.0
    %2772 = vmatprep.mubr.f32.mxu0 0.0
    %2773 = vmatmul.mubr.f32.gmra.mxu0 %v2703
    %v2774 = vpop.f32.mrf.mxu0
    %v2775 = vadd.f32 0.0, %v2774
    %v2776 = vpop.f32.mrf.mxu0
    %2777 = vmatprep.mubr.f32.mxu0 0.0
    %2778 = vmatmul.mubr.f32.gmra.mxu0 %v2706
    %v2779 = vpop.f32.mrf.mxu0
    %v2780 = vadd.f32 0.0, %v2779
    %v2781 = vpop.f32.mrf.mxu0
    %2782 = vdwg.mxu0
    %v2784 = vsel %vm349, %v2515, 0
    %v2787 = vsel %vm349, %v2520, 0
    %2789 = vmatprep.subr.mxu0 0.0
    %2790 = vmatpush1.msra.mxu0 0.0
    %2791 = vmatprep.subr.mxu0 0.0
    %2792 = vmatpush1.msra.mxu0 0.0
    %2793 = vmatprep.subr.mxu0 0.0
    %2794 = vmatpush1.msra.mxu0 0.0
    %2795 = vmatprep.subr.mxu0 0.0
    %2796 = vmatpush1.msra.mxu0 0.0
    %2797 = vmatprep.subr.mxu0 0.0
    %2798 = vmatpush1.msra.mxu0 0.0
    %2799 = vmatprep.subr.mxu0 0.0
    %2800 = vmatpush1.msra.mxu0 0.0
    %2801 = vmatprep.subr.mxu0 0.0
    %2802 = vmatpush1.msra.mxu0 0.0
    %2803 = vmatprep.subr.mxu0 0.0
    %2804 = vmatpush1.msra.mxu0 0.0
    %2805 = vmatprep.subr.mxu0 0.0
    %2806 = vmatpush1.msra.mxu0 0.0
    %2807 = vmatprep.subr.mxu0 0.0
    %2808 = vmatpush1.msra.mxu0 0.0
    %2809 = vmatprep.subr.mxu0 0.0
    %2810 = vmatpush1.msra.mxu0 0.0
    %2811 = vmatprep.subr.mxu0 0.0
    %2812 = vmatpush1.msra.mxu0 0.0
    %2813 = vmatprep.subr.mxu0 0.0
    %2814 = vmatpush1.msra.mxu0 0.0
    %2815 = vmatprep.subr.mxu0 0.0
    %2816 = vmatpush1.msra.mxu0 0.0
    %2817 = vmatprep.subr.mxu0 0.0
    %2818 = vmatpush1.msra.mxu0 0.0
    %2819 = vmatprep.subr.mxu0 0.0
    %2820 = vmatpush1.msra.mxu0 %v2699
    %2821 = vmatprep.subr.mxu0 0.0
    %2822 = vmatpush2.msra.mxu0 0.0
    %2823 = vmatprep.subr.mxu0 0.0
    %2824 = vmatpush2.msra.mxu0 0.0
    %2825 = vmatprep.subr.mxu0 0.0
    %2826 = vmatpush2.msra.mxu0 0.0
    %2827 = vmatprep.subr.mxu0 0.0
    %2828 = vmatpush2.msra.mxu0 0.0
    %2829 = vmatprep.subr.mxu0 0.0
    %2830 = vmatpush2.msra.mxu0 0.0
    %2831 = vmatprep.subr.mxu0 0.0
    %2832 = vmatpush2.msra.mxu0 0.0
    %2833 = vmatprep.subr.mxu0 0.0
    %2834 = vmatpush2.msra.mxu0 0.0
    %2835 = vmatprep.subr.mxu0 0.0
    %2836 = vmatpush2.msra.mxu0 0.0
    %2837 = vmatprep.subr.mxu0 0.0
    %2838 = vmatpush2.msra.mxu0 0.0
    %2839 = vmatprep.subr.mxu0 0.0
    %2840 = vmatpush2.msra.mxu0 0.0
    %2841 = vmatprep.subr.mxu0 0.0
    %2842 = vmatpush2.msra.mxu0 0.0
    %2843 = vmatprep.subr.mxu0 0.0
    %2844 = vmatpush2.msra.mxu0 0.0
    %2845 = vmatprep.subr.mxu0 0.0
    %2846 = vmatpush2.msra.mxu0 0.0
    %2847 = vmatprep.subr.mxu0 0.0
    %2848 = vmatpush2.msra.mxu0 0.0
    %2849 = vmatprep.subr.mxu0 0.0
    %2850 = vmatpush2.msra.mxu0 0.0
    %2851 = vmatprep.subr.mxu0 0.0
    %2852 = vmatpush2.msra.mxu0 0.0
    %2853 = vmatprep.mubr.f32.mxu0 0.0
    %2854 = vmatmul.mubr.f32.gmra.mxu0 %v2784
    %v2855 = vpop.f32.mrf.mxu0
    %v2856 = vadd.f32 0.0, %v2855
    %v2857 = vpop.f32.mrf.mxu0
    %2858 = vmatprep.mubr.f32.mxu0 0.0
    %2859 = vmatmul.mubr.f32.gmra.mxu0 %v2787
    %v2860 = vpop.f32.mrf.mxu0
    %v2861 = vadd.f32 0.0, %v2860
    %v2862 = vpop.f32.mrf.mxu0
    %2863 = vdwg.mxu0
    %v2865 = vsel %vm349, %v2602, 0
    %v2868 = vsel %vm349, %v2607, 0
    %2870 = vmatprep.subr.mxu0 0.0
    %2871 = vmatpush1.msra.mxu0 0.0
    %2872 = vmatprep.subr.mxu0 0.0
    %2873 = vmatpush1.msra.mxu0 0.0
    %2874 = vmatprep.subr.mxu0 0.0
    %2875 = vmatpush1.msra.mxu0 0.0
    %2876 = vmatprep.subr.mxu0 0.0
    %2877 = vmatpush1.msra.mxu0 0.0
    %2878 = vmatprep.subr.mxu0 0.0
    %2879 = vmatpush1.msra.mxu0 0.0
    %2880 = vmatprep.subr.mxu0 0.0
    %2881 = vmatpush1.msra.mxu0 0.0
    %2882 = vmatprep.subr.mxu0 0.0
    %2883 = vmatpush1.msra.mxu0 0.0
    %2884 = vmatprep.subr.mxu0 0.0
    %2885 = vmatpush1.msra.mxu0 0.0
    %2886 = vmatprep.subr.mxu0 0.0
    %2887 = vmatpush1.msra.mxu0 0.0
    %2888 = vmatprep.subr.mxu0 0.0
    %2889 = vmatpush1.msra.mxu0 0.0
    %2890 = vmatprep.subr.mxu0 0.0
    %2891 = vmatpush1.msra.mxu0 0.0
    %2892 = vmatprep.subr.mxu0 0.0
    %2893 = vmatpush1.msra.mxu0 0.0
    %2894 = vmatprep.subr.mxu0 0.0
    %2895 = vmatpush1.msra.mxu0 0.0
    %2896 = vmatprep.subr.mxu0 0.0
    %2897 = vmatpush1.msra.mxu0 0.0
    %2898 = vmatprep.subr.mxu0 0.0
    %2899 = vmatpush1.msra.mxu0 0.0
    %2900 = vmatprep.subr.mxu0 0.0
    %2901 = vmatpush1.msra.mxu0 %v2700
    %2902 = vmatprep.subr.mxu0 0.0
    %2903 = vmatpush2.msra.mxu0 0.0
    %2904 = vmatprep.subr.mxu0 0.0
    %2905 = vmatpush2.msra.mxu0 0.0
    %2906 = vmatprep.subr.mxu0 0.0
    %2907 = vmatpush2.msra.mxu0 0.0
    %2908 = vmatprep.subr.mxu0 0.0
    %2909 = vmatpush2.msra.mxu0 0.0
    %2910 = vmatprep.subr.mxu0 0.0
    %2911 = vmatpush2.msra.mxu0 0.0
    %2912 = vmatprep.subr.mxu0 0.0
    %2913 = vmatpush2.msra.mxu0 0.0
    %2914 = vmatprep.subr.mxu0 0.0
    %2915 = vmatpush2.msra.mxu0 0.0
    %2916 = vmatprep.subr.mxu0 0.0
    %2917 = vmatpush2.msra.mxu0 0.0
    %2918 = vmatprep.subr.mxu0 0.0
    %2919 = vmatpush2.msra.mxu0 0.0
    %2920 = vmatprep.subr.mxu0 0.0
    %2921 = vmatpush2.msra.mxu0 0.0
    %2922 = vmatprep.subr.mxu0 0.0
    %2923 = vmatpush2.msra.mxu0 0.0
    %2924 = vmatprep.subr.mxu0 0.0
    %2925 = vmatpush2.msra.mxu0 0.0
    %2926 = vmatprep.subr.mxu0 0.0
    %2927 = vmatpush2.msra.mxu0 0.0
    %2928 = vmatprep.subr.mxu0 0.0
    %2929 = vmatpush2.msra.mxu0 0.0
    %2930 = vmatprep.subr.mxu0 0.0
    %2931 = vmatpush2.msra.mxu0 0.0
    %2932 = vmatprep.subr.mxu0 0.0
    %2933 = vmatpush2.msra.mxu0 0.0
    %2934 = vmatprep.mubr.f32.mxu0 0.0
    %2935 = vmatmul.mubr.f32.gmra.mxu0 %v2865
    %v2936 = vpop.f32.mrf.mxu0
    %v2937 = vadd.f32 0.0, %v2936
    %v2938 = vpop.f32.mrf.mxu0
    %2939 = vmatprep.mubr.f32.mxu0 0.0
    %2940 = vmatmul.mubr.f32.gmra.mxu0 %v2868
    %v2941 = vpop.f32.mrf.mxu0
    %v2942 = vadd.f32 0.0, %v2941
    %v2943 = vpop.f32.mrf.mxu0
    %2944 = vdwg.mxu0
    %v2946 = vsel %vm349, %v2689, 0
    %v2949 = vsel %vm349, %v2694, 0
    %2951 = vmatprep.subr.mxu0 0.0
    %2952 = vmatpush1.msra.mxu0 0.0
    %2953 = vmatprep.subr.mxu0 0.0
    %2954 = vmatpush1.msra.mxu0 0.0
    %2955 = vmatprep.subr.mxu0 0.0
    %2956 = vmatpush1.msra.mxu0 0.0
    %2957 = vmatprep.subr.mxu0 0.0
    %2958 = vmatpush1.msra.mxu0 0.0
    %2959 = vmatprep.subr.mxu0 0.0
    %2960 = vmatpush1.msra.mxu0 0.0
    %2961 = vmatprep.subr.mxu0 0.0
    %2962 = vmatpush1.msra.mxu0 0.0
    %2963 = vmatprep.subr.mxu0 0.0
    %2964 = vmatpush1.msra.mxu0 0.0
    %2965 = vmatprep.subr.mxu0 0.0
    %2966 = vmatpush1.msra.mxu0 0.0
    %2967 = vmatprep.subr.mxu0 0.0
    %2968 = vmatpush1.msra.mxu0 0.0
    %2969 = vmatprep.subr.mxu0 0.0
    %2970 = vmatpush1.msra.mxu0 0.0
    %2971 = vmatprep.subr.mxu0 0.0
    %2972 = vmatpush1.msra.mxu0 0.0
    %2973 = vmatprep.subr.mxu0 0.0
    %2974 = vmatpush1.msra.mxu0 0.0
    %2975 = vmatprep.subr.mxu0 0.0
    %2976 = vmatpush1.msra.mxu0 0.0
    %2977 = vmatprep.subr.mxu0 0.0
    %2978 = vmatpush1.msra.mxu0 0.0
    %2979 = vmatprep.subr.mxu0 0.0
    %2980 = vmatpush1.msra.mxu0 0.0
    %2981 = vmatprep.subr.mxu0 0.0
    %2982 = vmatpush1.msra.mxu0 %v2701
    %2983 = vmatprep.subr.mxu0 0.0
    %2984 = vmatpush2.msra.mxu0 0.0
    %2985 = vmatprep.subr.mxu0 0.0
    %2986 = vmatpush2.msra.mxu0 0.0
    %2987 = vmatprep.subr.mxu0 0.0
    %2988 = vmatpush2.msra.mxu0 0.0
    %2989 = vmatprep.subr.mxu0 0.0
    %2990 = vmatpush2.msra.mxu0 0.0
    %2991 = vmatprep.subr.mxu0 0.0
    %2992 = vmatpush2.msra.mxu0 0.0
    %2993 = vmatprep.subr.mxu0 0.0
    %2994 = vmatpush2.msra.mxu0 0.0
    %2995 = vmatprep.subr.mxu0 0.0
    %2996 = vmatpush2.msra.mxu0 0.0
    %2997 = vmatprep.subr.mxu0 0.0
    %2998 = vmatpush2.msra.mxu0 0.0
    %2999 = vmatprep.subr.mxu0 0.0
    %3000 = vmatpush2.msra.mxu0 0.0
    %3001 = vmatprep.subr.mxu0 0.0
    %3002 = vmatpush2.msra.mxu0 0.0
    %3003 = vmatprep.subr.mxu0 0.0
    %3004 = vmatpush2.msra.mxu0 0.0
    %3005 = vmatprep.subr.mxu0 0.0
    %3006 = vmatpush2.msra.mxu0 0.0
    %3007 = vmatprep.subr.mxu0 0.0
    %3008 = vmatpush2.msra.mxu0 0.0
    %3009 = vmatprep.subr.mxu0 0.0
    %3010 = vmatpush2.msra.mxu0 0.0
    %3011 = vmatprep.subr.mxu0 0.0
    %3012 = vmatpush2.msra.mxu0 0.0
    %3013 = vmatprep.subr.mxu0 0.0
    %3014 = vmatpush2.msra.mxu0 0.0
    %3015 = vmatprep.mubr.f32.mxu0 0.0
    %3016 = vmatmul.mubr.f32.gmra.mxu0 %v2946
    %v3017 = vpop.f32.mrf.mxu0
    %v3018 = vadd.f32 0.0, %v3017
    %v3019 = vpop.f32.mrf.mxu0
    %3020 = vmatprep.mubr.f32.mxu0 0.0
    %3021 = vmatmul.mubr.f32.gmra.mxu0 %v2949
    %v3022 = vpop.f32.mrf.mxu0
    %v3023 = vadd.f32 0.0, %v3022
    %v3024 = vpop.f32.mrf.mxu0
    %3025 = vdwg.mxu0
    %v3026 = vadd.f32 %v2775, %v2856
    %v3027 = vadd.f32 %v2780, %v2861
    %v3028 = vadd.f32 %v3026, %v2937
    %v3029 = vadd.f32 %v3027, %v2942
    %v3030 = vadd.f32 %v3028, %v3018
    %v3031 = vadd.f32 %v3029, %v3023
    %s3032 = scalar_lea.vmem %s11, 1
    %v3033 = vld [vmem:[%s3032] sm:$0x1]
    %v3035 = vlaneseq
    %v3036 = vshrl.u32 %v3035, 7
    %v3037 = vsub.s32 0, %v3036
    %v3038 = vrot.slane %v3033, %v3037
    %v3040 = vadd.f32 %v3030, %v3038
    %v3041 = vadd.f32 %v3031, %v3038
    %v3042 = vadd.f32 %v1787, %v3040
    %v3043 = vadd.f32 %v1788, %v3041
    %s3044 = scalar_lea.vmem %s12, 1
    %v3045 = vld [vmem:[%s3044] sm:$0x1]
    %s3046 = scalar_lea.vmem %s13, 1
    %v3047 = vld [vmem:[%s3046] sm:$0x1]
    %v3048 = vsel %vm193, %v3042, 0.0
    %3049 = vadd.xlane.f32.xlu0 %v3048
    %v3050 = vpop.xlane.xlu0 %3049
    %v3051 = vsel %vm193, %v3043, 0.0
    %3052 = vadd.xlane.f32.xlu0 %v3051
    %v3053 = vpop.xlane.xlu0 %3052
    %v3054 = vmul.f32 %v3050, %v200
    %v3055 = vmul.f32 %v3053, %v200
    %v3056 = vsub.f32 %v3042, %v3054
    %v3057 = vsub.f32 %v3043, %v3055
    %v3058 = vmul.f32 %v3056, %v3056
    %v3059 = vmul.f32 %v3057, %v3057
    %v3060 = vsel %vm193, %v3058, 0.0
    %3061 = vadd.xlane.f32.xlu0 %v3060
    %v3062 = vpop.xlane.xlu0 %3061
    %v3063 = vsel %vm193, %v3059, 0.0
    %3064 = vadd.xlane.f32.xlu0 %v3063
    %v3065 = vpop.xlane.xlu0 %3064
    %v3066 = vmul.f32 %v3062, %v200
    %v3067 = vmul.f32 %v3065, %v200
    %v3068 = vadd.f32 %v3066, 1e-12
    %v3069 = vadd.f32 %v3067, 1e-12
    %v3070 = vrsqrt.pop %v3068
    %v3071 = vrsqrt.pop %v3069
    %v3072 = vmul.f32 %v3056, %v3070
    %v3073 = vmul.f32 %v3057, %v3071
    %v3075 = vlaneseq
    %v3076 = vshrl.u32 %v3075, 7
    %v3077 = vsub.s32 0, %v3076
    %v3078 = vrot.slane %v3045, %v3077
    %v3080 = vmul.f32 %v3072, %v3078
    %v3081 = vmul.f32 %v3073, %v3078
    %v3083 = vlaneseq
    %v3084 = vshrl.u32 %v3083, 7
    %v3085 = vsub.s32 0, %v3084
    %v3086 = vrot.slane %v3047, %v3085
    %v3088 = vadd.f32 %v3080, %v3086
    %v3089 = vadd.f32 %v3081, %v3086
    %s3090 = scalar_lea.vmem %s14, 32
    %v3091 = vld [vmem:[%s3090] sm:$0xff]
    %v3092 = vld [vmem:[%s3090 + $0x8] sm:$0xff]
    %v3093 = vld [vmem:[%s3090 + $0x10] sm:$0xff]
    %v3094 = vld [vmem:[%s3090 + $0x18] sm:$0xff]
    %s3095 = scalar_lea.vmem %s15, 1
    %v3096 = vld [vmem:[%s3095] sm:$0x1]
    %v3098 = vlaneseq
    %v3099 = vshrl.u32 %v3098, 7
    %v3100 = vsub.s32 0, %v3099
    %v3101 = vrot.slane %v3096, %v3100
    %v3104 = vsel %vm193, %v3088, 0
    %v3107 = vsel %vm193, %v3089, 0
    %3109 = vmatprep.subr.mxu0 0.0
    %3110 = vmatpush1.msra.mxu0 0.0
    %3111 = vmatprep.subr.mxu0 0.0
    %3112 = vmatpush1.msra.mxu0 0.0
    %3113 = vmatprep.subr.mxu0 0.0
    %3114 = vmatpush1.msra.mxu0 0.0
    %3115 = vmatprep.subr.mxu0 0.0
    %3116 = vmatpush1.msra.mxu0 0.0
    %3117 = vmatprep.subr.mxu0 0.0
    %3118 = vmatpush1.msra.mxu0 0.0
    %3119 = vmatprep.subr.mxu0 0.0
    %3120 = vmatpush1.msra.mxu0 0.0
    %3121 = vmatprep.subr.mxu0 0.0
    %3122 = vmatpush1.msra.mxu0 0.0
    %3123 = vmatprep.subr.mxu0 0.0
    %3124 = vmatpush1.msra.mxu0 0.0
    %3125 = vmatprep.subr.mxu0 0.0
    %3126 = vmatpush1.msra.mxu0 0.0
    %3127 = vmatprep.subr.mxu0 0.0
    %3128 = vmatpush1.msra.mxu0 0.0
    %3129 = vmatprep.subr.mxu0 0.0
    %3130 = vmatpush1.msra.mxu0 0.0
    %3131 = vmatprep.subr.mxu0 0.0
    %3132 = vmatpush1.msra.mxu0 0.0
    %3133 = vmatprep.subr.mxu0 0.0
    %3134 = vmatpush1.msra.mxu0 %v3094
    %3135 = vmatprep.subr.mxu0 0.0
    %3136 = vmatpush1.msra.mxu0 %v3093
    %3137 = vmatprep.subr.mxu0 0.0
    %3138 = vmatpush1.msra.mxu0 %v3092
    %3139 = vmatprep.subr.mxu0 0.0
    %3140 = vmatpush1.msra.mxu0 %v3091
    %3141 = vmatprep.subr.mxu0 0.0
    %3142 = vmatpush2.msra.mxu0 0.0
    %3143 = vmatprep.subr.mxu0 0.0
    %3144 = vmatpush2.msra.mxu0 0.0
    %3145 = vmatprep.subr.mxu0 0.0
    %3146 = vmatpush2.msra.mxu0 0.0
    %3147 = vmatprep.subr.mxu0 0.0
    %3148 = vmatpush2.msra.mxu0 0.0
    %3149 = vmatprep.subr.mxu0 0.0
    %3150 = vmatpush2.msra.mxu0 0.0
    %3151 = vmatprep.subr.mxu0 0.0
    %3152 = vmatpush2.msra.mxu0 0.0
    %3153 = vmatprep.subr.mxu0 0.0
    %3154 = vmatpush2.msra.mxu0 0.0
    %3155 = vmatprep.subr.mxu0 0.0
    %3156 = vmatpush2.msra.mxu0 0.0
    %3157 = vmatprep.subr.mxu0 0.0
    %3158 = vmatpush2.msra.mxu0 0.0
    %3159 = vmatprep.subr.mxu0 0.0
    %3160 = vmatpush2.msra.mxu0 0.0
    %3161 = vmatprep.subr.mxu0 0.0
    %3162 = vmatpush2.msra.mxu0 0.0
    %3163 = vmatprep.subr.mxu0 0.0
    %3164 = vmatpush2.msra.mxu0 0.0
    %3165 = vmatprep.subr.mxu0 0.0
    %3166 = vmatpush2.msra.mxu0 0.0
    %3167 = vmatprep.subr.mxu0 0.0
    %3168 = vmatpush2.msra.mxu0 0.0
    %3169 = vmatprep.subr.mxu0 0.0
    %3170 = vmatpush2.msra.mxu0 0.0
    %3171 = vmatprep.subr.mxu0 0.0
    %3172 = vmatpush2.msra.mxu0 0.0
    %3173 = vmatprep.mubr.f32.mxu0 0.0
    %3174 = vmatmul.mubr.f32.gmra.mxu0 %v3104
    %v3175 = vpop.f32.mrf.mxu0
    %v3176 = vadd.f32 %v3101, %v3175
    %v3177 = vpop.f32.mrf.mxu0
    %3178 = vmatprep.mubr.f32.mxu0 0.0
    %3179 = vmatmul.mubr.f32.gmra.mxu0 %v3107
    %v3180 = vpop.f32.mrf.mxu0
    %v3181 = vadd.f32 %v3101, %v3180
    %v3182 = vpop.f32.mrf.mxu0
    %3183 = vdwg.mxu0
    %v3184 = vmul.f32 %v3176, 0.5
    %v3185 = vmul.f32 %v3181, 0.5
    %v3186 = vmul.f32 %v3176, 0.044715
    %v3187 = vmul.f32 %v3181, 0.044715
    %v3188 = vmul.f32 %v3186, %v3176
    %v3189 = vmul.f32 %v3187, %v3181
    %v3190 = vmul.f32 %v3188, %v3176
    %v3191 = vmul.f32 %v3189, %v3181
    %v3192 = vadd.f32 %v3176, %v3190
    %v3193 = vadd.f32 %v3181, %v3191
    %v3194 = vmul.f32 %v3192, 0.7978846
    %v3195 = vmul.f32 %v3193, 0.7978846
    %v3196 = vtanh.pop %v3194
    %v3197 = vtanh.pop %v3195
    %v3198 = vadd.f32 %v3196, 1.0
    %v3199 = vadd.f32 %v3197, 1.0
    %v3200 = vmul.f32 %v3184, %v3198
    %v3201 = vmul.f32 %v3185, %v3199
    %s3202 = scalar_lea.vmem %s16, 64
    %v3203 = vld [vmem:[%s3202] sm:$0xff]
    %v3204 = vld [vmem:[%s3202 + $0x8] sm:$0xff]
    %v3205 = vld [vmem:[%s3202 + $0x10] sm:$0xff]
    %v3206 = vld [vmem:[%s3202 + $0x18] sm:$0xff]
    %v3207 = vld [vmem:[%s3202 + $0x20] sm:$0xff]
    %v3208 = vld [vmem:[%s3202 + $0x28] sm:$0xff]
    %v3209 = vld [vmem:[%s3202 + $0x30] sm:$0xff]
    %v3210 = vld [vmem:[%s3202 + $0x38] sm:$0xff]
    %s3211 = scalar_lea.vmem %s17, 1
    %v3212 = vld [vmem:[%s3211] sm:$0x1]
    %v3214 = vlaneseq
    %v3215 = vshrl.u32 %v3214, 7
    %v3216 = vsub.s32 0, %v3215
    %v3217 = vrot.slane %v3212, %v3216
    %v3220 = vsel %vm1661, %v3200, 0
    %v3223 = vsel %vm1661, %v3201, 0
    %3225 = vmatprep.subr.mxu0 0.0
    %3226 = vmatpush1.msra.mxu0 0.0
    %3227 = vmatprep.subr.mxu0 0.0
    %3228 = vmatpush1.msra.mxu0 0.0
    %3229 = vmatprep.subr.mxu0 0.0
    %3230 = vmatpush1.msra.mxu0 0.0
    %3231 = vmatprep.subr.mxu0 0.0
    %3232 = vmatpush1.msra.mxu0 0.0
    %3233 = vmatprep.subr.mxu0 0.0
    %3234 = vmatpush1.msra.mxu0 0.0
    %3235 = vmatprep.subr.mxu0 0.0
    %3236 = vmatpush1.msra.mxu0 0.0
    %3237 = vmatprep.subr.mxu0 0.0
    %3238 = vmatpush1.msra.mxu0 0.0
    %3239 = vmatprep.subr.mxu0 0.0
    %3240 = vmatpush1.msra.mxu0 0.0
    %3241 = vmatprep.subr.mxu0 0.0
    %3242 = vmatpush1.msra.mxu0 %v3210
    %3243 = vmatprep.subr.mxu0 0.0
    %3244 = vmatpush1.msra.mxu0 %v3209
    %3245 = vmatprep.subr.mxu0 0.0
    %3246 = vmatpush1.msra.mxu0 %v3208
    %3247 = vmatprep.subr.mxu0 0.0
    %3248 = vmatpush1.msra.mxu0 %v3207
    %3249 = vmatprep.subr.mxu0 0.0
    %3250 = vmatpush1.msra.mxu0 %v3206
    %3251 = vmatprep.subr.mxu0 0.0
    %3252 = vmatpush1.msra.mxu0 %v3205
    %3253 = vmatprep.subr.mxu0 0.0
    %3254 = vmatpush1.msra.mxu0 %v3204
    %3255 = vmatprep.subr.mxu0 0.0
    %3256 = vmatpush1.msra.mxu0 %v3203
    %3257 = vmatprep.subr.mxu0 0.0
    %3258 = vmatpush2.msra.mxu0 0.0
    %3259 = vmatprep.subr.mxu0 0.0
    %3260 = vmatpush2.msra.mxu0 0.0
    %3261 = vmatprep.subr.mxu0 0.0
    %3262 = vmatpush2.msra.mxu0 0.0
    %3263 = vmatprep.subr.mxu0 0.0
    %3264 = vmatpush2.msra.mxu0 0.0
    %3265 = vmatprep.subr.mxu0 0.0
    %3266 = vmatpush2.msra.mxu0 0.0
    %3267 = vmatprep.subr.mxu0 0.0
    %3268 = vmatpush2.msra.mxu0 0.0
    %3269 = vmatprep.subr.mxu0 0.0
    %3270 = vmatpush2.msra.mxu0 0.0
    %3271 = vmatprep.subr.mxu0 0.0
    %3272 = vmatpush2.msra.mxu0 0.0
    %3273 = vmatprep.subr.mxu0 0.0
    %3274 = vmatpush2.msra.mxu0 0.0
    %3275 = vmatprep.subr.mxu0 0.0
    %3276 = vmatpush2.msra.mxu0 0.0
    %3277 = vmatprep.subr.mxu0 0.0
    %3278 = vmatpush2.msra.mxu0 0.0
    %3279 = vmatprep.subr.mxu0 0.0
    %3280 = vmatpush2.msra.mxu0 0.0
    %3281 = vmatprep.subr.mxu0 0.0
    %3282 = vmatpush2.msra.mxu0 0.0
    %3283 = vmatprep.subr.mxu0 0.0
    %3284 = vmatpush2.msra.mxu0 0.0
    %3285 = vmatprep.subr.mxu0 0.0
    %3286 = vmatpush2.msra.mxu0 0.0
    %3287 = vmatprep.subr.mxu0 0.0
    %3288 = vmatpush2.msra.mxu0 0.0
    %3289 = vmatprep.mubr.f32.mxu0 0.0
    %3290 = vmatmul.mubr.f32.gmra.mxu0 %v3220
    %v3291 = vpop.f32.mrf.mxu0
    %v3292 = vadd.f32 %v3217, %v3291
    %v3293 = vpop.f32.mrf.mxu0
    %3294 = vmatprep.mubr.f32.mxu0 0.0
    %3295 = vmatmul.mubr.f32.gmra.mxu0 %v3223
    %v3296 = vpop.f32.mrf.mxu0
    %v3297 = vadd.f32 %v3217, %v3296
    %v3298 = vpop.f32.mrf.mxu0
    %3299 = vdwg.mxu0
    %v3300 = vadd.f32 %v3088, %v3292
    %v3301 = vadd.f32 %v3089, %v3297
    %s3302 = scalar_lea.vmem %s18, 1
    %v3303 = vld [vmem:[%s3302] sm:$0x1]
    %s3304 = scalar_lea.vmem %s19, 1
    %v3305 = vld [vmem:[%s3304] sm:$0x1]
    %v3306 = vsel %vm193, %v3300, 0.0
    %3307 = vadd.xlane.f32.xlu0 %v3306
    %v3308 = vpop.xlane.xlu0 %3307
    %v3309 = vsel %vm193, %v3301, 0.0
    %3310 = vadd.xlane.f32.xlu0 %v3309
    %v3311 = vpop.xlane.xlu0 %3310
    %v3312 = vmul.f32 %v3308, %v200
    %v3313 = vmul.f32 %v3311, %v200
    %v3314 = vsub.f32 %v3300, %v3312
    %v3315 = vsub.f32 %v3301, %v3313
    %v3316 = vmul.f32 %v3314, %v3314
    %v3317 = vmul.f32 %v3315, %v3315
    %v3318 = vsel %vm193, %v3316, 0.0
    %3319 = vadd.xlane.f32.xlu0 %v3318
    %v3320 = vpop.xlane.xlu0 %3319
    %v3321 = vsel %vm193, %v3317, 0.0
    %3322 = vadd.xlane.f32.xlu0 %v3321
    %v3323 = vpop.xlane.xlu0 %3322
    %v3324 = vmul.f32 %v3320, %v200
    %v3325 = vmul.f32 %v3323, %v200
    %v3326 = vadd.f32 %v3324, 1e-12
    %v3327 = vadd.f32 %v3325, 1e-12
    %v3328 = vrsqrt.pop %v3326
    %v3329 = vrsqrt.pop %v3327
    %v3330 = vmul.f32 %v3314, %v3328
    %v3331 = vmul.f32 %v3315, %v3329
    %v3333 = vlaneseq
    %v3334 = vshrl.u32 %v3333, 7
    %v3335 = vsub.s32 0, %v3334
    %v3336 = vrot.slane %v3303, %v3335
    %v3338 = vmul.f32 %v3330, %v3336
    %v3339 = vmul.f32 %v3331, %v3336
    %v3341 = vlaneseq
    %v3342 = vshrl.u32 %v3341, 7
    %v3343 = vsub.s32 0, %v3342
    %v3344 = vrot.slane %v3305, %v3343
    %v3346 = vadd.f32 %v3338, %v3344
    %v3347 = vadd.f32 %v3339, %v3344
    %v3348 = vld [vmem:[%s20] sm:$0xff]
    %v3349 = vld [vmem:[%s20 + $0x8] sm:$0xff]
    %v3350 = vld [vmem:[%s20 + $0x10] sm:$0xff]
    %v3351 = vld [vmem:[%s20 + $0x18] sm:$0xff]
    %v3352 = vld [vmem:[%s21] sm:$0x1]
    %v3354 = vlaneseq
    %v3355 = vshrl.u32 %v3354, 7
    %v3356 = vsub.s32 0, %v3355
    %v3357 = vrot.slane %v3352, %v3356
    %v3360 = vsel %vm193, %v3346, 0
    %v3363 = vsel %vm193, %v3347, 0
    %3365 = vmatprep.subr.mxu0 0.0
    %3366 = vmatpush1.msra.mxu0 0.0
    %3367 = vmatprep.subr.mxu0 0.0
    %3368 = vmatpush1.msra.mxu0 0.0
    %3369 = vmatprep.subr.mxu0 0.0
    %3370 = vmatpush1.msra.mxu0 0.0
    %3371 = vmatprep.subr.mxu0 0.0
    %3372 = vmatpush1.msra.mxu0 0.0
    %3373 = vmatprep.subr.mxu0 0.0
    %3374 = vmatpush1.msra.mxu0 0.0
    %3375 = vmatprep.subr.mxu0 0.0
    %3376 = vmatpush1.msra.mxu0 0.0
    %3377 = vmatprep.subr.mxu0 0.0
    %3378 = vmatpush1.msra.mxu0 0.0
    %3379 = vmatprep.subr.mxu0 0.0
    %3380 = vmatpush1.msra.mxu0 0.0
    %3381 = vmatprep.subr.mxu0 0.0
    %3382 = vmatpush1.msra.mxu0 0.0
    %3383 = vmatprep.subr.mxu0 0.0
    %3384 = vmatpush1.msra.mxu0 0.0
    %3385 = vmatprep.subr.mxu0 0.0
    %3386 = vmatpush1.msra.mxu0 0.0
    %3387 = vmatprep.subr.mxu0 0.0
    %3388 = vmatpush1.msra.mxu0 0.0
    %3389 = vmatprep.subr.mxu0 0.0
    %3390 = vmatpush1.msra.mxu0 %v3351
    %3391 = vmatprep.subr.mxu0 0.0
    %3392 = vmatpush1.msra.mxu0 %v3350
    %3393 = vmatprep.subr.mxu0 0.0
    %3394 = vmatpush1.msra.mxu0 %v3349
    %3395 = vmatprep.subr.mxu0 0.0
    %3396 = vmatpush1.msra.mxu0 %v3348
    %3397 = vmatprep.subr.mxu0 0.0
    %3398 = vmatpush2.msra.mxu0 0.0
    %3399 = vmatprep.subr.mxu0 0.0
    %3400 = vmatpush2.msra.mxu0 0.0
    %3401 = vmatprep.subr.mxu0 0.0
    %3402 = vmatpush2.msra.mxu0 0.0
    %3403 = vmatprep.subr.mxu0 0.0
    %3404 = vmatpush2.msra.mxu0 0.0
    %3405 = vmatprep.subr.mxu0 0.0
    %3406 = vmatpush2.msra.mxu0 0.0
    %3407 = vmatprep.subr.mxu0 0.0
    %3408 = vmatpush2.msra.mxu0 0.0
    %3409 = vmatprep.subr.mxu0 0.0
    %3410 = vmatpush2.msra.mxu0 0.0
    %3411 = vmatprep.subr.mxu0 0.0
    %3412 = vmatpush2.msra.mxu0 0.0
    %3413 = vmatprep.subr.mxu0 0.0
    %3414 = vmatpush2.msra.mxu0 0.0
    %3415 = vmatprep.subr.mxu0 0.0
    %3416 = vmatpush2.msra.mxu0 0.0
    %3417 = vmatprep.subr.mxu0 0.0
    %3418 = vmatpush2.msra.mxu0 0.0
    %3419 = vmatprep.subr.mxu0 0.0
    %3420 = vmatpush2.msra.mxu0 0.0
    %3421 = vmatprep.subr.mxu0 0.0
    %3422 = vmatpush2.msra.mxu0 0.0
    %3423 = vmatprep.subr.mxu0 0.0
    %3424 = vmatpush2.msra.mxu0 0.0
    %3425 = vmatprep.subr.mxu0 0.0
    %3426 = vmatpush2.msra.mxu0 0.0
    %3427 = vmatprep.subr.mxu0 0.0
    %3428 = vmatpush2.msra.mxu0 0.0
    %3429 = vmatprep.mubr.f32.mxu0 0.0
    %3430 = vmatmul.mubr.f32.gmra.mxu0 %v3360
    %v3431 = vpop.f32.mrf.mxu0
    %v3432 = vadd.f32 %v3357, %v3431
    %v3433 = vpop.f32.mrf.mxu0
    %3434 = vmatprep.mubr.f32.mxu0 0.0
    %3435 = vmatmul.mubr.f32.gmra.mxu0 %v3363
    %v3436 = vpop.f32.mrf.mxu0
    %v3437 = vadd.f32 %v3357, %v3436
    %v3438 = vpop.f32.mrf.mxu0
    %3439 = vdwg.mxu0
    %3440 = vst [vmem:[%s22] sm:$0xff] %v3432
    %3441 = vst [vmem:[%s22 + $0x8] sm:$0xff] %v3437
    %3442 = vmax.xlane.f32.xlu0 %v3432
    %v3443 = vpop.xlane.xlu0 %3442
    %3444 = vmax.xlane.f32.xlu0 %v3437
    %v3445 = vpop.xlane.xlu0 %3444
    %v3446 = vsub.f32 %v3432, %v3443
    %v3447 = vsub.f32 %v3437, %v3445
    %v3448 = vmul.f32 %v3446, 1.442695
    %v3449 = vpow.pop %v3448
    %v3450 = vmul.f32 %v3447, 1.442695
    %v3451 = vpow.pop %v3450
    %3452 = vadd.xlane.f32.xlu0 %v3449
    %v3453 = vpop.xlane.xlu0 %3452
    %3454 = vadd.xlane.f32.xlu0 %v3451
    %v3455 = vpop.xlane.xlu0 %3454
    %v3456 = vlog2.pop %v3453
    %v3457 = vmul.f32 %v3456, 0.6931472
    %v3458 = vlog2.pop %v3455
    %v3459 = vmul.f32 %v3458, 0.6931472
    %v3460 = vsub.f32 %v3446, %v3457
    %v3461 = vsub.f32 %v3447, %v3459
    %v3462 = vld [vmem:[%s3] sm:$0xff]
    %v3463 = vld [vmem:[%s3 + $0x8] sm:$0xff]
    %3464 = vset.pattern.permute.xlu0 0
    %3465 = vperm.xlu0 %3464, %v3462
    %v3466 = vpop.permute.xlu0 %3465
    %3467 = vset.pattern.permute.xlu0 0
    %3468 = vperm.xlu0 %3467, %v3463
    %v3469 = vpop.permute.xlu0 %3468
    %vm3470 = vcmp.eq.s32.totalorder %v77, %v3466
    %vm3471 = vcmp.eq.s32.totalorder %v77, %v3469
    %v3472 = vsel %vm3470, 1, 0
    %v3473 = vsel %vm3471, 1, 0
    %v3474 = vcvt.s32.f32 %v3472
    %v3475 = vcvt.s32.f32 %v3473
    %v3476 = vmul.f32 %v3460, %v3474
    %v3477 = vmul.f32 %v3461, %v3475
    %3478 = vadd.xlane.f32.xlu0 %v3476
    %v3479 = vpop.xlane.xlu0 %3478
    %3480 = vadd.xlane.f32.xlu0 %v3477
    %v3481 = vpop.xlane.xlu0 %3480
    %v3482 = vsub.f32 0.0, %v3479
    %v3483 = vsub.f32 0.0, %v3481
    %v3484 = vld [vmem:[%s4] sm:$0xff]
    %v3485 = vld [vmem:[%s4 + $0x8] sm:$0xff]
    %v3486 = vmul.f32 %v3482, %v3484
    %v3487 = vmul.f32 %v3483, %v3485
    %vm3488 = vcmask 7168
    %v3489 = vsel %vm3488, %v3486, 0.0
    %v3490 = vsel %vm3488, %v3487, 0.0
    %v3491 = vadd.f32 %v3489, %v3490
    %v3492 = vrot.slane %v3491, 4
    %v3493 = vadd.f32 %v3491, %v3492
    %v3494 = vrot.slane %v3493, 2
    %v3495 = vadd.f32 %v3493, %v3494
    %v3496 = vrot.slane %v3495, 1
    %v3497 = vadd.f32 %v3495, %v3496
    %v3498 = vsel %vm3488, %v3484, 0.0
    %v3499 = vsel %vm3488, %v3485, 0.0
    %v3500 = vadd.f32 %v3498, %v3499
    %v3501 = vrot.slane %v3500, 4
    %v3502 = vadd.f32 %v3500, %v3501
    %v3503 = vrot.slane %v3502, 2
    %v3504 = vadd.f32 %v3502, %v3503
    %v3505 = vrot.slane %v3504, 1
    %v3506 = vadd.f32 %v3504, %v3505
    %v3507 = vmax.f32 %v3506, 1.0
    %v3508 = vrcp.pop %v3507
    %v3509 = vmul.f32 %v3497, %v3508
    %vm3510 = vcmask 0
    %3511 = vst.msk [vmem:[#allocation2] sm:$0x1] %vm3510, %v3509
    // Predicated region
    $region90: #{ner_forward.1} parent=1 // pred_check
      _
    $region91: #{ner_forward.1} parent=1 // pred_check_branch
      %3513 = sbr.rel (0) target = $region93
    $region92: #{ner_forward.1} parent=1 // pred_region
      _
    $region93: #{ner_forward.1} parent=1 // pred_fallthru
      _
    // Predicated region
    $region94: #{ner_forward.1} parent=1 // pred_check
      _
    $region95: #{ner_forward.1} parent=1 // pred_check_branch
      %3515 = sbr.rel (0) target = $region97
    $region96: #{ner_forward.1} parent=1 // pred_region
      %s3517 = ssub.s32 16, 16
      %3518 = vsyncadd [#allocation3], %s3517
      %s3520 = sshll.u32 [#allocation2], 4
      %s3521 = int_to_ptr.vmem [resolvable:$true] %s3520
      %3523 = dma.vmem_to_hbm [thread:$0]  %s3521, 16, %s23, [#allocation3]
    $region97: #{ner_forward.1} parent=1 // pred_fallthru
      _
    // Predicated region
    $region98: #{ner_forward.1} parent=1 // pred_check
      _
    $region99: #{ner_forward.1} parent=1 // pred_check_branch
      %3525 = sbr.rel (0) target = $region101
    $region100: #{ner_forward.1} parent=1 // pred_region
      _
    $region101: #{ner_forward.1} parent=1 // pred_fallthru
      _
    // Predicated region
    $region102: #{ner_forward.1} parent=1 // pred_check
      _
    $region103: #{ner_forward.1} parent=1 // pred_check_branch
      %3527 = sbr.rel (0) target = $region105
    $region104: #{ner_forward.1} parent=1 // pred_region
      %3528 = dma.done [#allocation3], 16
    $region105: #{ner_forward.1} parent=1 // pred_fallthru
      _
    %3529 = vsyncpa [#allocation3], 1

</llo_original>
